<compile_context>
chip_gen: v7x
topology: tpu7x:2x2x1
jax: 0.10.0
libtpu: 0.0.40
codegen_flags: <defaults>
</compile_context>

<pallas_src>
import functools

import jax
import jax.numpy as jnp
from jax.experimental import pallas as pl
from jax.experimental.pallas import tpu as pltpu


# ----------------------------- Pallas kernel --------------------------------
def _convT_mm_kernel(w_ref, p_ref, b_ref, o_ref, *, negative_slope):
    """One M-tile of  out^T = LeakyReLU(W @ patches^T + b).

    w_ref: (Cout, K)  bf16  (stationary weight matrix)
    p_ref: (K, tm)    bf16  (im2col patches, M-tile)
    b_ref: (Cout, 1)  f32
    o_ref: (Cout, tm) f32   -- lane-dense along tm -> unmasked full-lane stores
    """
    acc = jnp.dot(w_ref[...], p_ref[...], preferred_element_type=jnp.float32)
    acc = acc + b_ref[...]                       # (Cout, tm) + (Cout, 1) broadcast
    o_ref[...] = jnp.where(acc > 0, acc, negative_slope * acc).astype(o_ref.dtype)


def _choose_tm(m, cap=4096):
    """Largest legal M-tile: whole M if small, else a multiple of 128 dividing M."""
    if m <= cap:
        return m                       # full-extent block is always legal
    tm = min((cap // 128) * 128, (m // 128) * 128)
    while tm >= 128:
        if m % tm == 0:
            return tm
        tm -= 128
    return m                           # fall back: single full-extent block


def _matmul_bias_lrelu_T(w_mat_bf16, patches_t_bf16, b_f32, *, negative_slope=0.2):
    """w: (Cout, K) bf16, patches^T: (K, M) bf16, b: (Cout,) f32 -> (Cout, M) f32."""
    cout, k = w_mat_bf16.shape
    m = patches_t_bf16.shape[1]
    tm = _choose_tm(m)
    assert tm == m or (m % tm == 0 and tm % 128 == 0), (m, tm)
    b2 = b_f32.reshape(cout, 1)

    kernel = functools.partial(_convT_mm_kernel, negative_slope=negative_slope)
    return pl.pallas_call(
        kernel,
        out_shape=jax.ShapeDtypeStruct((cout, m), jnp.float32),
        grid_spec=pltpu.PrefetchScalarGridSpec(
            num_scalar_prefetch=0,
            grid=(m // tm,),
            in_specs=[
                pl.BlockSpec((cout, k), lambda i: (0, 0)),   # weights (stationary)
                pl.BlockSpec((k, tm), lambda i: (0, i)),     # patches^T M-tile
                pl.BlockSpec((cout, 1), lambda i: (0, 0)),   # bias
            ],
            out_specs=pl.BlockSpec((cout, tm), lambda i: (0, i)),
        ),
        compiler_params=pltpu.CompilerParams(
            dimension_semantics=("parallel",)),   # independent M tiles
    )(w_mat_bf16, patches_t_bf16, b2)


# ----------------------------- Conv layer glue -------------------------------
def _im2col_T_cnhw(x_cnhw, kh, kw, stride, pad):
    """Zero-pad + extract patches from channel-major input (C, N, H, W).

    Returns patches^T of shape (KH*KW*C, N*OH*OW); K order = (kh, kw, cin).
    No large transpose is needed because the input is already channel-major.
    """
    c, n, h, w = x_cnhw.shape
    xp = jnp.pad(x_cnhw, ((0, 0), (0, 0), (pad, pad), (pad, pad)))
    oh = (h + 2 * pad - kh) // stride + 1
    ow = (w + 2 * pad - kw) // stride + 1
    cols = []
    for i in range(kh):
        for j in range(kw):
            sl = xp[:, :, i: i + (oh - 1) * stride + 1: stride,
                    j: j + (ow - 1) * stride + 1: stride]     # (C, N, OH, OW)
            cols.append(sl)
    pat = jnp.stack(cols, axis=0)                 # (KH*KW, C, N, OH, OW)
    pat_t = pat.reshape(kh * kw * c, n * oh * ow)
    return pat_t, (n, oh, ow)
    # TODO(synk): patch extraction could be moved fully inside the Pallas kernel
    # (manual DMA of shifted windows) to avoid the im2col HBM round trip.


def _spectral_normalize(w_oihw, n_iter=30):
    """Deterministic spectral norm: W / sigma_max(W.reshape(Cout, -1))."""
    cout = w_oihw.shape[0]
    wm = w_oihw.reshape(cout, -1)
    v = jnp.ones((wm.shape[1],), jnp.float32) / jnp.sqrt(wm.shape[1] * 1.0)
    for _ in range(n_iter):
        u = wm @ v
        u = u / (jnp.linalg.norm(u) + 1e-12)
        v = wm.T @ u
        v = v / (jnp.linalg.norm(v) + 1e-12)
    sigma = u @ (wm @ v)
    return w_oihw / sigma
    # TODO(synk): PyTorch's spectral_norm does ONE power iteration per forward with
    # a persistent u vector; here sigma is converged once at parameter-setup time.


def conv2d_lrelu_cnhw(x_cnhw, w_oihw, b, *, stride, pad):
    """Conv2d (zero pad, spectral-normed weights) + LeakyReLU(0.2), channel-major."""
    cout, cin, kh, kw = w_oihw.shape
    # (Cout,Cin,KH,KW) -> (Cout,KH,KW,Cin) -> (Cout, KH*KW*Cin): matches im2col K order.
    w_mat = jnp.transpose(w_oihw, (0, 2, 3, 1)).reshape(cout, kh * kw * cin)
    patches_t, (n, oh, ow) = _im2col_T_cnhw(
        x_cnhw.astype(jnp.bfloat16), kh, kw, stride, pad)
    out_t = _matmul_bias_lrelu_T(
        w_mat.astype(jnp.bfloat16), patches_t, b.astype(jnp.float32))
    return out_t.reshape(cout, n, oh, ow)         # stay channel-major (no transpose)


# ----------------------------- Full model ------------------------------------
LATENT = 4  # opt.latent_channels

LAYER_CFG = [
    # (cin, cout, k, stride, pad)
    (3, LATENT, 7, 1, 3),
    (LATENT, LATENT * 2, 4, 2, 1),
    (LATENT * 2, LATENT * 4, 4, 2, 1),
    (LATENT * 4, LATENT * 4, 4, 2, 1),
    (LATENT * 4, LATENT * 4, 4, 2, 1),
    (LATENT * 4, 1, 4, 2, 1),
]


def init_params(key):
    """Init like nn.Conv2d and apply spectral norm ONCE here (hoisted out of forward)."""
    params = []
    for (cin, cout, k, _, _) in LAYER_CFG:
        key, kw_, kb_ = jax.random.split(key, 3)
        fan_in = cin * k * k
        bound = 1.0 / (fan_in ** 0.5)
        w = jax.random.uniform(kw_, (cout, cin, k, k), jnp.float32, -bound, bound)
        b = jax.random.uniform(kb_, (cout,), jnp.float32, -bound, bound)
        params.append((_spectral_normalize(w), b))
    return params


def patch_discriminate_2(img_nchw, params):
    """Forward pass. Input NCHW (PyTorch convention), output NCHW."""
    x = jnp.transpose(img_nchw, (1, 0, 2, 3))      # NCHW -> CNHW (tiny, once)
    for (w, b), (_, _, _, stride, pad) in zip(params, LAYER_CFG):
        x = conv2d_lrelu_cnhw(x, w, b, stride=stride, pad=pad)
    return jnp.transpose(x, (1, 0, 2, 3))          # CNHW -> NCHW (tiny, once)


# ----------------------------- Reference (for self-check) --------------------
def _ref_forward(img_nchw, params):
    x = img_nchw
    for (w, b), (_, _, _, s, p) in zip(params, LAYER_CFG):
        y = jax.lax.conv_general_dilated(
            x.astype(jnp.bfloat16), w.astype(jnp.bfloat16),
            window_strides=(s, s), padding=[(p, p), (p, p)],
            dimension_numbers=("NCHW", "OIHW", "NCHW"),
            preferred_element_type=jnp.float32)
        y = y + b.reshape(1, -1, 1, 1)
        x = jnp.where(y > 0, y, 0.2 * y)
    return x


if __name__ == "__main__":
    key = jax.random.PRNGKey(0)
    k_img, k_par = jax.random.split(key)
    # 64x64 input -> 5 stride-2 layers -> 2x2 patch map.
    img = jax.random.normal(k_img, (2, 3, 64, 64), jnp.float32)
    params = init_params(k_par)

    forward = jax.jit(patch_discriminate_2)
    out = jax.block_until_ready(forward(img, params))
    assert out.shape == (2, 1, 2, 2), out.shape

    ref = _ref_forward(img, params)
    err = float(jnp.max(jnp.abs(out - ref)))
    scale = float(jnp.max(jnp.abs(ref))) + 1e-6
    assert err <= 1e-2 * scale + 1e-5, ("mismatch vs XLA conv reference", err, scale)
    print("KERNEL_OK")
</pallas_src>

<mosaic_0001>
module attributes {stable_mosaic.version = 11 : i64} {
  func.func @_convT_mm_kernel(%arg0: i32, %arg1: memref<4x147xbf16, #tpu.memory_space<vmem>>, %arg2: memref<147x4096xbf16, #tpu.memory_space<vmem>>, %arg3: memref<4x1xf32, #tpu.memory_space<vmem>>, %arg4: memref<4x4096xf32, #tpu.memory_space<vmem>>) attributes {dimension_semantics = [#tpu.dimension_semantics<parallel>], iteration_bounds = array<i64: 2>, scalar_prefetch = 0 : i64, scratch_operands = 0 : i64, tpu.core_type = #tpu.core_type<tc>, window_params = [{pipeline_mode = #tpu.pipeline_mode<synchronous>, transform_indices = @transform_0, window_bounds = array<i64: 4, 147>}, {transform_indices = @transform_1, window_bounds = array<i64: 147, 4096>}, {pipeline_mode = #tpu.pipeline_mode<synchronous>, transform_indices = @transform_2, window_bounds = array<i64: 4, 1>}, {transform_indices = @transform_3, window_bounds = array<i64: 4, 4096>}]} {
    %c0 = arith.constant 0 : index
    %c0_0 = arith.constant 0 : index
    %0 = vector.load %arg1[%c0, %c0_0] : memref<4x147xbf16, #tpu.memory_space<vmem>>, vector<4x147xbf16>
    %c0_1 = arith.constant 0 : index
    %c0_2 = arith.constant 0 : index
    %1 = vector.load %arg2[%c0_1, %c0_2] : memref<147x4096xbf16, #tpu.memory_space<vmem>>, vector<147x4096xbf16>
    %cst = arith.constant dense<0.000000e+00> : vector<4x4096xf32>
    %2 = tpu.matmul %0, %1, %cst {dimension_numbers = #tpu.dot_dimension_numbers<[1], [0], [0], [1], [0, 0, 1, 1], [], []>} : vector<4x147xbf16>, vector<147x4096xbf16>, vector<4x4096xf32> -> vector<4x4096xf32>
    %c0_3 = arith.constant 0 : index
    %c0_4 = arith.constant 0 : index
    %3 = vector.load %arg3[%c0_3, %c0_4] : memref<4x1xf32, #tpu.memory_space<vmem>>, vector<4x1xf32>
    %4 = vector.broadcast %3 : vector<4x1xf32> to vector<4x4096xf32>
    %5 = arith.addf %2, %4 : vector<4x4096xf32>
    %cst_5 = arith.constant 0.000000e+00 : f32
    %6 = vector.broadcast %cst_5 : f32 to vector<4x4096xf32>
    %7 = arith.cmpf ogt, %5, %6 : vector<4x4096xf32>
    %cst_6 = arith.constant 2.000000e-01 : f32
    %8 = vector.broadcast %cst_6 : f32 to vector<4x4096xf32>
    %9 = arith.mulf %8, %5 : vector<4x4096xf32>
    %10 = arith.select %7, %5, %9 : vector<4x4096xi1>, vector<4x4096xf32>
    %c0_7 = arith.constant 0 : index
    %c0_8 = arith.constant 0 : index
    %11 = vector.load %arg4[%c0_7, %c0_8] : memref<4x4096xf32, #tpu.memory_space<vmem>>, vector<4x4096xf32>
    tpu.vector_store %arg4[%c0_7, %c0_8], %10 {strides = array<i32>} : memref<4x4096xf32, #tpu.memory_space<vmem>>, vector<4x4096xf32>,
    return
  }
  func.func @transform_0(%arg0: i32) -> (i32, i32) {
    %c0_i32 = arith.constant 0 : i32
    %c0_i32_0 = arith.constant 0 : i32
    %c0_i32_1 = arith.constant 0 : i32
    return %c0_i32, %c0_i32_0 : i32, i32
  }
  func.func @transform_1(%arg0: i32) -> (i32, i32) {
    %c0_i32 = arith.constant 0 : i32
    %c0_i32_0 = arith.constant 0 : i32
    return %c0_i32, %arg0 : i32, i32
  }
  func.func @transform_2(%arg0: i32) -> (i32, i32) {
    %c0_i32 = arith.constant 0 : i32
    %c0_i32_0 = arith.constant 0 : i32
    %c0_i32_1 = arith.constant 0 : i32
    return %c0_i32, %c0_i32_0 : i32, i32
  }
  func.func @transform_3(%arg0: i32) -> (i32, i32) {
    %c0_i32 = arith.constant 0 : i32
    %c0_i32_0 = arith.constant 0 : i32
    return %c0_i32, %arg0 : i32, i32
  }
}

module attributes {stable_mosaic.version = 11 : i64} {
  func.func @_convT_mm_kernel(%arg0: i32, %arg1: memref<8x64xbf16, #tpu.memory_space<vmem>>, %arg2: memref<64x2048xbf16, #tpu.memory_space<vmem>>, %arg3: memref<8x1xf32, #tpu.memory_space<vmem>>, %arg4: memref<8x2048xf32, #tpu.memory_space<vmem>>) attributes {dimension_semantics = [#tpu.dimension_semantics<parallel>], iteration_bounds = array<i64: 1>, scalar_prefetch = 0 : i64, scratch_operands = 0 : i64, tpu.core_type = #tpu.core_type<tc>, window_params = [{pipeline_mode = #tpu.pipeline_mode<synchronous>, transform_indices = @transform_0, window_bounds = array<i64: 8, 64>}, {transform_indices = @transform_1, window_bounds = array<i64: 64, 2048>}, {pipeline_mode = #tpu.pipeline_mode<synchronous>, transform_indices = @transform_2, window_bounds = array<i64: 8, 1>}, {transform_indices = @transform_3, window_bounds = array<i64: 8, 2048>}]} {
    %c0 = arith.constant 0 : index
    %c0_0 = arith.constant 0 : index
    %0 = vector.load %arg1[%c0, %c0_0] : memref<8x64xbf16, #tpu.memory_space<vmem>>, vector<8x64xbf16>
    %c0_1 = arith.constant 0 : index
    %c0_2 = arith.constant 0 : index
    %1 = vector.load %arg2[%c0_1, %c0_2] : memref<64x2048xbf16, #tpu.memory_space<vmem>>, vector<64x2048xbf16>
    %cst = arith.constant dense<0.000000e+00> : vector<8x2048xf32>
    %2 = tpu.matmul %0, %1, %cst {dimension_numbers = #tpu.dot_dimension_numbers<[1], [0], [0], [1], [0, 0, 1, 1], [], []>} : vector<8x64xbf16>, vector<64x2048xbf16>, vector<8x2048xf32> -> vector<8x2048xf32>
    %c0_3 = arith.constant 0 : index
    %c0_4 = arith.constant 0 : index
    %3 = vector.load %arg3[%c0_3, %c0_4] : memref<8x1xf32, #tpu.memory_space<vmem>>, vector<8x1xf32>
    %4 = vector.broadcast %3 : vector<8x1xf32> to vector<8x2048xf32>
    %5 = arith.addf %2, %4 : vector<8x2048xf32>
    %cst_5 = arith.constant 0.000000e+00 : f32
    %6 = vector.broadcast %cst_5 : f32 to vector<8x2048xf32>
    %7 = arith.cmpf ogt, %5, %6 : vector<8x2048xf32>
    %cst_6 = arith.constant 2.000000e-01 : f32
    %8 = vector.broadcast %cst_6 : f32 to vector<8x2048xf32>
    %9 = arith.mulf %8, %5 : vector<8x2048xf32>
    %10 = arith.select %7, %5, %9 : vector<8x2048xi1>, vector<8x2048xf32>
    %c0_7 = arith.constant 0 : index
    %c0_8 = arith.constant 0 : index
    %11 = vector.load %arg4[%c0_7, %c0_8] : memref<8x2048xf32, #tpu.memory_space<vmem>>, vector<8x2048xf32>
    tpu.vector_store %arg4[%c0_7, %c0_8], %10 {strides = array<i32>} : memref<8x2048xf32, #tpu.memory_space<vmem>>, vector<8x2048xf32>,
    return
  }
  func.func @transform_0(%arg0: i32) -> (i32, i32) {
    %c0_i32 = arith.constant 0 : i32
    %c0_i32_0 = arith.constant 0 : i32
    %c0_i32_1 = arith.constant 0 : i32
    return %c0_i32, %c0_i32_0 : i32, i32
  }
  func.func @transform_1(%arg0: i32) -> (i32, i32) {
    %c0_i32 = arith.constant 0 : i32
    %c0_i32_0 = arith.constant 0 : i32
    return %c0_i32, %arg0 : i32, i32
  }
  func.func @transform_2(%arg0: i32) -> (i32, i32) {
    %c0_i32 = arith.constant 0 : i32
    %c0_i32_0 = arith.constant 0 : i32
    %c0_i32_1 = arith.constant 0 : i32
    return %c0_i32, %c0_i32_0 : i32, i32
  }
  func.func @transform_3(%arg0: i32) -> (i32, i32) {
    %c0_i32 = arith.constant 0 : i32
    %c0_i32_0 = arith.constant 0 : i32
    return %c0_i32, %arg0 : i32, i32
  }
}

module attributes {stable_mosaic.version = 11 : i64} {
  func.func @_convT_mm_kernel(%arg0: i32, %arg1: memref<16x128xbf16, #tpu.memory_space<vmem>>, %arg2: memref<128x512xbf16, #tpu.memory_space<vmem>>, %arg3: memref<16x1xf32, #tpu.memory_space<vmem>>, %arg4: memref<16x512xf32, #tpu.memory_space<vmem>>) attributes {dimension_semantics = [#tpu.dimension_semantics<parallel>], iteration_bounds = array<i64: 1>, scalar_prefetch = 0 : i64, scratch_operands = 0 : i64, tpu.core_type = #tpu.core_type<tc>, window_params = [{pipeline_mode = #tpu.pipeline_mode<synchronous>, transform_indices = @transform_0, window_bounds = array<i64: 16, 128>}, {transform_indices = @transform_1, window_bounds = array<i64: 128, 512>}, {pipeline_mode = #tpu.pipeline_mode<synchronous>, transform_indices = @transform_2, window_bounds = array<i64: 16, 1>}, {transform_indices = @transform_3, window_bounds = array<i64: 16, 512>}]} {
    %c0 = arith.constant 0 : index
    %c0_0 = arith.constant 0 : index
    %0 = vector.load %arg1[%c0, %c0_0] : memref<16x128xbf16, #tpu.memory_space<vmem>>, vector<16x128xbf16>
    %c0_1 = arith.constant 0 : index
    %c0_2 = arith.constant 0 : index
    %1 = vector.load %arg2[%c0_1, %c0_2] : memref<128x512xbf16, #tpu.memory_space<vmem>>, vector<128x512xbf16>
    %cst = arith.constant dense<0.000000e+00> : vector<16x512xf32>
    %2 = tpu.matmul %0, %1, %cst {dimension_numbers = #tpu.dot_dimension_numbers<[1], [0], [0], [1], [0, 0, 1, 1], [], []>} : vector<16x128xbf16>, vector<128x512xbf16>, vector<16x512xf32> -> vector<16x512xf32>
    %c0_3 = arith.constant 0 : index
    %c0_4 = arith.constant 0 : index
    %3 = vector.load %arg3[%c0_3, %c0_4] : memref<16x1xf32, #tpu.memory_space<vmem>>, vector<16x1xf32>
    %4 = vector.broadcast %3 : vector<16x1xf32> to vector<16x512xf32>
    %5 = arith.addf %2, %4 : vector<16x512xf32>
    %cst_5 = arith.constant 0.000000e+00 : f32
    %6 = vector.broadcast %cst_5 : f32 to vector<16x512xf32>
    %7 = arith.cmpf ogt, %5, %6 : vector<16x512xf32>
    %cst_6 = arith.constant 2.000000e-01 : f32
    %8 = vector.broadcast %cst_6 : f32 to vector<16x512xf32>
    %9 = arith.mulf %8, %5 : vector<16x512xf32>
    %10 = arith.select %7, %5, %9 : vector<16x512xi1>, vector<16x512xf32>
    %c0_7 = arith.constant 0 : index
    %c0_8 = arith.constant 0 : index
    %11 = vector.load %arg4[%c0_7, %c0_8] : memref<16x512xf32, #tpu.memory_space<vmem>>, vector<16x512xf32>
    tpu.vector_store %arg4[%c0_7, %c0_8], %10 {strides = array<i32>} : memref<16x512xf32, #tpu.memory_space<vmem>>, vector<16x512xf32>,
    return
  }
  func.func @transform_0(%arg0: i32) -> (i32, i32) {
    %c0_i32 = arith.constant 0 : i32
    %c0_i32_0 = arith.constant 0 : i32
    %c0_i32_1 = arith.constant 0 : i32
    return %c0_i32, %c0_i32_0 : i32, i32
  }
  func.func @transform_1(%arg0: i32) -> (i32, i32) {
    %c0_i32 = arith.constant 0 : i32
    %c0_i32_0 = arith.constant 0 : i32
    return %c0_i32, %arg0 : i32, i32
  }
  func.func @transform_2(%arg0: i32) -> (i32, i32) {
    %c0_i32 = arith.constant 0 : i32
    %c0_i32_0 = arith.constant 0 : i32
    %c0_i32_1 = arith.constant 0 : i32
    return %c0_i32, %c0_i32_0 : i32, i32
  }
  func.func @transform_3(%arg0: i32) -> (i32, i32) {
    %c0_i32 = arith.constant 0 : i32
    %c0_i32_0 = arith.constant 0 : i32
    return %c0_i32, %arg0 : i32, i32
  }
}

module attributes {stable_mosaic.version = 11 : i64} {
  func.func @_convT_mm_kernel(%arg0: i32, %arg1: memref<16x256xbf16, #tpu.memory_space<vmem>>, %arg2: memref<256x128xbf16, #tpu.memory_space<vmem>>, %arg3: memref<16x1xf32, #tpu.memory_space<vmem>>, %arg4: memref<16x128xf32, #tpu.memory_space<vmem>>) attributes {dimension_semantics = [#tpu.dimension_semantics<parallel>], iteration_bounds = array<i64: 1>, scalar_prefetch = 0 : i64, scratch_operands = 0 : i64, tpu.core_type = #tpu.core_type<tc>, window_params = [{pipeline_mode = #tpu.pipeline_mode<synchronous>, transform_indices = @transform_0, window_bounds = array<i64: 16, 256>}, {transform_indices = @transform_1, window_bounds = array<i64: 256, 128>}, {pipeline_mode = #tpu.pipeline_mode<synchronous>, transform_indices = @transform_2, window_bounds = array<i64: 16, 1>}, {transform_indices = @transform_3, window_bounds = array<i64: 16, 128>}]} {
    %c0 = arith.constant 0 : index
    %c0_0 = arith.constant 0 : index
    %0 = vector.load %arg1[%c0, %c0_0] : memref<16x256xbf16, #tpu.memory_space<vmem>>, vector<16x256xbf16>
    %c0_1 = arith.constant 0 : index
    %c0_2 = arith.constant 0 : index
    %1 = vector.load %arg2[%c0_1, %c0_2] : memref<256x128xbf16, #tpu.memory_space<vmem>>, vector<256x128xbf16>
    %cst = arith.constant dense<0.000000e+00> : vector<16x128xf32>
    %2 = tpu.matmul %0, %1, %cst {dimension_numbers = #tpu.dot_dimension_numbers<[1], [0], [0], [1], [0, 0, 1, 1], [], []>} : vector<16x256xbf16>, vector<256x128xbf16>, vector<16x128xf32> -> vector<16x128xf32>
    %c0_3 = arith.constant 0 : index
    %c0_4 = arith.constant 0 : index
    %3 = vector.load %arg3[%c0_3, %c0_4] : memref<16x1xf32, #tpu.memory_space<vmem>>, vector<16x1xf32>
    %4 = vector.broadcast %3 : vector<16x1xf32> to vector<16x128xf32>
    %5 = arith.addf %2, %4 : vector<16x128xf32>
    %cst_5 = arith.constant 0.000000e+00 : f32
    %6 = vector.broadcast %cst_5 : f32 to vector<16x128xf32>
    %7 = arith.cmpf ogt, %5, %6 : vector<16x128xf32>
    %cst_6 = arith.constant 2.000000e-01 : f32
    %8 = vector.broadcast %cst_6 : f32 to vector<16x128xf32>
    %9 = arith.mulf %8, %5 : vector<16x128xf32>
    %10 = arith.select %7, %5, %9 : vector<16x128xi1>, vector<16x128xf32>
    %c0_7 = arith.constant 0 : index
    %c0_8 = arith.constant 0 : index
    %11 = vector.load %arg4[%c0_7, %c0_8] : memref<16x128xf32, #tpu.memory_space<vmem>>, vector<16x128xf32>
    tpu.vector_store %arg4[%c0_7, %c0_8], %10 {strides = array<i32>} : memref<16x128xf32, #tpu.memory_space<vmem>>, vector<16x128xf32>,
    return
  }
  func.func @transform_0(%arg0: i32) -> (i32, i32) {
    %c0_i32 = arith.constant 0 : i32
    %c0_i32_0 = arith.constant 0 : i32
    %c0_i32_1 = arith.constant 0 : i32
    return %c0_i32, %c0_i32_0 : i32, i32
  }
  func.func @transform_1(%arg0: i32) -> (i32, i32) {
    %c0_i32 = arith.constant 0 : i32
    %c0_i32_0 = arith.constant 0 : i32
    return %c0_i32, %arg0 : i32, i32
  }
  func.func @transform_2(%arg0: i32) -> (i32, i32) {
    %c0_i32 = arith.constant 0 : i32
    %c0_i32_0 = arith.constant 0 : i32
    %c0_i32_1 = arith.constant 0 : i32
    return %c0_i32, %c0_i32_0 : i32, i32
  }
  func.func @transform_3(%arg0: i32) -> (i32, i32) {
    %c0_i32 = arith.constant 0 : i32
    %c0_i32_0 = arith.constant 0 : i32
    return %c0_i32, %arg0 : i32, i32
  }
}

module attributes {stable_mosaic.version = 11 : i64} {
  func.func @_convT_mm_kernel(%arg0: i32, %arg1: memref<16x256xbf16, #tpu.memory_space<vmem>>, %arg2: memref<256x32xbf16, #tpu.memory_space<vmem>>, %arg3: memref<16x1xf32, #tpu.memory_space<vmem>>, %arg4: memref<16x32xf32, #tpu.memory_space<vmem>>) attributes {dimension_semantics = [#tpu.dimension_semantics<parallel>], iteration_bounds = array<i64: 1>, scalar_prefetch = 0 : i64, scratch_operands = 0 : i64, tpu.core_type = #tpu.core_type<tc>, window_params = [{pipeline_mode = #tpu.pipeline_mode<synchronous>, transform_indices = @transform_0, window_bounds = array<i64: 16, 256>}, {transform_indices = @transform_1, window_bounds = array<i64: 256, 32>}, {pipeline_mode = #tpu.pipeline_mode<synchronous>, transform_indices = @transform_2, window_bounds = array<i64: 16, 1>}, {transform_indices = @transform_3, window_bounds = array<i64: 16, 32>}]} {
    %c0 = arith.constant 0 : index
    %c0_0 = arith.constant 0 : index
    %0 = vector.load %arg1[%c0, %c0_0] : memref<16x256xbf16, #tpu.memory_space<vmem>>, vector<16x256xbf16>
    %c0_1 = arith.constant 0 : index
    %c0_2 = arith.constant 0 : index
    %1 = vector.load %arg2[%c0_1, %c0_2] : memref<256x32xbf16, #tpu.memory_space<vmem>>, vector<256x32xbf16>
    %cst = arith.constant dense<0.000000e+00> : vector<16x32xf32>
    %2 = tpu.matmul %0, %1, %cst {dimension_numbers = #tpu.dot_dimension_numbers<[1], [0], [0], [1], [0, 0, 1, 1], [], []>} : vector<16x256xbf16>, vector<256x32xbf16>, vector<16x32xf32> -> vector<16x32xf32>
    %c0_3 = arith.constant 0 : index
    %c0_4 = arith.constant 0 : index
    %3 = vector.load %arg3[%c0_3, %c0_4] : memref<16x1xf32, #tpu.memory_space<vmem>>, vector<16x1xf32>
    %4 = vector.broadcast %3 : vector<16x1xf32> to vector<16x32xf32>
    %5 = arith.addf %2, %4 : vector<16x32xf32>
    %cst_5 = arith.constant 0.000000e+00 : f32
    %6 = vector.broadcast %cst_5 : f32 to vector<16x32xf32>
    %7 = arith.cmpf ogt, %5, %6 : vector<16x32xf32>
    %cst_6 = arith.constant 2.000000e-01 : f32
    %8 = vector.broadcast %cst_6 : f32 to vector<16x32xf32>
    %9 = arith.mulf %8, %5 : vector<16x32xf32>
    %10 = arith.select %7, %5, %9 : vector<16x32xi1>, vector<16x32xf32>
    %c0_7 = arith.constant 0 : index
    %c0_8 = arith.constant 0 : index
    %11 = vector.load %arg4[%c0_7, %c0_8] : memref<16x32xf32, #tpu.memory_space<vmem>>, vector<16x32xf32>
    tpu.vector_store %arg4[%c0_7, %c0_8], %10 {strides = array<i32>} : memref<16x32xf32, #tpu.memory_space<vmem>>, vector<16x32xf32>,
    return
  }
  func.func @transform_0(%arg0: i32) -> (i32, i32) {
    %c0_i32 = arith.constant 0 : i32
    %c0_i32_0 = arith.constant 0 : i32
    %c0_i32_1 = arith.constant 0 : i32
    return %c0_i32, %c0_i32_0 : i32, i32
  }
  func.func @transform_1(%arg0: i32) -> (i32, i32) {
    %c0_i32 = arith.constant 0 : i32
    %c0_i32_0 = arith.constant 0 : i32
    return %c0_i32, %arg0 : i32, i32
  }
  func.func @transform_2(%arg0: i32) -> (i32, i32) {
    %c0_i32 = arith.constant 0 : i32
    %c0_i32_0 = arith.constant 0 : i32
    %c0_i32_1 = arith.constant 0 : i32
    return %c0_i32, %c0_i32_0 : i32, i32
  }
  func.func @transform_3(%arg0: i32) -> (i32, i32) {
    %c0_i32 = arith.constant 0 : i32
    %c0_i32_0 = arith.constant 0 : i32
    return %c0_i32, %arg0 : i32, i32
  }
}

module attributes {stable_mosaic.version = 11 : i64} {
  func.func @_convT_mm_kernel(%arg0: i32, %arg1: memref<1x256xbf16, #tpu.memory_space<vmem>>, %arg2: memref<256x8xbf16, #tpu.memory_space<vmem>>, %arg3: memref<1x1xf32, #tpu.memory_space<vmem>>, %arg4: memref<1x8xf32, #tpu.memory_space<vmem>>) attributes {dimension_semantics = [#tpu.dimension_semantics<parallel>], iteration_bounds = array<i64: 1>, scalar_prefetch = 0 : i64, scratch_operands = 0 : i64, tpu.core_type = #tpu.core_type<tc>, window_params = [{pipeline_mode = #tpu.pipeline_mode<synchronous>, transform_indices = @transform_0, window_bounds = array<i64: 1, 256>}, {transform_indices = @transform_1, window_bounds = array<i64: 256, 8>}, {pipeline_mode = #tpu.pipeline_mode<synchronous>, transform_indices = @transform_2, window_bounds = array<i64: 1, 1>}, {transform_indices = @transform_3, window_bounds = array<i64: 1, 8>}]} {
    %c0 = arith.constant 0 : index
    %c0_0 = arith.constant 0 : index
    %0 = vector.load %arg1[%c0, %c0_0] : memref<1x256xbf16, #tpu.memory_space<vmem>>, vector<1x256xbf16>
    %c0_1 = arith.constant 0 : index
    %c0_2 = arith.constant 0 : index
    %1 = vector.load %arg2[%c0_1, %c0_2] : memref<256x8xbf16, #tpu.memory_space<vmem>>, vector<256x8xbf16>
    %cst = arith.constant dense<0.000000e+00> : vector<1x8xf32>
    %2 = tpu.matmul %0, %1, %cst {dimension_numbers = #tpu.dot_dimension_numbers<[1], [0], [0], [1], [0, 0, 1, 1], [], []>} : vector<1x256xbf16>, vector<256x8xbf16>, vector<1x8xf32> -> vector<1x8xf32>
    %c0_3 = arith.constant 0 : index
    %c0_4 = arith.constant 0 : index
    %3 = vector.load %arg3[%c0_3, %c0_4] : memref<1x1xf32, #tpu.memory_space<vmem>>, vector<1x1xf32>
    %4 = vector.broadcast %3 : vector<1x1xf32> to vector<1x8xf32>
    %5 = arith.addf %2, %4 : vector<1x8xf32>
    %cst_5 = arith.constant 0.000000e+00 : f32
    %6 = vector.broadcast %cst_5 : f32 to vector<1x8xf32>
    %7 = arith.cmpf ogt, %5, %6 : vector<1x8xf32>
    %cst_6 = arith.constant 2.000000e-01 : f32
    %8 = vector.broadcast %cst_6 : f32 to vector<1x8xf32>
    %9 = arith.mulf %8, %5 : vector<1x8xf32>
    %10 = arith.select %7, %5, %9 : vector<1x8xi1>, vector<1x8xf32>
    %c0_7 = arith.constant 0 : index
    %c0_8 = arith.constant 0 : index
    %11 = vector.load %arg4[%c0_7, %c0_8] : memref<1x8xf32, #tpu.memory_space<vmem>>, vector<1x8xf32>
    tpu.vector_store %arg4[%c0_7, %c0_8], %10 {strides = array<i32>} : memref<1x8xf32, #tpu.memory_space<vmem>>, vector<1x8xf32>,
    return
  }
  func.func @transform_0(%arg0: i32) -> (i32, i32) {
    %c0_i32 = arith.constant 0 : i32
    %c0_i32_0 = arith.constant 0 : i32
    %c0_i32_1 = arith.constant 0 : i32
    return %c0_i32, %c0_i32_0 : i32, i32
  }
  func.func @transform_1(%arg0: i32) -> (i32, i32) {
    %c0_i32 = arith.constant 0 : i32
    %c0_i32_0 = arith.constant 0 : i32
    return %c0_i32, %arg0 : i32, i32
  }
  func.func @transform_2(%arg0: i32) -> (i32, i32) {
    %c0_i32 = arith.constant 0 : i32
    %c0_i32_0 = arith.constant 0 : i32
    %c0_i32_1 = arith.constant 0 : i32
    return %c0_i32, %c0_i32_0 : i32, i32
  }
  func.func @transform_3(%arg0: i32) -> (i32, i32) {
    %c0_i32 = arith.constant 0 : i32
    %c0_i32_0 = arith.constant 0 : i32
    return %c0_i32, %arg0 : i32, i32
  }
}

</mosaic_0001>

<llo_original>
// kernel: patch_discriminate_2.6
$region0: #{patch_discriminate_2.6}
  #allocation0 [shape = 'u32[]', space=smem, size = 0x4, offset = 0x4, fixed_abs, tag = 'smem constant byte address 0x4 - core index']
  #allocation1 [shape = 'u32[144,128]{1,0:T(1,128)}', space=vmem, size = 0x12000, scoped, tag = 'internal scratch']
  %s0 = inlined_call_operand.vmem [shape: bf16[4,147], index: 0, kind: input, shape index: {}]
  %s1 = inlined_call_operand.vmem [shape: bf16[147,8192], index: 1, kind: input, shape index: {}]
  %s2 = inlined_call_operand.vmem [shape: f32[4,1], index: 2, kind: input, shape index: {}]
  %s3 = inlined_call_operand.vmem [shape: f32[4,8192], index: 3, kind: output, shape index: {}]
  %s4 = sld [smem:[#allocation0]]
  $region68: #{patch_discriminate_2.6} parent=0
    _
  %s6 = ssub.s32 1, %s4
  %s7 = scalar_select 0, %s6, %s4
  $region1: #{patch_discriminate_2.6} parent=0
    #allocation2 [shape = 'u8[2490368]{0}', space=vmem, size = 0x260000, scoped, tag = 'input window, operand 1']
    loop: start=0, step=1, limit=4
    $region2: #{patch_discriminate_2.6} parent=1 // loop_pre_header
      _
    $region3: #{patch_discriminate_2.6} parent=1 // loop_header
      %s9 = sphi 0, %s13
      %p10 = scmp.ge.s32.totalorder %s9, 4
      %s17 = sphi 0, %s17
      %s19 = sphi 0, %s17
      %s20 = sphi 0, %s19
      %s34 = sphi 0, %s20
      %s40 = sphi 0, %s42
      %s43 = sphi 0, %s40
      %s44 = sphi 0, %s43
      %s60 = sphi 0, %s44
      %s64 = sphi 0, %s64
      %s66 = sphi 0, %s64
      %s67 = sphi 0, %s66
      %s81 = sphi 0, %s67
      %s87 = sphi 0, %s89
      %s90 = sphi 0, %s87
      %s91 = sphi 0, %s90
      %s107 = sphi 0, %s91
    $region4: #{patch_discriminate_2.6} parent=1 // loop_header_branch
      %12 = sbr.rel (%p10) target = $region8
    $region5: #{patch_discriminate_2.6} parent=1 // loop_body
      %s14 = ssub.s32 %s9, 1
      %s15 = ssub.s32 %s9, 2
      %s16 = sadd.s32 %s9, 1
      %s18 = sadd.s32 %s17, 1
      %p21 = scmp.eq.s32.totalorder %s9, 1
      %p22 = scmp.ne.s32.totalorder %s17, %s19
      %p23 = scmp.eq.s32.totalorder %s9, 0
      %p24 = por %p22, %p23
      %p25 = scmp.ne.s32.totalorder %s17, %s19
      %p26 = scmp.eq.s32.totalorder %s14, 1
      %p27 = por %p25, %p26
      %p28 = scmp.ne.s32.totalorder %s19, %s20
      %p29 = scmp.eq.s32.totalorder %s14, 0
      %p30 = por %p28, %p29
      %p31 = scmp.ne.s32.totalorder %s19, %s20
      %p32 = scmp.eq.s32.totalorder %s15, 1
      %p33 = por %p31, %p32
      %p35 = scmp.ne.s32.totalorder %s20, %s34
      %p36 = scmp.eq.s32.totalorder %s15, 0
      %p37 = por %p35, %p36
      %s38 = ssub.s32 %s9, %s16
      %p39 = scmp.eq.s32.totalorder %s38, 0
      %s41 = sadd.s32 %s40, 1
      %s42 = scalar_select %p39, %s40, %s41
      %p45 = pneg %p39
      %p46 = scmp.eq.s32.totalorder %s9, 1
      %p47 = por %p45, %p46
      %p48 = scmp.ne.s32.totalorder %s40, %s43
      %p49 = scmp.eq.s32.totalorder %s9, 0
      %p50 = por %p48, %p49
      %p51 = scmp.ne.s32.totalorder %s40, %s43
      %p52 = scmp.eq.s32.totalorder %s14, 1
      %p53 = por %p51, %p52
      %p54 = scmp.ne.s32.totalorder %s43, %s44
      %p55 = scmp.eq.s32.totalorder %s14, 0
      %p56 = por %p54, %p55
      %p57 = scmp.ne.s32.totalorder %s43, %s44
      %p58 = scmp.eq.s32.totalorder %s15, 1
      %p59 = por %p57, %p58
      %p61 = scmp.ne.s32.totalorder %s44, %s60
      %p62 = scmp.eq.s32.totalorder %s15, 0
      %p63 = por %p61, %p62
      %s65 = sadd.s32 %s64, 1
      %p68 = scmp.eq.s32.totalorder %s9, 1
      %p69 = scmp.ne.s32.totalorder %s64, %s66
      %p70 = scmp.eq.s32.totalorder %s9, 0
      %p71 = por %p69, %p70
      %p72 = scmp.ne.s32.totalorder %s64, %s66
      %p73 = scmp.eq.s32.totalorder %s14, 1
      %p74 = por %p72, %p73
      %p75 = scmp.ne.s32.totalorder %s66, %s67
      %p76 = scmp.eq.s32.totalorder %s14, 0
      %p77 = por %p75, %p76
      %p78 = scmp.ne.s32.totalorder %s66, %s67
      %p79 = scmp.eq.s32.totalorder %s15, 1
      %p80 = por %p78, %p79
      %p82 = scmp.ne.s32.totalorder %s67, %s81
      %p83 = scmp.eq.s32.totalorder %s15, 0
      %p84 = por %p82, %p83
      %s85 = ssub.s32 %s9, %s16
      %p86 = scmp.eq.s32.totalorder %s85, 0
      %s88 = sadd.s32 %s87, 1
      %s89 = scalar_select %p86, %s87, %s88
      %p92 = pneg %p86
      %p93 = scmp.eq.s32.totalorder %s9, 1
      %p94 = por %p92, %p93
      %p95 = scmp.ne.s32.totalorder %s87, %s90
      %p96 = scmp.eq.s32.totalorder %s9, 0
      %p97 = por %p95, %p96
      %p98 = scmp.ne.s32.totalorder %s87, %s90
      %p99 = scmp.eq.s32.totalorder %s14, 1
      %p100 = por %p98, %p99
      %p101 = scmp.ne.s32.totalorder %s90, %s91
      %p102 = scmp.eq.s32.totalorder %s14, 0
      %p103 = por %p101, %p102
      %p104 = scmp.ne.s32.totalorder %s90, %s91
      %p105 = scmp.eq.s32.totalorder %s15, 1
      %p106 = por %p104, %p105
      %p108 = scmp.ne.s32.totalorder %s91, %s107
      %p109 = scmp.eq.s32.totalorder %s15, 0
      %p110 = por %p108, %p109
      %p111 = scmp.le.s32.totalorder 1, %s9
      %p112 = scmp.lt.s32.totalorder %s9, 3
      %p113 = pnand %p111, %p112
      %p114 = pneg %p113
      // Predicated region
      $region9: #{patch_discriminate_2.6} parent=5 // pred_check
        _
      $region10: #{patch_discriminate_2.6} parent=5 // pred_check_branch
        %116 = sbr.rel (%p113) target = $region12
      $region11: #{patch_discriminate_2.6} parent=5 // pred_region
        %s117 = ssub.s32 %s9, 1
        // Predicated region
        $region13: #{patch_discriminate_2.6} parent=11 // pred_check
          %p118 = pneg %p30
        $region14: #{patch_discriminate_2.6} parent=11 // pred_check_branch
          %120 = sbr.rel (%p118) target = $region16
        $region15: #{patch_discriminate_2.6} parent=11 // pred_region
          _
        $region16: #{patch_discriminate_2.6} parent=11 // pred_fallthru
          _
        // Predicated region
        $region17: #{patch_discriminate_2.6} parent=11 // pred_check
          %p121 = pneg %p77
        $region18: #{patch_discriminate_2.6} parent=11 // pred_check_branch
          %123 = sbr.rel (%p121) target = $region20
        $region19: #{patch_discriminate_2.6} parent=11 // pred_region
          _
        $region20: #{patch_discriminate_2.6} parent=11 // pred_fallthru
          _
      $region12: #{patch_discriminate_2.6} parent=5 // pred_fallthru
        _
      %p124 = scmp.lt.s32.totalorder %s9, 2
      // Predicated region
      $region21: #{patch_discriminate_2.6} parent=5 // pred_check
        %p125 = pneg %p124
      $region22: #{patch_discriminate_2.6} parent=5 // pred_check_branch
        %127 = sbr.rel (%p125) target = $region24
      $region23: #{patch_discriminate_2.6} parent=5 // pred_region
        // Predicated region
        $region25: #{patch_discriminate_2.6} parent=23 // pred_check
          %p128 = pneg %p50
        $region26: #{patch_discriminate_2.6} parent=23 // pred_check_branch
          %130 = sbr.rel (%p128) target = $region28
        $region27: #{patch_discriminate_2.6} parent=23 // pred_region
          %s131 = sand.u32 %s40, 1
          %s132 = sand.u32 %s40, 1
          %s133 = smul.addr %s132, 2432
          %s134 = scalar_lea.vmem [#allocation2], %s133
          %s135 = smul.u32 32, %s9
          %s136 = smul.addr %s135, 4
          %s137 = scalar_lea.vmem %s1, %s136
          // Predicated region
          $region29: #{patch_discriminate_2.6} parent=27 // pred_check
            _
          $region30: #{patch_discriminate_2.6} parent=27 // pred_check_branch
            %139 = sbr.rel (0) target = $region32
          $region31: #{patch_discriminate_2.6} parent=27 // pred_region
            // Predicated region
            $region33: #{patch_discriminate_2.6} parent=31 // pred_check
              _
            $region34: #{patch_discriminate_2.6} parent=31 // pred_check_branch
              %141 = sbr.rel (0) target = $region36
            $region35: #{patch_discriminate_2.6} parent=31 // pred_region
              loop: start=0, step=1, limit=1
              $region37: #{patch_discriminate_2.6} parent=35 // loop_pre_header
                _
              $region38: #{patch_discriminate_2.6} parent=35 // loop_header
                %s143 = sphi 0, %s147
                %p144 = scmp.ge.s32.totalorder %s143, 1
                %s148 = sphi %s137, %s137
                %s149 = sphi %s134, %s134
              $region39: #{patch_discriminate_2.6} parent=35 // loop_header_branch
                %146 = sbr.rel (%p144) target = $region43
              $region40: #{patch_discriminate_2.6} parent=35 // loop_body
                %v150 = vld [vmem:[%s148] sm:$0xff]
                %151 = vst [vmem:[%s149] sm:$0xff] %v150
                %v152 = vld [vmem:[%s148 + $0x8] sm:$0xff]
                %153 = vst [vmem:[%s149 + $0x8] sm:$0xff] %v152
                %v154 = vld [vmem:[%s148 + $0x10] sm:$0xff]
                %155 = vst [vmem:[%s149 + $0x10] sm:$0xff] %v154
                %v156 = vld [vmem:[%s148 + $0x18] sm:$0xff]
                %157 = vst [vmem:[%s149 + $0x18] sm:$0xff] %v156
                %v158 = vld [vmem:[%s148 + $0x20] sm:$0xff]
                %159 = vst [vmem:[%s149 + $0x20] sm:$0xff] %v158
                %v160 = vld [vmem:[%s148 + $0x28] sm:$0xff]
                %161 = vst [vmem:[%s149 + $0x28] sm:$0xff] %v160
                %v162 = vld [vmem:[%s148 + $0x30] sm:$0xff]
                %163 = vst [vmem:[%s149 + $0x30] sm:$0xff] %v162
                %v164 = vld [vmem:[%s148 + $0x38] sm:$0xff]
                %165 = vst [vmem:[%s149 + $0x38] sm:$0xff] %v164
                %v166 = vld [vmem:[%s148 + $0x40] sm:$0xff]
                %167 = vst [vmem:[%s149 + $0x40] sm:$0xff] %v166
                %v168 = vld [vmem:[%s148 + $0x48] sm:$0xff]
                %169 = vst [vmem:[%s149 + $0x48] sm:$0xff] %v168
                %v170 = vld [vmem:[%s148 + $0x50] sm:$0xff]
                %171 = vst [vmem:[%s149 + $0x50] sm:$0xff] %v170
                %v172 = vld [vmem:[%s148 + $0x58] sm:$0xff]
                %173 = vst [vmem:[%s149 + $0x58] sm:$0xff] %v172
                %v174 = vld [vmem:[%s148 + $0x60] sm:$0xff]
                %175 = vst [vmem:[%s149 + $0x60] sm:$0xff] %v174
                %v176 = vld [vmem:[%s148 + $0x68] sm:$0xff]
                %177 = vst [vmem:[%s149 + $0x68] sm:$0xff] %v176
                %v178 = vld [vmem:[%s148 + $0x70] sm:$0xff]
                %179 = vst [vmem:[%s149 + $0x70] sm:$0xff] %v178
                %v180 = vld [vmem:[%s148 + $0x78] sm:$0xff]
                %181 = vst [vmem:[%s149 + $0x78] sm:$0xff] %v180
                %v182 = vld [vmem:[%s148 + $0x100] sm:$0xff]
                %183 = vst [vmem:[%s149 + $0x80] sm:$0xff] %v182
                %v184 = vld [vmem:[%s148 + $0x108] sm:$0xff]
                %185 = vst [vmem:[%s149 + $0x88] sm:$0xff] %v184
                %v186 = vld [vmem:[%s148 + $0x110] sm:$0xff]
                %187 = vst [vmem:[%s149 + $0x90] sm:$0xff] %v186
                %v188 = vld [vmem:[%s148 + $0x118] sm:$0xff]
                %189 = vst [vmem:[%s149 + $0x98] sm:$0xff] %v188
                %v190 = vld [vmem:[%s148 + $0x120] sm:$0xff]
                %191 = vst [vmem:[%s149 + $0xa0] sm:$0xff] %v190
                %v192 = vld [vmem:[%s148 + $0x128] sm:$0xff]
                %193 = vst [vmem:[%s149 + $0xa8] sm:$0xff] %v192
                %v194 = vld [vmem:[%s148 + $0x130] sm:$0xff]
                %195 = vst [vmem:[%s149 + $0xb0] sm:$0xff] %v194
                %v196 = vld [vmem:[%s148 + $0x138] sm:$0xff]
                %197 = vst [vmem:[%s149 + $0xb8] sm:$0xff] %v196
                %v198 = vld [vmem:[%s148 + $0x140] sm:$0xff]
                %199 = vst [vmem:[%s149 + $0xc0] sm:$0xff] %v198
                %v200 = vld [vmem:[%s148 + $0x148] sm:$0xff]
                %201 = vst [vmem:[%s149 + $0xc8] sm:$0xff] %v200
                %v202 = vld [vmem:[%s148 + $0x150] sm:$0xff]
                %203 = vst [vmem:[%s149 + $0xd0] sm:$0xff] %v202
                %v204 = vld [vmem:[%s148 + $0x158] sm:$0xff]
                %205 = vst [vmem:[%s149 + $0xd8] sm:$0xff] %v204
                %v206 = vld [vmem:[%s148 + $0x160] sm:$0xff]
                %207 = vst [vmem:[%s149 + $0xe0] sm:$0xff] %v206
                %v208 = vld [vmem:[%s148 + $0x168] sm:$0xff]
                %209 = vst [vmem:[%s149 + $0xe8] sm:$0xff] %v208
                %v210 = vld [vmem:[%s148 + $0x170] sm:$0xff]
                %211 = vst [vmem:[%s149 + $0xf0] sm:$0xff] %v210
                %v212 = vld [vmem:[%s148 + $0x178] sm:$0xff]
                %213 = vst [vmem:[%s149 + $0xf8] sm:$0xff] %v212
                %v214 = vld [vmem:[%s148 + $0x200] sm:$0xff]
                %215 = vst [vmem:[%s149 + $0x100] sm:$0xff] %v214
                %v216 = vld [vmem:[%s148 + $0x208] sm:$0xff]
                %217 = vst [vmem:[%s149 + $0x108] sm:$0xff] %v216
                %v218 = vld [vmem:[%s148 + $0x210] sm:$0xff]
                %219 = vst [vmem:[%s149 + $0x110] sm:$0xff] %v218
                %v220 = vld [vmem:[%s148 + $0x218] sm:$0xff]
                %221 = vst [vmem:[%s149 + $0x118] sm:$0xff] %v220
                %v222 = vld [vmem:[%s148 + $0x220] sm:$0xff]
                %223 = vst [vmem:[%s149 + $0x120] sm:$0xff] %v222
                %v224 = vld [vmem:[%s148 + $0x228] sm:$0xff]
                %225 = vst [vmem:[%s149 + $0x128] sm:$0xff] %v224
                %v226 = vld [vmem:[%s148 + $0x230] sm:$0xff]
                %227 = vst [vmem:[%s149 + $0x130] sm:$0xff] %v226
                %v228 = vld [vmem:[%s148 + $0x238] sm:$0xff]
                %229 = vst [vmem:[%s149 + $0x138] sm:$0xff] %v228
                %v230 = vld [vmem:[%s148 + $0x240] sm:$0xff]
                %231 = vst [vmem:[%s149 + $0x140] sm:$0xff] %v230
                %v232 = vld [vmem:[%s148 + $0x248] sm:$0xff]
                %233 = vst [vmem:[%s149 + $0x148] sm:$0xff] %v232
                %v234 = vld [vmem:[%s148 + $0x250] sm:$0xff]
                %235 = vst [vmem:[%s149 + $0x150] sm:$0xff] %v234
                %v236 = vld [vmem:[%s148 + $0x258] sm:$0xff]
                %237 = vst [vmem:[%s149 + $0x158] sm:$0xff] %v236
                %v238 = vld [vmem:[%s148 + $0x260] sm:$0xff]
                %239 = vst [vmem:[%s149 + $0x160] sm:$0xff] %v238
                %v240 = vld [vmem:[%s148 + $0x268] sm:$0xff]
                %241 = vst [vmem:[%s149 + $0x168] sm:$0xff] %v240
                %v242 = vld [vmem:[%s148 + $0x270] sm:$0xff]
                %243 = vst [vmem:[%s149 + $0x170] sm:$0xff] %v242
                %v244 = vld [vmem:[%s148 + $0x278] sm:$0xff]
                %245 = vst [vmem:[%s149 + $0x178] sm:$0xff] %v244
                %v246 = vld [vmem:[%s148 + $0x300] sm:$0xff]
                %247 = vst [vmem:[%s149 + $0x180] sm:$0xff] %v246
                %v248 = vld [vmem:[%s148 + $0x308] sm:$0xff]
                %249 = vst [vmem:[%s149 + $0x188] sm:$0xff] %v248
                %v250 = vld [vmem:[%s148 + $0x310] sm:$0xff]
                %251 = vst [vmem:[%s149 + $0x190] sm:$0xff] %v250
                %v252 = vld [vmem:[%s148 + $0x318] sm:$0xff]
                %253 = vst [vmem:[%s149 + $0x198] sm:$0xff] %v252
                %v254 = vld [vmem:[%s148 + $0x320] sm:$0xff]
                %255 = vst [vmem:[%s149 + $0x1a0] sm:$0xff] %v254
                %v256 = vld [vmem:[%s148 + $0x328] sm:$0xff]
                %257 = vst [vmem:[%s149 + $0x1a8] sm:$0xff] %v256
                %v258 = vld [vmem:[%s148 + $0x330] sm:$0xff]
                %259 = vst [vmem:[%s149 + $0x1b0] sm:$0xff] %v258
                %v260 = vld [vmem:[%s148 + $0x338] sm:$0xff]
                %261 = vst [vmem:[%s149 + $0x1b8] sm:$0xff] %v260
                %v262 = vld [vmem:[%s148 + $0x340] sm:$0xff]
                %263 = vst [vmem:[%s149 + $0x1c0] sm:$0xff] %v262
                %v264 = vld [vmem:[%s148 + $0x348] sm:$0xff]
                %265 = vst [vmem:[%s149 + $0x1c8] sm:$0xff] %v264
                %v266 = vld [vmem:[%s148 + $0x350] sm:$0xff]
                %267 = vst [vmem:[%s149 + $0x1d0] sm:$0xff] %v266
                %v268 = vld [vmem:[%s148 + $0x358] sm:$0xff]
                %269 = vst [vmem:[%s149 + $0x1d8] sm:$0xff] %v268
                %v270 = vld [vmem:[%s148 + $0x360] sm:$0xff]
                %271 = vst [vmem:[%s149 + $0x1e0] sm:$0xff] %v270
                %v272 = vld [vmem:[%s148 + $0x368] sm:$0xff]
                %273 = vst [vmem:[%s149 + $0x1e8] sm:$0xff] %v272
                %v274 = vld [vmem:[%s148 + $0x370] sm:$0xff]
                %275 = vst [vmem:[%s149 + $0x1f0] sm:$0xff] %v274
                %v276 = vld [vmem:[%s148 + $0x378] sm:$0xff]
                %277 = vst [vmem:[%s149 + $0x1f8] sm:$0xff] %v276
                %v278 = vld [vmem:[%s148 + $0x400] sm:$0xff]
                %279 = vst [vmem:[%s149 + $0x200] sm:$0xff] %v278
                %v280 = vld [vmem:[%s148 + $0x408] sm:$0xff]
                %281 = vst [vmem:[%s149 + $0x208] sm:$0xff] %v280
                %v282 = vld [vmem:[%s148 + $0x410] sm:$0xff]
                %283 = vst [vmem:[%s149 + $0x210] sm:$0xff] %v282
                %v284 = vld [vmem:[%s148 + $0x418] sm:$0xff]
                %285 = vst [vmem:[%s149 + $0x218] sm:$0xff] %v284
                %v286 = vld [vmem:[%s148 + $0x420] sm:$0xff]
                %287 = vst [vmem:[%s149 + $0x220] sm:$0xff] %v286
                %v288 = vld [vmem:[%s148 + $0x428] sm:$0xff]
                %289 = vst [vmem:[%s149 + $0x228] sm:$0xff] %v288
                %v290 = vld [vmem:[%s148 + $0x430] sm:$0xff]
                %291 = vst [vmem:[%s149 + $0x230] sm:$0xff] %v290
                %v292 = vld [vmem:[%s148 + $0x438] sm:$0xff]
                %293 = vst [vmem:[%s149 + $0x238] sm:$0xff] %v292
                %v294 = vld [vmem:[%s148 + $0x440] sm:$0xff]
                %295 = vst [vmem:[%s149 + $0x240] sm:$0xff] %v294
                %v296 = vld [vmem:[%s148 + $0x448] sm:$0xff]
                %297 = vst [vmem:[%s149 + $0x248] sm:$0xff] %v296
                %v298 = vld [vmem:[%s148 + $0x450] sm:$0xff]
                %299 = vst [vmem:[%s149 + $0x250] sm:$0xff] %v298
                %v300 = vld [vmem:[%s148 + $0x458] sm:$0xff]
                %301 = vst [vmem:[%s149 + $0x258] sm:$0xff] %v300
                %v302 = vld [vmem:[%s148 + $0x460] sm:$0xff]
                %303 = vst [vmem:[%s149 + $0x260] sm:$0xff] %v302
                %v304 = vld [vmem:[%s148 + $0x468] sm:$0xff]
                %305 = vst [vmem:[%s149 + $0x268] sm:$0xff] %v304
                %v306 = vld [vmem:[%s148 + $0x470] sm:$0xff]
                %307 = vst [vmem:[%s149 + $0x270] sm:$0xff] %v306
                %v308 = vld [vmem:[%s148 + $0x478] sm:$0xff]
                %309 = vst [vmem:[%s149 + $0x278] sm:$0xff] %v308
                %v310 = vld [vmem:[%s148 + $0x500] sm:$0xff]
                %311 = vst [vmem:[%s149 + $0x280] sm:$0xff] %v310
                %v312 = vld [vmem:[%s148 + $0x508] sm:$0xff]
                %313 = vst [vmem:[%s149 + $0x288] sm:$0xff] %v312
                %v314 = vld [vmem:[%s148 + $0x510] sm:$0xff]
                %315 = vst [vmem:[%s149 + $0x290] sm:$0xff] %v314
                %v316 = vld [vmem:[%s148 + $0x518] sm:$0xff]
                %317 = vst [vmem:[%s149 + $0x298] sm:$0xff] %v316
                %v318 = vld [vmem:[%s148 + $0x520] sm:$0xff]
                %319 = vst [vmem:[%s149 + $0x2a0] sm:$0xff] %v318
                %v320 = vld [vmem:[%s148 + $0x528] sm:$0xff]
                %321 = vst [vmem:[%s149 + $0x2a8] sm:$0xff] %v320
                %v322 = vld [vmem:[%s148 + $0x530] sm:$0xff]
                %323 = vst [vmem:[%s149 + $0x2b0] sm:$0xff] %v322
                %v324 = vld [vmem:[%s148 + $0x538] sm:$0xff]
                %325 = vst [vmem:[%s149 + $0x2b8] sm:$0xff] %v324
                %v326 = vld [vmem:[%s148 + $0x540] sm:$0xff]
                %327 = vst [vmem:[%s149 + $0x2c0] sm:$0xff] %v326
                %v328 = vld [vmem:[%s148 + $0x548] sm:$0xff]
                %329 = vst [vmem:[%s149 + $0x2c8] sm:$0xff] %v328
                %v330 = vld [vmem:[%s148 + $0x550] sm:$0xff]
                %331 = vst [vmem:[%s149 + $0x2d0] sm:$0xff] %v330
                %v332 = vld [vmem:[%s148 + $0x558] sm:$0xff]
                %333 = vst [vmem:[%s149 + $0x2d8] sm:$0xff] %v332
                %v334 = vld [vmem:[%s148 + $0x560] sm:$0xff]
                %335 = vst [vmem:[%s149 + $0x2e0] sm:$0xff] %v334
                %v336 = vld [vmem:[%s148 + $0x568] sm:$0xff]
                %337 = vst [vmem:[%s149 + $0x2e8] sm:$0xff] %v336
                %v338 = vld [vmem:[%s148 + $0x570] sm:$0xff]
                %339 = vst [vmem:[%s149 + $0x2f0] sm:$0xff] %v338
                %v340 = vld [vmem:[%s148 + $0x578] sm:$0xff]
                %341 = vst [vmem:[%s149 + $0x2f8] sm:$0xff] %v340
                %v342 = vld [vmem:[%s148 + $0x600] sm:$0xff]
                %343 = vst [vmem:[%s149 + $0x300] sm:$0xff] %v342
                %v344 = vld [vmem:[%s148 + $0x608] sm:$0xff]
                %345 = vst [vmem:[%s149 + $0x308] sm:$0xff] %v344
                %v346 = vld [vmem:[%s148 + $0x610] sm:$0xff]
                %347 = vst [vmem:[%s149 + $0x310] sm:$0xff] %v346
                %v348 = vld [vmem:[%s148 + $0x618] sm:$0xff]
                %349 = vst [vmem:[%s149 + $0x318] sm:$0xff] %v348
                %v350 = vld [vmem:[%s148 + $0x620] sm:$0xff]
                %351 = vst [vmem:[%s149 + $0x320] sm:$0xff] %v350
                %v352 = vld [vmem:[%s148 + $0x628] sm:$0xff]
                %353 = vst [vmem:[%s149 + $0x328] sm:$0xff] %v352
                %v354 = vld [vmem:[%s148 + $0x630] sm:$0xff]
                %355 = vst [vmem:[%s149 + $0x330] sm:$0xff] %v354
                %v356 = vld [vmem:[%s148 + $0x638] sm:$0xff]
                %357 = vst [vmem:[%s149 + $0x338] sm:$0xff] %v356
                %v358 = vld [vmem:[%s148 + $0x640] sm:$0xff]
                %359 = vst [vmem:[%s149 + $0x340] sm:$0xff] %v358
                %v360 = vld [vmem:[%s148 + $0x648] sm:$0xff]
                %361 = vst [vmem:[%s149 + $0x348] sm:$0xff] %v360
                %v362 = vld [vmem:[%s148 + $0x650] sm:$0xff]
                %363 = vst [vmem:[%s149 + $0x350] sm:$0xff] %v362
                %v364 = vld [vmem:[%s148 + $0x658] sm:$0xff]
                %365 = vst [vmem:[%s149 + $0x358] sm:$0xff] %v364
                %v366 = vld [vmem:[%s148 + $0x660] sm:$0xff]
                %367 = vst [vmem:[%s149 + $0x360] sm:$0xff] %v366
                %v368 = vld [vmem:[%s148 + $0x668] sm:$0xff]
                %369 = vst [vmem:[%s149 + $0x368] sm:$0xff] %v368
                %v370 = vld [vmem:[%s148 + $0x670] sm:$0xff]
                %371 = vst [vmem:[%s149 + $0x370] sm:$0xff] %v370
                %v372 = vld [vmem:[%s148 + $0x678] sm:$0xff]
                %373 = vst [vmem:[%s149 + $0x378] sm:$0xff] %v372
                %v374 = vld [vmem:[%s148 + $0x700] sm:$0xff]
                %375 = vst [vmem:[%s149 + $0x380] sm:$0xff] %v374
                %v376 = vld [vmem:[%s148 + $0x708] sm:$0xff]
                %377 = vst [vmem:[%s149 + $0x388] sm:$0xff] %v376
                %v378 = vld [vmem:[%s148 + $0x710] sm:$0xff]
                %379 = vst [vmem:[%s149 + $0x390] sm:$0xff] %v378
                %v380 = vld [vmem:[%s148 + $0x718] sm:$0xff]
                %381 = vst [vmem:[%s149 + $0x398] sm:$0xff] %v380
                %v382 = vld [vmem:[%s148 + $0x720] sm:$0xff]
                %383 = vst [vmem:[%s149 + $0x3a0] sm:$0xff] %v382
                %v384 = vld [vmem:[%s148 + $0x728] sm:$0xff]
                %385 = vst [vmem:[%s149 + $0x3a8] sm:$0xff] %v384
                %v386 = vld [vmem:[%s148 + $0x730] sm:$0xff]
                %387 = vst [vmem:[%s149 + $0x3b0] sm:$0xff] %v386
                %v388 = vld [vmem:[%s148 + $0x738] sm:$0xff]
                %389 = vst [vmem:[%s149 + $0x3b8] sm:$0xff] %v388
                %v390 = vld [vmem:[%s148 + $0x740] sm:$0xff]
                %391 = vst [vmem:[%s149 + $0x3c0] sm:$0xff] %v390
                %v392 = vld [vmem:[%s148 + $0x748] sm:$0xff]
                %393 = vst [vmem:[%s149 + $0x3c8] sm:$0xff] %v392
                %v394 = vld [vmem:[%s148 + $0x750] sm:$0xff]
                %395 = vst [vmem:[%s149 + $0x3d0] sm:$0xff] %v394
                %v396 = vld [vmem:[%s148 + $0x758] sm:$0xff]
                %397 = vst [vmem:[%s149 + $0x3d8] sm:$0xff] %v396
                %v398 = vld [vmem:[%s148 + $0x760] sm:$0xff]
                %399 = vst [vmem:[%s149 + $0x3e0] sm:$0xff] %v398
                %v400 = vld [vmem:[%s148 + $0x768] sm:$0xff]
                %401 = vst [vmem:[%s149 + $0x3e8] sm:$0xff] %v400
                %v402 = vld [vmem:[%s148 + $0x770] sm:$0xff]
                %403 = vst [vmem:[%s149 + $0x3f0] sm:$0xff] %v402
                %v404 = vld [vmem:[%s148 + $0x778] sm:$0xff]
                %405 = vst [vmem:[%s149 + $0x3f8] sm:$0xff] %v404
                %v406 = vld [vmem:[%s148 + $0x800] sm:$0xff]
                %407 = vst [vmem:[%s149 + $0x400] sm:$0xff] %v406
                %v408 = vld [vmem:[%s148 + $0x808] sm:$0xff]
                %409 = vst [vmem:[%s149 + $0x408] sm:$0xff] %v408
                %v410 = vld [vmem:[%s148 + $0x810] sm:$0xff]
                %411 = vst [vmem:[%s149 + $0x410] sm:$0xff] %v410
                %v412 = vld [vmem:[%s148 + $0x818] sm:$0xff]
                %413 = vst [vmem:[%s149 + $0x418] sm:$0xff] %v412
                %v414 = vld [vmem:[%s148 + $0x820] sm:$0xff]
                %415 = vst [vmem:[%s149 + $0x420] sm:$0xff] %v414
                %v416 = vld [vmem:[%s148 + $0x828] sm:$0xff]
                %417 = vst [vmem:[%s149 + $0x428] sm:$0xff] %v416
                %v418 = vld [vmem:[%s148 + $0x830] sm:$0xff]
                %419 = vst [vmem:[%s149 + $0x430] sm:$0xff] %v418
                %v420 = vld [vmem:[%s148 + $0x838] sm:$0xff]
                %421 = vst [vmem:[%s149 + $0x438] sm:$0xff] %v420
                %v422 = vld [vmem:[%s148 + $0x840] sm:$0xff]
                %423 = vst [vmem:[%s149 + $0x440] sm:$0xff] %v422
                %v424 = vld [vmem:[%s148 + $0x848] sm:$0xff]
                %425 = vst [vmem:[%s149 + $0x448] sm:$0xff] %v424
                %v426 = vld [vmem:[%s148 + $0x850] sm:$0xff]
                %427 = vst [vmem:[%s149 + $0x450] sm:$0xff] %v426
                %v428 = vld [vmem:[%s148 + $0x858] sm:$0xff]
                %429 = vst [vmem:[%s149 + $0x458] sm:$0xff] %v428
                %v430 = vld [vmem:[%s148 + $0x860] sm:$0xff]
                %431 = vst [vmem:[%s149 + $0x460] sm:$0xff] %v430
                %v432 = vld [vmem:[%s148 + $0x868] sm:$0xff]
                %433 = vst [vmem:[%s149 + $0x468] sm:$0xff] %v432
                %v434 = vld [vmem:[%s148 + $0x870] sm:$0xff]
                %435 = vst [vmem:[%s149 + $0x470] sm:$0xff] %v434
                %v436 = vld [vmem:[%s148 + $0x878] sm:$0xff]
                %437 = vst [vmem:[%s149 + $0x478] sm:$0xff] %v436
                %v438 = vld [vmem:[%s148 + $0x900] sm:$0xff]
                %439 = vst [vmem:[%s149 + $0x480] sm:$0xff] %v438
                %v440 = vld [vmem:[%s148 + $0x908] sm:$0xff]
                %441 = vst [vmem:[%s149 + $0x488] sm:$0xff] %v440
                %v442 = vld [vmem:[%s148 + $0x910] sm:$0xff]
                %443 = vst [vmem:[%s149 + $0x490] sm:$0xff] %v442
                %v444 = vld [vmem:[%s148 + $0x918] sm:$0xff]
                %445 = vst [vmem:[%s149 + $0x498] sm:$0xff] %v444
                %v446 = vld [vmem:[%s148 + $0x920] sm:$0xff]
                %447 = vst [vmem:[%s149 + $0x4a0] sm:$0xff] %v446
                %v448 = vld [vmem:[%s148 + $0x928] sm:$0xff]
                %449 = vst [vmem:[%s149 + $0x4a8] sm:$0xff] %v448
                %v450 = vld [vmem:[%s148 + $0x930] sm:$0xff]
                %451 = vst [vmem:[%s149 + $0x4b0] sm:$0xff] %v450
                %v452 = vld [vmem:[%s148 + $0x938] sm:$0xff]
                %453 = vst [vmem:[%s149 + $0x4b8] sm:$0xff] %v452
                %v454 = vld [vmem:[%s148 + $0x940] sm:$0xff]
                %455 = vst [vmem:[%s149 + $0x4c0] sm:$0xff] %v454
                %v456 = vld [vmem:[%s148 + $0x948] sm:$0xff]
                %457 = vst [vmem:[%s149 + $0x4c8] sm:$0xff] %v456
                %v458 = vld [vmem:[%s148 + $0x950] sm:$0xff]
                %459 = vst [vmem:[%s149 + $0x4d0] sm:$0xff] %v458
                %v460 = vld [vmem:[%s148 + $0x958] sm:$0xff]
                %461 = vst [vmem:[%s149 + $0x4d8] sm:$0xff] %v460
                %v462 = vld [vmem:[%s148 + $0x960] sm:$0xff]
                %463 = vst [vmem:[%s149 + $0x4e0] sm:$0xff] %v462
                %v464 = vld [vmem:[%s148 + $0x968] sm:$0xff]
                %465 = vst [vmem:[%s149 + $0x4e8] sm:$0xff] %v464
                %v466 = vld [vmem:[%s148 + $0x970] sm:$0xff]
                %467 = vst [vmem:[%s149 + $0x4f0] sm:$0xff] %v466
                %v468 = vld [vmem:[%s148 + $0x978] sm:$0xff]
                %469 = vst [vmem:[%s149 + $0x4f8] sm:$0xff] %v468
                %v470 = vld [vmem:[%s148 + $0xa00] sm:$0xff]
                %471 = vst [vmem:[%s149 + $0x500] sm:$0xff] %v470
                %v472 = vld [vmem:[%s148 + $0xa08] sm:$0xff]
                %473 = vst [vmem:[%s149 + $0x508] sm:$0xff] %v472
                %v474 = vld [vmem:[%s148 + $0xa10] sm:$0xff]
                %475 = vst [vmem:[%s149 + $0x510] sm:$0xff] %v474
                %v476 = vld [vmem:[%s148 + $0xa18] sm:$0xff]
                %477 = vst [vmem:[%s149 + $0x518] sm:$0xff] %v476
                %v478 = vld [vmem:[%s148 + $0xa20] sm:$0xff]
                %479 = vst [vmem:[%s149 + $0x520] sm:$0xff] %v478
                %v480 = vld [vmem:[%s148 + $0xa28] sm:$0xff]
                %481 = vst [vmem:[%s149 + $0x528] sm:$0xff] %v480
                %v482 = vld [vmem:[%s148 + $0xa30] sm:$0xff]
                %483 = vst [vmem:[%s149 + $0x530] sm:$0xff] %v482
                %v484 = vld [vmem:[%s148 + $0xa38] sm:$0xff]
                %485 = vst [vmem:[%s149 + $0x538] sm:$0xff] %v484
                %v486 = vld [vmem:[%s148 + $0xa40] sm:$0xff]
                %487 = vst [vmem:[%s149 + $0x540] sm:$0xff] %v486
                %v488 = vld [vmem:[%s148 + $0xa48] sm:$0xff]
                %489 = vst [vmem:[%s149 + $0x548] sm:$0xff] %v488
                %v490 = vld [vmem:[%s148 + $0xa50] sm:$0xff]
                %491 = vst [vmem:[%s149 + $0x550] sm:$0xff] %v490
                %v492 = vld [vmem:[%s148 + $0xa58] sm:$0xff]
                %493 = vst [vmem:[%s149 + $0x558] sm:$0xff] %v492
                %v494 = vld [vmem:[%s148 + $0xa60] sm:$0xff]
                %495 = vst [vmem:[%s149 + $0x560] sm:$0xff] %v494
                %v496 = vld [vmem:[%s148 + $0xa68] sm:$0xff]
                %497 = vst [vmem:[%s149 + $0x568] sm:$0xff] %v496
                %v498 = vld [vmem:[%s148 + $0xa70] sm:$0xff]
                %499 = vst [vmem:[%s149 + $0x570] sm:$0xff] %v498
                %v500 = vld [vmem:[%s148 + $0xa78] sm:$0xff]
                %501 = vst [vmem:[%s149 + $0x578] sm:$0xff] %v500
                %v502 = vld [vmem:[%s148 + $0xb00] sm:$0xff]
                %503 = vst [vmem:[%s149 + $0x580] sm:$0xff] %v502
                %v504 = vld [vmem:[%s148 + $0xb08] sm:$0xff]
                %505 = vst [vmem:[%s149 + $0x588] sm:$0xff] %v504
                %v506 = vld [vmem:[%s148 + $0xb10] sm:$0xff]
                %507 = vst [vmem:[%s149 + $0x590] sm:$0xff] %v506
                %v508 = vld [vmem:[%s148 + $0xb18] sm:$0xff]
                %509 = vst [vmem:[%s149 + $0x598] sm:$0xff] %v508
                %v510 = vld [vmem:[%s148 + $0xb20] sm:$0xff]
                %511 = vst [vmem:[%s149 + $0x5a0] sm:$0xff] %v510
                %v512 = vld [vmem:[%s148 + $0xb28] sm:$0xff]
                %513 = vst [vmem:[%s149 + $0x5a8] sm:$0xff] %v512
                %v514 = vld [vmem:[%s148 + $0xb30] sm:$0xff]
                %515 = vst [vmem:[%s149 + $0x5b0] sm:$0xff] %v514
                %v516 = vld [vmem:[%s148 + $0xb38] sm:$0xff]
                %517 = vst [vmem:[%s149 + $0x5b8] sm:$0xff] %v516
                %v518 = vld [vmem:[%s148 + $0xb40] sm:$0xff]
                %519 = vst [vmem:[%s149 + $0x5c0] sm:$0xff] %v518
                %v520 = vld [vmem:[%s148 + $0xb48] sm:$0xff]
                %521 = vst [vmem:[%s149 + $0x5c8] sm:$0xff] %v520
                %v522 = vld [vmem:[%s148 + $0xb50] sm:$0xff]
                %523 = vst [vmem:[%s149 + $0x5d0] sm:$0xff] %v522
                %v524 = vld [vmem:[%s148 + $0xb58] sm:$0xff]
                %525 = vst [vmem:[%s149 + $0x5d8] sm:$0xff] %v524
                %v526 = vld [vmem:[%s148 + $0xb60] sm:$0xff]
                %527 = vst [vmem:[%s149 + $0x5e0] sm:$0xff] %v526
                %v528 = vld [vmem:[%s148 + $0xb68] sm:$0xff]
                %529 = vst [vmem:[%s149 + $0x5e8] sm:$0xff] %v528
                %v530 = vld [vmem:[%s148 + $0xb70] sm:$0xff]
                %531 = vst [vmem:[%s149 + $0x5f0] sm:$0xff] %v530
                %v532 = vld [vmem:[%s148 + $0xb78] sm:$0xff]
                %533 = vst [vmem:[%s149 + $0x5f8] sm:$0xff] %v532
                %v534 = vld [vmem:[%s148 + $0xc00] sm:$0xff]
                %535 = vst [vmem:[%s149 + $0x600] sm:$0xff] %v534
                %v536 = vld [vmem:[%s148 + $0xc08] sm:$0xff]
                %537 = vst [vmem:[%s149 + $0x608] sm:$0xff] %v536
                %v538 = vld [vmem:[%s148 + $0xc10] sm:$0xff]
                %539 = vst [vmem:[%s149 + $0x610] sm:$0xff] %v538
                %v540 = vld [vmem:[%s148 + $0xc18] sm:$0xff]
                %541 = vst [vmem:[%s149 + $0x618] sm:$0xff] %v540
                %v542 = vld [vmem:[%s148 + $0xc20] sm:$0xff]
                %543 = vst [vmem:[%s149 + $0x620] sm:$0xff] %v542
                %v544 = vld [vmem:[%s148 + $0xc28] sm:$0xff]
                %545 = vst [vmem:[%s149 + $0x628] sm:$0xff] %v544
                %v546 = vld [vmem:[%s148 + $0xc30] sm:$0xff]
                %547 = vst [vmem:[%s149 + $0x630] sm:$0xff] %v546
                %v548 = vld [vmem:[%s148 + $0xc38] sm:$0xff]
                %549 = vst [vmem:[%s149 + $0x638] sm:$0xff] %v548
                %v550 = vld [vmem:[%s148 + $0xc40] sm:$0xff]
                %551 = vst [vmem:[%s149 + $0x640] sm:$0xff] %v550
                %v552 = vld [vmem:[%s148 + $0xc48] sm:$0xff]
                %553 = vst [vmem:[%s149 + $0x648] sm:$0xff] %v552
                %v554 = vld [vmem:[%s148 + $0xc50] sm:$0xff]
                %555 = vst [vmem:[%s149 + $0x650] sm:$0xff] %v554
                %v556 = vld [vmem:[%s148 + $0xc58] sm:$0xff]
                %557 = vst [vmem:[%s149 + $0x658] sm:$0xff] %v556
                %v558 = vld [vmem:[%s148 + $0xc60] sm:$0xff]
                %559 = vst [vmem:[%s149 + $0x660] sm:$0xff] %v558
                %v560 = vld [vmem:[%s148 + $0xc68] sm:$0xff]
                %561 = vst [vmem:[%s149 + $0x668] sm:$0xff] %v560
                %v562 = vld [vmem:[%s148 + $0xc70] sm:$0xff]
                %563 = vst [vmem:[%s149 + $0x670] sm:$0xff] %v562
                %v564 = vld [vmem:[%s148 + $0xc78] sm:$0xff]
                %565 = vst [vmem:[%s149 + $0x678] sm:$0xff] %v564
                %v566 = vld [vmem:[%s148 + $0xd00] sm:$0xff]
                %567 = vst [vmem:[%s149 + $0x680] sm:$0xff] %v566
                %v568 = vld [vmem:[%s148 + $0xd08] sm:$0xff]
                %569 = vst [vmem:[%s149 + $0x688] sm:$0xff] %v568
                %v570 = vld [vmem:[%s148 + $0xd10] sm:$0xff]
                %571 = vst [vmem:[%s149 + $0x690] sm:$0xff] %v570
                %v572 = vld [vmem:[%s148 + $0xd18] sm:$0xff]
                %573 = vst [vmem:[%s149 + $0x698] sm:$0xff] %v572
                %v574 = vld [vmem:[%s148 + $0xd20] sm:$0xff]
                %575 = vst [vmem:[%s149 + $0x6a0] sm:$0xff] %v574
                %v576 = vld [vmem:[%s148 + $0xd28] sm:$0xff]
                %577 = vst [vmem:[%s149 + $0x6a8] sm:$0xff] %v576
                %v578 = vld [vmem:[%s148 + $0xd30] sm:$0xff]
                %579 = vst [vmem:[%s149 + $0x6b0] sm:$0xff] %v578
                %v580 = vld [vmem:[%s148 + $0xd38] sm:$0xff]
                %581 = vst [vmem:[%s149 + $0x6b8] sm:$0xff] %v580
                %v582 = vld [vmem:[%s148 + $0xd40] sm:$0xff]
                %583 = vst [vmem:[%s149 + $0x6c0] sm:$0xff] %v582
                %v584 = vld [vmem:[%s148 + $0xd48] sm:$0xff]
                %585 = vst [vmem:[%s149 + $0x6c8] sm:$0xff] %v584
                %v586 = vld [vmem:[%s148 + $0xd50] sm:$0xff]
                %587 = vst [vmem:[%s149 + $0x6d0] sm:$0xff] %v586
                %v588 = vld [vmem:[%s148 + $0xd58] sm:$0xff]
                %589 = vst [vmem:[%s149 + $0x6d8] sm:$0xff] %v588
                %v590 = vld [vmem:[%s148 + $0xd60] sm:$0xff]
                %591 = vst [vmem:[%s149 + $0x6e0] sm:$0xff] %v590
                %v592 = vld [vmem:[%s148 + $0xd68] sm:$0xff]
                %593 = vst [vmem:[%s149 + $0x6e8] sm:$0xff] %v592
                %v594 = vld [vmem:[%s148 + $0xd70] sm:$0xff]
                %595 = vst [vmem:[%s149 + $0x6f0] sm:$0xff] %v594
                %v596 = vld [vmem:[%s148 + $0xd78] sm:$0xff]
                %597 = vst [vmem:[%s149 + $0x6f8] sm:$0xff] %v596
                %v598 = vld [vmem:[%s148 + $0xe00] sm:$0xff]
                %599 = vst [vmem:[%s149 + $0x700] sm:$0xff] %v598
                %v600 = vld [vmem:[%s148 + $0xe08] sm:$0xff]
                %601 = vst [vmem:[%s149 + $0x708] sm:$0xff] %v600
                %v602 = vld [vmem:[%s148 + $0xe10] sm:$0xff]
                %603 = vst [vmem:[%s149 + $0x710] sm:$0xff] %v602
                %v604 = vld [vmem:[%s148 + $0xe18] sm:$0xff]
                %605 = vst [vmem:[%s149 + $0x718] sm:$0xff] %v604
                %v606 = vld [vmem:[%s148 + $0xe20] sm:$0xff]
                %607 = vst [vmem:[%s149 + $0x720] sm:$0xff] %v606
                %v608 = vld [vmem:[%s148 + $0xe28] sm:$0xff]
                %609 = vst [vmem:[%s149 + $0x728] sm:$0xff] %v608
                %v610 = vld [vmem:[%s148 + $0xe30] sm:$0xff]
                %611 = vst [vmem:[%s149 + $0x730] sm:$0xff] %v610
                %v612 = vld [vmem:[%s148 + $0xe38] sm:$0xff]
                %613 = vst [vmem:[%s149 + $0x738] sm:$0xff] %v612
                %v614 = vld [vmem:[%s148 + $0xe40] sm:$0xff]
                %615 = vst [vmem:[%s149 + $0x740] sm:$0xff] %v614
                %v616 = vld [vmem:[%s148 + $0xe48] sm:$0xff]
                %617 = vst [vmem:[%s149 + $0x748] sm:$0xff] %v616
                %v618 = vld [vmem:[%s148 + $0xe50] sm:$0xff]
                %619 = vst [vmem:[%s149 + $0x750] sm:$0xff] %v618
                %v620 = vld [vmem:[%s148 + $0xe58] sm:$0xff]
                %621 = vst [vmem:[%s149 + $0x758] sm:$0xff] %v620
                %v622 = vld [vmem:[%s148 + $0xe60] sm:$0xff]
                %623 = vst [vmem:[%s149 + $0x760] sm:$0xff] %v622
                %v624 = vld [vmem:[%s148 + $0xe68] sm:$0xff]
                %625 = vst [vmem:[%s149 + $0x768] sm:$0xff] %v624
                %v626 = vld [vmem:[%s148 + $0xe70] sm:$0xff]
                %627 = vst [vmem:[%s149 + $0x770] sm:$0xff] %v626
                %v628 = vld [vmem:[%s148 + $0xe78] sm:$0xff]
                %629 = vst [vmem:[%s149 + $0x778] sm:$0xff] %v628
                %v630 = vld [vmem:[%s148 + $0xf00] sm:$0xff]
                %631 = vst [vmem:[%s149 + $0x780] sm:$0xff] %v630
                %v632 = vld [vmem:[%s148 + $0xf08] sm:$0xff]
                %633 = vst [vmem:[%s149 + $0x788] sm:$0xff] %v632
                %v634 = vld [vmem:[%s148 + $0xf10] sm:$0xff]
                %635 = vst [vmem:[%s149 + $0x790] sm:$0xff] %v634
                %v636 = vld [vmem:[%s148 + $0xf18] sm:$0xff]
                %637 = vst [vmem:[%s149 + $0x798] sm:$0xff] %v636
                %v638 = vld [vmem:[%s148 + $0xf20] sm:$0xff]
                %639 = vst [vmem:[%s149 + $0x7a0] sm:$0xff] %v638
                %v640 = vld [vmem:[%s148 + $0xf28] sm:$0xff]
                %641 = vst [vmem:[%s149 + $0x7a8] sm:$0xff] %v640
                %v642 = vld [vmem:[%s148 + $0xf30] sm:$0xff]
                %643 = vst [vmem:[%s149 + $0x7b0] sm:$0xff] %v642
                %v644 = vld [vmem:[%s148 + $0xf38] sm:$0xff]
                %645 = vst [vmem:[%s149 + $0x7b8] sm:$0xff] %v644
                %v646 = vld [vmem:[%s148 + $0xf40] sm:$0xff]
                %647 = vst [vmem:[%s149 + $0x7c0] sm:$0xff] %v646
                %v648 = vld [vmem:[%s148 + $0xf48] sm:$0xff]
                %649 = vst [vmem:[%s149 + $0x7c8] sm:$0xff] %v648
                %v650 = vld [vmem:[%s148 + $0xf50] sm:$0xff]
                %651 = vst [vmem:[%s149 + $0x7d0] sm:$0xff] %v650
                %v652 = vld [vmem:[%s148 + $0xf58] sm:$0xff]
                %653 = vst [vmem:[%s149 + $0x7d8] sm:$0xff] %v652
                %v654 = vld [vmem:[%s148 + $0xf60] sm:$0xff]
                %655 = vst [vmem:[%s149 + $0x7e0] sm:$0xff] %v654
                %v656 = vld [vmem:[%s148 + $0xf68] sm:$0xff]
                %657 = vst [vmem:[%s149 + $0x7e8] sm:$0xff] %v656
                %v658 = vld [vmem:[%s148 + $0xf70] sm:$0xff]
                %659 = vst [vmem:[%s149 + $0x7f0] sm:$0xff] %v658
                %v660 = vld [vmem:[%s148 + $0xf78] sm:$0xff]
                %661 = vst [vmem:[%s149 + $0x7f8] sm:$0xff] %v660
                %v662 = vld [vmem:[%s148 + $0x1000] sm:$0xff]
                %663 = vst [vmem:[%s149 + $0x800] sm:$0xff] %v662
                %v664 = vld [vmem:[%s148 + $0x1008] sm:$0xff]
                %665 = vst [vmem:[%s149 + $0x808] sm:$0xff] %v664
                %v666 = vld [vmem:[%s148 + $0x1010] sm:$0xff]
                %667 = vst [vmem:[%s149 + $0x810] sm:$0xff] %v666
                %v668 = vld [vmem:[%s148 + $0x1018] sm:$0xff]
                %669 = vst [vmem:[%s149 + $0x818] sm:$0xff] %v668
                %v670 = vld [vmem:[%s148 + $0x1020] sm:$0xff]
                %671 = vst [vmem:[%s149 + $0x820] sm:$0xff] %v670
                %v672 = vld [vmem:[%s148 + $0x1028] sm:$0xff]
                %673 = vst [vmem:[%s149 + $0x828] sm:$0xff] %v672
                %v674 = vld [vmem:[%s148 + $0x1030] sm:$0xff]
                %675 = vst [vmem:[%s149 + $0x830] sm:$0xff] %v674
                %v676 = vld [vmem:[%s148 + $0x1038] sm:$0xff]
                %677 = vst [vmem:[%s149 + $0x838] sm:$0xff] %v676
                %v678 = vld [vmem:[%s148 + $0x1040] sm:$0xff]
                %679 = vst [vmem:[%s149 + $0x840] sm:$0xff] %v678
                %v680 = vld [vmem:[%s148 + $0x1048] sm:$0xff]
                %681 = vst [vmem:[%s149 + $0x848] sm:$0xff] %v680
                %v682 = vld [vmem:[%s148 + $0x1050] sm:$0xff]
                %683 = vst [vmem:[%s149 + $0x850] sm:$0xff] %v682
                %v684 = vld [vmem:[%s148 + $0x1058] sm:$0xff]
                %685 = vst [vmem:[%s149 + $0x858] sm:$0xff] %v684
                %v686 = vld [vmem:[%s148 + $0x1060] sm:$0xff]
                %687 = vst [vmem:[%s149 + $0x860] sm:$0xff] %v686
                %v688 = vld [vmem:[%s148 + $0x1068] sm:$0xff]
                %689 = vst [vmem:[%s149 + $0x868] sm:$0xff] %v688
                %v690 = vld [vmem:[%s148 + $0x1070] sm:$0xff]
                %691 = vst [vmem:[%s149 + $0x870] sm:$0xff] %v690
                %v692 = vld [vmem:[%s148 + $0x1078] sm:$0xff]
                %693 = vst [vmem:[%s149 + $0x878] sm:$0xff] %v692
                %v694 = vld [vmem:[%s148 + $0x1100] sm:$0xff]
                %695 = vst [vmem:[%s149 + $0x880] sm:$0xff] %v694
                %v696 = vld [vmem:[%s148 + $0x1108] sm:$0xff]
                %697 = vst [vmem:[%s149 + $0x888] sm:$0xff] %v696
                %v698 = vld [vmem:[%s148 + $0x1110] sm:$0xff]
                %699 = vst [vmem:[%s149 + $0x890] sm:$0xff] %v698
                %v700 = vld [vmem:[%s148 + $0x1118] sm:$0xff]
                %701 = vst [vmem:[%s149 + $0x898] sm:$0xff] %v700
                %v702 = vld [vmem:[%s148 + $0x1120] sm:$0xff]
                %703 = vst [vmem:[%s149 + $0x8a0] sm:$0xff] %v702
                %v704 = vld [vmem:[%s148 + $0x1128] sm:$0xff]
                %705 = vst [vmem:[%s149 + $0x8a8] sm:$0xff] %v704
                %v706 = vld [vmem:[%s148 + $0x1130] sm:$0xff]
                %707 = vst [vmem:[%s149 + $0x8b0] sm:$0xff] %v706
                %v708 = vld [vmem:[%s148 + $0x1138] sm:$0xff]
                %709 = vst [vmem:[%s149 + $0x8b8] sm:$0xff] %v708
                %v710 = vld [vmem:[%s148 + $0x1140] sm:$0xff]
                %711 = vst [vmem:[%s149 + $0x8c0] sm:$0xff] %v710
                %v712 = vld [vmem:[%s148 + $0x1148] sm:$0xff]
                %713 = vst [vmem:[%s149 + $0x8c8] sm:$0xff] %v712
                %v714 = vld [vmem:[%s148 + $0x1150] sm:$0xff]
                %715 = vst [vmem:[%s149 + $0x8d0] sm:$0xff] %v714
                %v716 = vld [vmem:[%s148 + $0x1158] sm:$0xff]
                %717 = vst [vmem:[%s149 + $0x8d8] sm:$0xff] %v716
                %v718 = vld [vmem:[%s148 + $0x1160] sm:$0xff]
                %719 = vst [vmem:[%s149 + $0x8e0] sm:$0xff] %v718
                %v720 = vld [vmem:[%s148 + $0x1168] sm:$0xff]
                %721 = vst [vmem:[%s149 + $0x8e8] sm:$0xff] %v720
                %v722 = vld [vmem:[%s148 + $0x1170] sm:$0xff]
                %723 = vst [vmem:[%s149 + $0x8f0] sm:$0xff] %v722
                %v724 = vld [vmem:[%s148 + $0x1178] sm:$0xff]
                %725 = vst [vmem:[%s149 + $0x8f8] sm:$0xff] %v724
                %v726 = vld [vmem:[%s148 + $0x1200] sm:$0xff]
                %727 = vst [vmem:[%s149 + $0x900] sm:$0xff] %v726
                %v728 = vld [vmem:[%s148 + $0x1208] sm:$0xff]
                %729 = vst [vmem:[%s149 + $0x908] sm:$0xff] %v728
                %v730 = vld [vmem:[%s148 + $0x1210] sm:$0xff]
                %731 = vst [vmem:[%s149 + $0x910] sm:$0xff] %v730
                %v732 = vld [vmem:[%s148 + $0x1218] sm:$0xff]
                %733 = vst [vmem:[%s149 + $0x918] sm:$0xff] %v732
                %v734 = vld [vmem:[%s148 + $0x1220] sm:$0xff]
                %735 = vst [vmem:[%s149 + $0x920] sm:$0xff] %v734
                %v736 = vld [vmem:[%s148 + $0x1228] sm:$0xff]
                %737 = vst [vmem:[%s149 + $0x928] sm:$0xff] %v736
                %v738 = vld [vmem:[%s148 + $0x1230] sm:$0xff]
                %739 = vst [vmem:[%s149 + $0x930] sm:$0xff] %v738
                %v740 = vld [vmem:[%s148 + $0x1238] sm:$0xff]
                %741 = vst [vmem:[%s149 + $0x938] sm:$0xff] %v740
                %v742 = vld [vmem:[%s148 + $0x1240] sm:$0xff]
                %743 = vst [vmem:[%s149 + $0x940] sm:$0xff] %v742
                %v744 = vld [vmem:[%s148 + $0x1248] sm:$0xff]
                %745 = vst [vmem:[%s149 + $0x948] sm:$0xff] %v744
                %v746 = vld [vmem:[%s148 + $0x1250] sm:$0xff]
                %747 = vst [vmem:[%s149 + $0x950] sm:$0xff] %v746
                %v748 = vld [vmem:[%s148 + $0x1258] sm:$0xff]
                %749 = vst [vmem:[%s149 + $0x958] sm:$0xff] %v748
                %v750 = vld [vmem:[%s148 + $0x1260] sm:$0xff]
                %751 = vst [vmem:[%s149 + $0x960] sm:$0xff] %v750
                %v752 = vld [vmem:[%s148 + $0x1268] sm:$0xff]
                %753 = vst [vmem:[%s149 + $0x968] sm:$0xff] %v752
                %v754 = vld [vmem:[%s148 + $0x1270] sm:$0xff]
                %755 = vst [vmem:[%s149 + $0x970] sm:$0xff] %v754
                %v756 = vld [vmem:[%s148 + $0x1278] sm:$0xff]
                %757 = vst [vmem:[%s149 + $0x978] sm:$0xff] %v756
              $region41: #{patch_discriminate_2.6} parent=35 // loop_footer
                %s147 = sadd.s32 1, %s143
              $region42: #{patch_discriminate_2.6} parent=35 // loop_footer_branch
                %142 = sbr.rel target = $region38
              $region43: #{patch_discriminate_2.6} parent=35 // loop_exit
                _
            $region36: #{patch_discriminate_2.6} parent=31 // pred_fallthru
              _
            // Predicated region
            $region44: #{patch_discriminate_2.6} parent=31 // pred_check
              _
            $region45: #{patch_discriminate_2.6} parent=31 // pred_check_branch
              %759 = sbr.rel target = $region47
            $region46: #{patch_discriminate_2.6} parent=31 // pred_region
              _
            $region47: #{patch_discriminate_2.6} parent=31 // pred_fallthru
              _
          $region32: #{patch_discriminate_2.6} parent=27 // pred_fallthru
            _
          %760 = vnop
        $region28: #{patch_discriminate_2.6} parent=23 // pred_fallthru
          _
      $region24: #{patch_discriminate_2.6} parent=5 // pred_fallthru
        _
      %p761 = scmp.le.s32.totalorder 1, %s9
      %p762 = scmp.lt.s32.totalorder %s9, 3
      %p763 = pnand %p761, %p762
      %p764 = pneg %p763
      // Predicated region
      $region48: #{patch_discriminate_2.6} parent=5 // pred_check
        _
      $region49: #{patch_discriminate_2.6} parent=5 // pred_check_branch
        %766 = sbr.rel (%p763) target = $region51
      $region50: #{patch_discriminate_2.6} parent=5 // pred_region
        %s767 = ssub.s32 %s9, 1
        %s768 = sand.u32 %s43, 1
        %s769 = sand.u32 %s43, 1
        %s770 = smul.addr %s769, 2432
        %s771 = scalar_lea.vmem [#allocation2], %s770
        // Predicated region
        $region52: #{patch_discriminate_2.6} parent=50 // pred_check
          %p772 = pneg %p56
        $region53: #{patch_discriminate_2.6} parent=50 // pred_check_branch
          %774 = sbr.rel (%p772) target = $region55
        $region54: #{patch_discriminate_2.6} parent=50 // pred_region
          _
        $region55: #{patch_discriminate_2.6} parent=50 // pred_fallthru
          _
        %p775 = pneg %p30
        %p776 = pneg %p27
        %s777 = sand.u32 %s43, 1
        %s778 = sand.u32 %s43, 1
        %s779 = smul.addr %s778, 2432
        %s780 = scalar_lea.vmem [#allocation2], %s779
        %p781 = pneg %p56
        %p782 = pneg %p53
        %p783 = pneg %p77
        %p784 = pneg %p74
        %p785 = pneg %p103
        %p786 = pneg %p100
        %s787 = smul.u32 32, %s14
        %p788 = scmp.lt.s32.totalorder %s787, 63
        %s789 = scalar_select %p788, %s787, 63
        %s790 = smul.addr %s789, 4
        %s791 = scalar_lea.vmem %s3, %s790
        %s792 = smul.u32 32, %s14
        %s793 = smul.u32 32, %s14
        %p794 = scmp.lt.s32.totalorder %s793, 63
        %s795 = scalar_select %p794, %s793, 63
        %s796 = smul.addr %s795, 4
        %s797 = scalar_lea.vmem %s3, %s796
        %s798 = smul.u32 32, %s14
        %v800 = vld [vmem:[%s0] sm:$0xf]
        %v801 = vld [vmem:[%s771] sm:$0xff]
        %v802 = vld [vmem:[%s771 + $0x8] sm:$0xff]
        %v803 = vld [vmem:[%s771 + $0x10] sm:$0xff]
        %v804 = vld [vmem:[%s771 + $0x18] sm:$0xff]
        %v805 = vld [vmem:[%s771 + $0x20] sm:$0xff]
        %v806 = vld [vmem:[%s771 + $0x28] sm:$0xff]
        %v807 = vld [vmem:[%s771 + $0x30] sm:$0xff]
        %v808 = vld [vmem:[%s771 + $0x38] sm:$0xff]
        %v809 = vld [vmem:[%s771 + $0x40] sm:$0xff]
        %v810 = vld [vmem:[%s771 + $0x48] sm:$0xff]
        %v811 = vld [vmem:[%s771 + $0x50] sm:$0xff]
        %v812 = vld [vmem:[%s771 + $0x58] sm:$0xff]
        %v813 = vld [vmem:[%s771 + $0x60] sm:$0xff]
        %v814 = vld [vmem:[%s771 + $0x68] sm:$0xff]
        %v815 = vld [vmem:[%s771 + $0x70] sm:$0xff]
        %v816 = vld [vmem:[%s771 + $0x78] sm:$0xff]
        %v817 = vld [vmem:[%s771 + $0x80] sm:$0xff]
        %v818 = vld [vmem:[%s771 + $0x88] sm:$0xff]
        %v819 = vld [vmem:[%s771 + $0x90] sm:$0xff]
        %v820 = vld [vmem:[%s771 + $0x98] sm:$0xff]
        %v821 = vld [vmem:[%s771 + $0xa0] sm:$0xff]
        %v822 = vld [vmem:[%s771 + $0xa8] sm:$0xff]
        %v823 = vld [vmem:[%s771 + $0xb0] sm:$0xff]
        %v824 = vld [vmem:[%s771 + $0xb8] sm:$0xff]
        %v825 = vld [vmem:[%s771 + $0xc0] sm:$0xff]
        %v826 = vld [vmem:[%s771 + $0xc8] sm:$0xff]
        %v827 = vld [vmem:[%s771 + $0xd0] sm:$0xff]
        %v828 = vld [vmem:[%s771 + $0xd8] sm:$0xff]
        %v829 = vld [vmem:[%s771 + $0xe0] sm:$0xff]
        %v830 = vld [vmem:[%s771 + $0xe8] sm:$0xff]
        %v831 = vld [vmem:[%s771 + $0xf0] sm:$0xff]
        %v832 = vld [vmem:[%s771 + $0xf8] sm:$0xff]
        %v833 = vld [vmem:[%s771 + $0x100] sm:$0xff]
        %v834 = vld [vmem:[%s771 + $0x108] sm:$0xff]
        %v835 = vld [vmem:[%s771 + $0x110] sm:$0xff]
        %v836 = vld [vmem:[%s771 + $0x118] sm:$0xff]
        %v837 = vld [vmem:[%s771 + $0x120] sm:$0xff]
        %v838 = vld [vmem:[%s771 + $0x128] sm:$0xff]
        %v839 = vld [vmem:[%s771 + $0x130] sm:$0xff]
        %v840 = vld [vmem:[%s771 + $0x138] sm:$0xff]
        %v841 = vld [vmem:[%s771 + $0x140] sm:$0xff]
        %v842 = vld [vmem:[%s771 + $0x148] sm:$0xff]
        %v843 = vld [vmem:[%s771 + $0x150] sm:$0xff]
        %v844 = vld [vmem:[%s771 + $0x158] sm:$0xff]
        %v845 = vld [vmem:[%s771 + $0x160] sm:$0xff]
        %v846 = vld [vmem:[%s771 + $0x168] sm:$0xff]
        %v847 = vld [vmem:[%s771 + $0x170] sm:$0xff]
        %v848 = vld [vmem:[%s771 + $0x178] sm:$0xff]
        %v849 = vld [vmem:[%s771 + $0x180] sm:$0xff]
        %v850 = vld [vmem:[%s771 + $0x188] sm:$0xff]
        %v851 = vld [vmem:[%s771 + $0x190] sm:$0xff]
        %v852 = vld [vmem:[%s771 + $0x198] sm:$0xff]
        %v853 = vld [vmem:[%s771 + $0x1a0] sm:$0xff]
        %v854 = vld [vmem:[%s771 + $0x1a8] sm:$0xff]
        %v855 = vld [vmem:[%s771 + $0x1b0] sm:$0xff]
        %v856 = vld [vmem:[%s771 + $0x1b8] sm:$0xff]
        %v857 = vld [vmem:[%s771 + $0x1c0] sm:$0xff]
        %v858 = vld [vmem:[%s771 + $0x1c8] sm:$0xff]
        %v859 = vld [vmem:[%s771 + $0x1d0] sm:$0xff]
        %v860 = vld [vmem:[%s771 + $0x1d8] sm:$0xff]
        %v861 = vld [vmem:[%s771 + $0x1e0] sm:$0xff]
        %v862 = vld [vmem:[%s771 + $0x1e8] sm:$0xff]
        %v863 = vld [vmem:[%s771 + $0x1f0] sm:$0xff]
        %v864 = vld [vmem:[%s771 + $0x1f8] sm:$0xff]
        %v865 = vld [vmem:[%s771 + $0x200] sm:$0xff]
        %v866 = vld [vmem:[%s771 + $0x208] sm:$0xff]
        %v867 = vld [vmem:[%s771 + $0x210] sm:$0xff]
        %v868 = vld [vmem:[%s771 + $0x218] sm:$0xff]
        %v869 = vld [vmem:[%s771 + $0x220] sm:$0xff]
        %v870 = vld [vmem:[%s771 + $0x228] sm:$0xff]
        %v871 = vld [vmem:[%s771 + $0x230] sm:$0xff]
        %v872 = vld [vmem:[%s771 + $0x238] sm:$0xff]
        %v873 = vld [vmem:[%s771 + $0x240] sm:$0xff]
        %v874 = vld [vmem:[%s771 + $0x248] sm:$0xff]
        %v875 = vld [vmem:[%s771 + $0x250] sm:$0xff]
        %v876 = vld [vmem:[%s771 + $0x258] sm:$0xff]
        %v877 = vld [vmem:[%s771 + $0x260] sm:$0xff]
        %v878 = vld [vmem:[%s771 + $0x268] sm:$0xff]
        %v879 = vld [vmem:[%s771 + $0x270] sm:$0xff]
        %v880 = vld [vmem:[%s771 + $0x278] sm:$0xff]
        %v881 = vld [vmem:[%s771 + $0x280] sm:$0xff]
        %v882 = vld [vmem:[%s771 + $0x288] sm:$0xff]
        %v883 = vld [vmem:[%s771 + $0x290] sm:$0xff]
        %v884 = vld [vmem:[%s771 + $0x298] sm:$0xff]
        %v885 = vld [vmem:[%s771 + $0x2a0] sm:$0xff]
        %v886 = vld [vmem:[%s771 + $0x2a8] sm:$0xff]
        %v887 = vld [vmem:[%s771 + $0x2b0] sm:$0xff]
        %v888 = vld [vmem:[%s771 + $0x2b8] sm:$0xff]
        %v889 = vld [vmem:[%s771 + $0x2c0] sm:$0xff]
        %v890 = vld [vmem:[%s771 + $0x2c8] sm:$0xff]
        %v891 = vld [vmem:[%s771 + $0x2d0] sm:$0xff]
        %v892 = vld [vmem:[%s771 + $0x2d8] sm:$0xff]
        %v893 = vld [vmem:[%s771 + $0x2e0] sm:$0xff]
        %v894 = vld [vmem:[%s771 + $0x2e8] sm:$0xff]
        %v895 = vld [vmem:[%s771 + $0x2f0] sm:$0xff]
        %v896 = vld [vmem:[%s771 + $0x2f8] sm:$0xff]
        %v897 = vld [vmem:[%s771 + $0x300] sm:$0xff]
        %v898 = vld [vmem:[%s771 + $0x308] sm:$0xff]
        %v899 = vld [vmem:[%s771 + $0x310] sm:$0xff]
        %v900 = vld [vmem:[%s771 + $0x318] sm:$0xff]
        %v901 = vld [vmem:[%s771 + $0x320] sm:$0xff]
        %v902 = vld [vmem:[%s771 + $0x328] sm:$0xff]
        %v903 = vld [vmem:[%s771 + $0x330] sm:$0xff]
        %v904 = vld [vmem:[%s771 + $0x338] sm:$0xff]
        %v905 = vld [vmem:[%s771 + $0x340] sm:$0xff]
        %v906 = vld [vmem:[%s771 + $0x348] sm:$0xff]
        %v907 = vld [vmem:[%s771 + $0x350] sm:$0xff]
        %v908 = vld [vmem:[%s771 + $0x358] sm:$0xff]
        %v909 = vld [vmem:[%s771 + $0x360] sm:$0xff]
        %v910 = vld [vmem:[%s771 + $0x368] sm:$0xff]
        %v911 = vld [vmem:[%s771 + $0x370] sm:$0xff]
        %v912 = vld [vmem:[%s771 + $0x378] sm:$0xff]
        %v913 = vld [vmem:[%s771 + $0x380] sm:$0xff]
        %v914 = vld [vmem:[%s771 + $0x388] sm:$0xff]
        %v915 = vld [vmem:[%s771 + $0x390] sm:$0xff]
        %v916 = vld [vmem:[%s771 + $0x398] sm:$0xff]
        %v917 = vld [vmem:[%s771 + $0x3a0] sm:$0xff]
        %v918 = vld [vmem:[%s771 + $0x3a8] sm:$0xff]
        %v919 = vld [vmem:[%s771 + $0x3b0] sm:$0xff]
        %v920 = vld [vmem:[%s771 + $0x3b8] sm:$0xff]
        %v921 = vld [vmem:[%s771 + $0x3c0] sm:$0xff]
        %v922 = vld [vmem:[%s771 + $0x3c8] sm:$0xff]
        %v923 = vld [vmem:[%s771 + $0x3d0] sm:$0xff]
        %v924 = vld [vmem:[%s771 + $0x3d8] sm:$0xff]
        %v925 = vld [vmem:[%s771 + $0x3e0] sm:$0xff]
        %v926 = vld [vmem:[%s771 + $0x3e8] sm:$0xff]
        %v927 = vld [vmem:[%s771 + $0x3f0] sm:$0xff]
        %v928 = vld [vmem:[%s771 + $0x3f8] sm:$0xff]
        %v929 = vld [vmem:[%s771 + $0x400] sm:$0xff]
        %v930 = vld [vmem:[%s771 + $0x408] sm:$0xff]
        %v931 = vld [vmem:[%s771 + $0x410] sm:$0xff]
        %v932 = vld [vmem:[%s771 + $0x418] sm:$0xff]
        %v933 = vld [vmem:[%s771 + $0x420] sm:$0xff]
        %v934 = vld [vmem:[%s771 + $0x428] sm:$0xff]
        %v935 = vld [vmem:[%s771 + $0x430] sm:$0xff]
        %v936 = vld [vmem:[%s771 + $0x438] sm:$0xff]
        %v937 = vld [vmem:[%s771 + $0x440] sm:$0xff]
        %v938 = vld [vmem:[%s771 + $0x448] sm:$0xff]
        %v939 = vld [vmem:[%s771 + $0x450] sm:$0xff]
        %v940 = vld [vmem:[%s771 + $0x458] sm:$0xff]
        %v941 = vld [vmem:[%s771 + $0x460] sm:$0xff]
        %v942 = vld [vmem:[%s771 + $0x468] sm:$0xff]
        %v943 = vld [vmem:[%s771 + $0x470] sm:$0xff]
        %v944 = vld [vmem:[%s771 + $0x478] sm:$0xff]
        %v945 = vld [vmem:[%s771 + $0x480] sm:$0xff]
        %v946 = vld [vmem:[%s771 + $0x488] sm:$0xff]
        %v947 = vld [vmem:[%s771 + $0x490] sm:$0xff]
        %v948 = vld [vmem:[%s771 + $0x498] sm:$0xff]
        %v949 = vld [vmem:[%s771 + $0x4a0] sm:$0xff]
        %v950 = vld [vmem:[%s771 + $0x4a8] sm:$0xff]
        %v951 = vld [vmem:[%s771 + $0x4b0] sm:$0xff]
        %v952 = vld [vmem:[%s771 + $0x4b8] sm:$0xff]
        %v953 = vld [vmem:[%s771 + $0x4c0] sm:$0xff]
        %v954 = vld [vmem:[%s771 + $0x4c8] sm:$0xff]
        %v955 = vld [vmem:[%s771 + $0x4d0] sm:$0xff]
        %v956 = vld [vmem:[%s771 + $0x4d8] sm:$0xff]
        %v957 = vld [vmem:[%s771 + $0x4e0] sm:$0xff]
        %v958 = vld [vmem:[%s771 + $0x4e8] sm:$0xff]
        %v959 = vld [vmem:[%s771 + $0x4f0] sm:$0xff]
        %v960 = vld [vmem:[%s771 + $0x4f8] sm:$0xff]
        %v961 = vld [vmem:[%s771 + $0x500] sm:$0xff]
        %v962 = vld [vmem:[%s771 + $0x508] sm:$0xff]
        %v963 = vld [vmem:[%s771 + $0x510] sm:$0xff]
        %v964 = vld [vmem:[%s771 + $0x518] sm:$0xff]
        %v965 = vld [vmem:[%s771 + $0x520] sm:$0xff]
        %v966 = vld [vmem:[%s771 + $0x528] sm:$0xff]
        %v967 = vld [vmem:[%s771 + $0x530] sm:$0xff]
        %v968 = vld [vmem:[%s771 + $0x538] sm:$0xff]
        %v969 = vld [vmem:[%s771 + $0x540] sm:$0xff]
        %v970 = vld [vmem:[%s771 + $0x548] sm:$0xff]
        %v971 = vld [vmem:[%s771 + $0x550] sm:$0xff]
        %v972 = vld [vmem:[%s771 + $0x558] sm:$0xff]
        %v973 = vld [vmem:[%s771 + $0x560] sm:$0xff]
        %v974 = vld [vmem:[%s771 + $0x568] sm:$0xff]
        %v975 = vld [vmem:[%s771 + $0x570] sm:$0xff]
        %v976 = vld [vmem:[%s771 + $0x578] sm:$0xff]
        %v977 = vld [vmem:[%s771 + $0x580] sm:$0xff]
        %v978 = vld [vmem:[%s771 + $0x588] sm:$0xff]
        %v979 = vld [vmem:[%s771 + $0x590] sm:$0xff]
        %v980 = vld [vmem:[%s771 + $0x598] sm:$0xff]
        %v981 = vld [vmem:[%s771 + $0x5a0] sm:$0xff]
        %v982 = vld [vmem:[%s771 + $0x5a8] sm:$0xff]
        %v983 = vld [vmem:[%s771 + $0x5b0] sm:$0xff]
        %v984 = vld [vmem:[%s771 + $0x5b8] sm:$0xff]
        %v985 = vld [vmem:[%s771 + $0x5c0] sm:$0xff]
        %v986 = vld [vmem:[%s771 + $0x5c8] sm:$0xff]
        %v987 = vld [vmem:[%s771 + $0x5d0] sm:$0xff]
        %v988 = vld [vmem:[%s771 + $0x5d8] sm:$0xff]
        %v989 = vld [vmem:[%s771 + $0x5e0] sm:$0xff]
        %v990 = vld [vmem:[%s771 + $0x5e8] sm:$0xff]
        %v991 = vld [vmem:[%s771 + $0x5f0] sm:$0xff]
        %v992 = vld [vmem:[%s771 + $0x5f8] sm:$0xff]
        %v993 = vld [vmem:[%s771 + $0x600] sm:$0xff]
        %v994 = vld [vmem:[%s771 + $0x608] sm:$0xff]
        %v995 = vld [vmem:[%s771 + $0x610] sm:$0xff]
        %v996 = vld [vmem:[%s771 + $0x618] sm:$0xff]
        %v997 = vld [vmem:[%s771 + $0x620] sm:$0xff]
        %v998 = vld [vmem:[%s771 + $0x628] sm:$0xff]
        %v999 = vld [vmem:[%s771 + $0x630] sm:$0xff]
        %v1000 = vld [vmem:[%s771 + $0x638] sm:$0xff]
        %v1001 = vld [vmem:[%s771 + $0x640] sm:$0xff]
        %v1002 = vld [vmem:[%s771 + $0x648] sm:$0xff]
        %v1003 = vld [vmem:[%s771 + $0x650] sm:$0xff]
        %v1004 = vld [vmem:[%s771 + $0x658] sm:$0xff]
        %v1005 = vld [vmem:[%s771 + $0x660] sm:$0xff]
        %v1006 = vld [vmem:[%s771 + $0x668] sm:$0xff]
        %v1007 = vld [vmem:[%s771 + $0x670] sm:$0xff]
        %v1008 = vld [vmem:[%s771 + $0x678] sm:$0xff]
        %v1009 = vld [vmem:[%s771 + $0x680] sm:$0xff]
        %v1010 = vld [vmem:[%s771 + $0x688] sm:$0xff]
        %v1011 = vld [vmem:[%s771 + $0x690] sm:$0xff]
        %v1012 = vld [vmem:[%s771 + $0x698] sm:$0xff]
        %v1013 = vld [vmem:[%s771 + $0x6a0] sm:$0xff]
        %v1014 = vld [vmem:[%s771 + $0x6a8] sm:$0xff]
        %v1015 = vld [vmem:[%s771 + $0x6b0] sm:$0xff]
        %v1016 = vld [vmem:[%s771 + $0x6b8] sm:$0xff]
        %v1017 = vld [vmem:[%s771 + $0x6c0] sm:$0xff]
        %v1018 = vld [vmem:[%s771 + $0x6c8] sm:$0xff]
        %v1019 = vld [vmem:[%s771 + $0x6d0] sm:$0xff]
        %v1020 = vld [vmem:[%s771 + $0x6d8] sm:$0xff]
        %v1021 = vld [vmem:[%s771 + $0x6e0] sm:$0xff]
        %v1022 = vld [vmem:[%s771 + $0x6e8] sm:$0xff]
        %v1023 = vld [vmem:[%s771 + $0x6f0] sm:$0xff]
        %v1024 = vld [vmem:[%s771 + $0x6f8] sm:$0xff]
        %v1025 = vld [vmem:[%s771 + $0x700] sm:$0xff]
        %v1026 = vld [vmem:[%s771 + $0x708] sm:$0xff]
        %v1027 = vld [vmem:[%s771 + $0x710] sm:$0xff]
        %v1028 = vld [vmem:[%s771 + $0x718] sm:$0xff]
        %v1029 = vld [vmem:[%s771 + $0x720] sm:$0xff]
        %v1030 = vld [vmem:[%s771 + $0x728] sm:$0xff]
        %v1031 = vld [vmem:[%s771 + $0x730] sm:$0xff]
        %v1032 = vld [vmem:[%s771 + $0x738] sm:$0xff]
        %v1033 = vld [vmem:[%s771 + $0x740] sm:$0xff]
        %v1034 = vld [vmem:[%s771 + $0x748] sm:$0xff]
        %v1035 = vld [vmem:[%s771 + $0x750] sm:$0xff]
        %v1036 = vld [vmem:[%s771 + $0x758] sm:$0xff]
        %v1037 = vld [vmem:[%s771 + $0x760] sm:$0xff]
        %v1038 = vld [vmem:[%s771 + $0x768] sm:$0xff]
        %v1039 = vld [vmem:[%s771 + $0x770] sm:$0xff]
        %v1040 = vld [vmem:[%s771 + $0x778] sm:$0xff]
        %v1041 = vld [vmem:[%s771 + $0x780] sm:$0xff]
        %v1042 = vld [vmem:[%s771 + $0x788] sm:$0xff]
        %v1043 = vld [vmem:[%s771 + $0x790] sm:$0xff]
        %v1044 = vld [vmem:[%s771 + $0x798] sm:$0xff]
        %v1045 = vld [vmem:[%s771 + $0x7a0] sm:$0xff]
        %v1046 = vld [vmem:[%s771 + $0x7a8] sm:$0xff]
        %v1047 = vld [vmem:[%s771 + $0x7b0] sm:$0xff]
        %v1048 = vld [vmem:[%s771 + $0x7b8] sm:$0xff]
        %v1049 = vld [vmem:[%s771 + $0x7c0] sm:$0xff]
        %v1050 = vld [vmem:[%s771 + $0x7c8] sm:$0xff]
        %v1051 = vld [vmem:[%s771 + $0x7d0] sm:$0xff]
        %v1052 = vld [vmem:[%s771 + $0x7d8] sm:$0xff]
        %v1053 = vld [vmem:[%s771 + $0x7e0] sm:$0xff]
        %v1054 = vld [vmem:[%s771 + $0x7e8] sm:$0xff]
        %v1055 = vld [vmem:[%s771 + $0x7f0] sm:$0xff]
        %v1056 = vld [vmem:[%s771 + $0x7f8] sm:$0xff]
        %v1057 = vld [vmem:[%s771 + $0x800] sm:$0xff]
        %v1058 = vld [vmem:[%s771 + $0x808] sm:$0xff]
        %v1059 = vld [vmem:[%s771 + $0x810] sm:$0xff]
        %v1060 = vld [vmem:[%s771 + $0x818] sm:$0xff]
        %v1061 = vld [vmem:[%s771 + $0x820] sm:$0xff]
        %v1062 = vld [vmem:[%s771 + $0x828] sm:$0xff]
        %v1063 = vld [vmem:[%s771 + $0x830] sm:$0xff]
        %v1064 = vld [vmem:[%s771 + $0x838] sm:$0xff]
        %v1065 = vld [vmem:[%s771 + $0x840] sm:$0xff]
        %v1066 = vld [vmem:[%s771 + $0x848] sm:$0xff]
        %v1067 = vld [vmem:[%s771 + $0x850] sm:$0xff]
        %v1068 = vld [vmem:[%s771 + $0x858] sm:$0xff]
        %v1069 = vld [vmem:[%s771 + $0x860] sm:$0xff]
        %v1070 = vld [vmem:[%s771 + $0x868] sm:$0xff]
        %v1071 = vld [vmem:[%s771 + $0x870] sm:$0xff]
        %v1072 = vld [vmem:[%s771 + $0x878] sm:$0xff]
        %v1073 = vld [vmem:[%s771 + $0x880] sm:$0xff]
        %v1074 = vld [vmem:[%s771 + $0x888] sm:$0xff]
        %v1075 = vld [vmem:[%s771 + $0x890] sm:$0xff]
        %v1076 = vld [vmem:[%s771 + $0x898] sm:$0xff]
        %v1077 = vld [vmem:[%s771 + $0x8a0] sm:$0xff]
        %v1078 = vld [vmem:[%s771 + $0x8a8] sm:$0xff]
        %v1079 = vld [vmem:[%s771 + $0x8b0] sm:$0xff]
        %v1080 = vld [vmem:[%s771 + $0x8b8] sm:$0xff]
        %v1081 = vld [vmem:[%s771 + $0x8c0] sm:$0xff]
        %v1082 = vld [vmem:[%s771 + $0x8c8] sm:$0xff]
        %v1083 = vld [vmem:[%s771 + $0x8d0] sm:$0xff]
        %v1084 = vld [vmem:[%s771 + $0x8d8] sm:$0xff]
        %v1085 = vld [vmem:[%s771 + $0x8e0] sm:$0xff]
        %v1086 = vld [vmem:[%s771 + $0x8e8] sm:$0xff]
        %v1087 = vld [vmem:[%s771 + $0x8f0] sm:$0xff]
        %v1088 = vld [vmem:[%s771 + $0x8f8] sm:$0xff]
        %v1089 = vld [vmem:[%s771 + $0x900] sm:$0x33]
        %v1090 = vld [vmem:[%s771 + $0x908] sm:$0x33]
        %v1091 = vld [vmem:[%s771 + $0x910] sm:$0x33]
        %v1092 = vld [vmem:[%s771 + $0x918] sm:$0x33]
        %v1093 = vld [vmem:[%s771 + $0x920] sm:$0x33]
        %v1094 = vld [vmem:[%s771 + $0x928] sm:$0x33]
        %v1095 = vld [vmem:[%s771 + $0x930] sm:$0x33]
        %v1096 = vld [vmem:[%s771 + $0x938] sm:$0x33]
        %v1097 = vld [vmem:[%s771 + $0x940] sm:$0x33]
        %v1098 = vld [vmem:[%s771 + $0x948] sm:$0x33]
        %v1099 = vld [vmem:[%s771 + $0x950] sm:$0x33]
        %v1100 = vld [vmem:[%s771 + $0x958] sm:$0x33]
        %v1101 = vld [vmem:[%s771 + $0x960] sm:$0x33]
        %v1102 = vld [vmem:[%s771 + $0x968] sm:$0x33]
        %v1103 = vld [vmem:[%s771 + $0x970] sm:$0x33]
        %v1104 = vld [vmem:[%s771 + $0x978] sm:$0x33]
        %v1105 = vld [vmem:[%s2] sm:$0xf]
        %1107 = vset.pattern.permute.xlu0 0
        %1108 = vperm.xlu0 %1107, %v1105
        %v1109 = vpop.permute.xlu0 %1108
        %v1113 = vunpack.c.l.s4 1983009808
        %v1114 = vunpack.c.0.s8 %v1113
        %v1115 = vlaneseq
        %v1116 = vshrl.u32 %v1115, 7
        %v1117 = vsub.s32 %v1114, %v1116
        %v1118 = vrot.slane %v800, %v1117
        %v1119 = vcombine.high %v1118, %v1118
        %v1425 = vunpack.c.l.b16 %v801
        %v1426 = vunpack.c.h.b16 %v801
        %v1427 = vunpack.c.l.b16 %v802
        %v1428 = vunpack.c.h.b16 %v802
        %v1429 = vunpack.c.l.b16 %v803
        %v1430 = vunpack.c.h.b16 %v803
        %v1431 = vunpack.c.l.b16 %v804
        %v1432 = vunpack.c.h.b16 %v804
        %v1433 = vunpack.c.l.b16 %v805
        %v1434 = vunpack.c.h.b16 %v805
        %v1435 = vunpack.c.l.b16 %v806
        %v1436 = vunpack.c.h.b16 %v806
        %v1437 = vunpack.c.l.b16 %v807
        %v1438 = vunpack.c.h.b16 %v807
        %v1439 = vunpack.c.l.b16 %v808
        %v1440 = vunpack.c.h.b16 %v808
        %v1441 = vunpack.c.l.b16 %v809
        %v1442 = vunpack.c.h.b16 %v809
        %v1443 = vunpack.c.l.b16 %v810
        %v1444 = vunpack.c.h.b16 %v810
        %v1445 = vunpack.c.l.b16 %v811
        %v1446 = vunpack.c.h.b16 %v811
        %v1447 = vunpack.c.l.b16 %v812
        %v1448 = vunpack.c.h.b16 %v812
        %v1449 = vunpack.c.l.b16 %v813
        %v1450 = vunpack.c.h.b16 %v813
        %v1451 = vunpack.c.l.b16 %v814
        %v1452 = vunpack.c.h.b16 %v814
        %v1453 = vunpack.c.l.b16 %v815
        %v1454 = vunpack.c.h.b16 %v815
        %v1455 = vunpack.c.l.b16 %v816
        %v1456 = vunpack.c.h.b16 %v816
        %v1457 = vunpack.c.l.b16 %v817
        %v1458 = vunpack.c.h.b16 %v817
        %v1459 = vunpack.c.l.b16 %v818
        %v1460 = vunpack.c.h.b16 %v818
        %v1461 = vunpack.c.l.b16 %v819
        %v1462 = vunpack.c.h.b16 %v819
        %v1463 = vunpack.c.l.b16 %v820
        %v1464 = vunpack.c.h.b16 %v820
        %v1465 = vunpack.c.l.b16 %v821
        %v1466 = vunpack.c.h.b16 %v821
        %v1467 = vunpack.c.l.b16 %v822
        %v1468 = vunpack.c.h.b16 %v822
        %v1469 = vunpack.c.l.b16 %v823
        %v1470 = vunpack.c.h.b16 %v823
        %v1471 = vunpack.c.l.b16 %v824
        %v1472 = vunpack.c.h.b16 %v824
        %v1473 = vunpack.c.l.b16 %v825
        %v1474 = vunpack.c.h.b16 %v825
        %v1475 = vunpack.c.l.b16 %v826
        %v1476 = vunpack.c.h.b16 %v826
        %v1477 = vunpack.c.l.b16 %v827
        %v1478 = vunpack.c.h.b16 %v827
        %v1479 = vunpack.c.l.b16 %v828
        %v1480 = vunpack.c.h.b16 %v828
        %v1481 = vunpack.c.l.b16 %v829
        %v1482 = vunpack.c.h.b16 %v829
        %v1483 = vunpack.c.l.b16 %v830
        %v1484 = vunpack.c.h.b16 %v830
        %v1485 = vunpack.c.l.b16 %v831
        %v1486 = vunpack.c.h.b16 %v831
        %v1487 = vunpack.c.l.b16 %v832
        %v1488 = vunpack.c.h.b16 %v832
        %v1489 = vunpack.c.l.b16 %v833
        %v1490 = vunpack.c.h.b16 %v833
        %v1491 = vunpack.c.l.b16 %v834
        %v1492 = vunpack.c.h.b16 %v834
        %v1493 = vunpack.c.l.b16 %v835
        %v1494 = vunpack.c.h.b16 %v835
        %v1495 = vunpack.c.l.b16 %v836
        %v1496 = vunpack.c.h.b16 %v836
        %v1497 = vunpack.c.l.b16 %v837
        %v1498 = vunpack.c.h.b16 %v837
        %v1499 = vunpack.c.l.b16 %v838
        %v1500 = vunpack.c.h.b16 %v838
        %v1501 = vunpack.c.l.b16 %v839
        %v1502 = vunpack.c.h.b16 %v839
        %v1503 = vunpack.c.l.b16 %v840
        %v1504 = vunpack.c.h.b16 %v840
        %v1505 = vunpack.c.l.b16 %v841
        %v1506 = vunpack.c.h.b16 %v841
        %v1507 = vunpack.c.l.b16 %v842
        %v1508 = vunpack.c.h.b16 %v842
        %v1509 = vunpack.c.l.b16 %v843
        %v1510 = vunpack.c.h.b16 %v843
        %v1511 = vunpack.c.l.b16 %v844
        %v1512 = vunpack.c.h.b16 %v844
        %v1513 = vunpack.c.l.b16 %v845
        %v1514 = vunpack.c.h.b16 %v845
        %v1515 = vunpack.c.l.b16 %v846
        %v1516 = vunpack.c.h.b16 %v846
        %v1517 = vunpack.c.l.b16 %v847
        %v1518 = vunpack.c.h.b16 %v847
        %v1519 = vunpack.c.l.b16 %v848
        %v1520 = vunpack.c.h.b16 %v848
        %v1521 = vunpack.c.l.b16 %v849
        %v1522 = vunpack.c.h.b16 %v849
        %v1523 = vunpack.c.l.b16 %v850
        %v1524 = vunpack.c.h.b16 %v850
        %v1525 = vunpack.c.l.b16 %v851
        %v1526 = vunpack.c.h.b16 %v851
        %v1527 = vunpack.c.l.b16 %v852
        %v1528 = vunpack.c.h.b16 %v852
        %v1529 = vunpack.c.l.b16 %v853
        %v1530 = vunpack.c.h.b16 %v853
        %v1531 = vunpack.c.l.b16 %v854
        %v1532 = vunpack.c.h.b16 %v854
        %v1533 = vunpack.c.l.b16 %v855
        %v1534 = vunpack.c.h.b16 %v855
        %v1535 = vunpack.c.l.b16 %v856
        %v1536 = vunpack.c.h.b16 %v856
        %v1537 = vunpack.c.l.b16 %v857
        %v1538 = vunpack.c.h.b16 %v857
        %v1539 = vunpack.c.l.b16 %v858
        %v1540 = vunpack.c.h.b16 %v858
        %v1541 = vunpack.c.l.b16 %v859
        %v1542 = vunpack.c.h.b16 %v859
        %v1543 = vunpack.c.l.b16 %v860
        %v1544 = vunpack.c.h.b16 %v860
        %v1545 = vunpack.c.l.b16 %v861
        %v1546 = vunpack.c.h.b16 %v861
        %v1547 = vunpack.c.l.b16 %v862
        %v1548 = vunpack.c.h.b16 %v862
        %v1549 = vunpack.c.l.b16 %v863
        %v1550 = vunpack.c.h.b16 %v863
        %v1551 = vunpack.c.l.b16 %v864
        %v1552 = vunpack.c.h.b16 %v864
        %v1553 = vunpack.c.l.b16 %v865
        %v1554 = vunpack.c.h.b16 %v865
        %v1555 = vunpack.c.l.b16 %v866
        %v1556 = vunpack.c.h.b16 %v866
        %v1557 = vunpack.c.l.b16 %v867
        %v1558 = vunpack.c.h.b16 %v867
        %v1559 = vunpack.c.l.b16 %v868
        %v1560 = vunpack.c.h.b16 %v868
        %v1561 = vunpack.c.l.b16 %v869
        %v1562 = vunpack.c.h.b16 %v869
        %v1563 = vunpack.c.l.b16 %v870
        %v1564 = vunpack.c.h.b16 %v870
        %v1565 = vunpack.c.l.b16 %v871
        %v1566 = vunpack.c.h.b16 %v871
        %v1567 = vunpack.c.l.b16 %v872
        %v1568 = vunpack.c.h.b16 %v872
        %v1569 = vunpack.c.l.b16 %v873
        %v1570 = vunpack.c.h.b16 %v873
        %v1571 = vunpack.c.l.b16 %v874
        %v1572 = vunpack.c.h.b16 %v874
        %v1573 = vunpack.c.l.b16 %v875
        %v1574 = vunpack.c.h.b16 %v875
        %v1575 = vunpack.c.l.b16 %v876
        %v1576 = vunpack.c.h.b16 %v876
        %v1577 = vunpack.c.l.b16 %v877
        %v1578 = vunpack.c.h.b16 %v877
        %v1579 = vunpack.c.l.b16 %v878
        %v1580 = vunpack.c.h.b16 %v878
        %v1581 = vunpack.c.l.b16 %v879
        %v1582 = vunpack.c.h.b16 %v879
        %v1583 = vunpack.c.l.b16 %v880
        %v1584 = vunpack.c.h.b16 %v880
        %v1585 = vunpack.c.l.b16 %v881
        %v1586 = vunpack.c.h.b16 %v881
        %v1587 = vunpack.c.l.b16 %v882
        %v1588 = vunpack.c.h.b16 %v882
        %v1589 = vunpack.c.l.b16 %v883
        %v1590 = vunpack.c.h.b16 %v883
        %v1591 = vunpack.c.l.b16 %v884
        %v1592 = vunpack.c.h.b16 %v884
        %v1593 = vunpack.c.l.b16 %v885
        %v1594 = vunpack.c.h.b16 %v885
        %v1595 = vunpack.c.l.b16 %v886
        %v1596 = vunpack.c.h.b16 %v886
        %v1597 = vunpack.c.l.b16 %v887
        %v1598 = vunpack.c.h.b16 %v887
        %v1599 = vunpack.c.l.b16 %v888
        %v1600 = vunpack.c.h.b16 %v888
        %v1601 = vunpack.c.l.b16 %v889
        %v1602 = vunpack.c.h.b16 %v889
        %v1603 = vunpack.c.l.b16 %v890
        %v1604 = vunpack.c.h.b16 %v890
        %v1605 = vunpack.c.l.b16 %v891
        %v1606 = vunpack.c.h.b16 %v891
        %v1607 = vunpack.c.l.b16 %v892
        %v1608 = vunpack.c.h.b16 %v892
        %v1609 = vunpack.c.l.b16 %v893
        %v1610 = vunpack.c.h.b16 %v893
        %v1611 = vunpack.c.l.b16 %v894
        %v1612 = vunpack.c.h.b16 %v894
        %v1613 = vunpack.c.l.b16 %v895
        %v1614 = vunpack.c.h.b16 %v895
        %v1615 = vunpack.c.l.b16 %v896
        %v1616 = vunpack.c.h.b16 %v896
        %v1617 = vunpack.c.l.b16 %v897
        %v1618 = vunpack.c.h.b16 %v897
        %v1619 = vunpack.c.l.b16 %v898
        %v1620 = vunpack.c.h.b16 %v898
        %v1621 = vunpack.c.l.b16 %v899
        %v1622 = vunpack.c.h.b16 %v899
        %v1623 = vunpack.c.l.b16 %v900
        %v1624 = vunpack.c.h.b16 %v900
        %v1625 = vunpack.c.l.b16 %v901
        %v1626 = vunpack.c.h.b16 %v901
        %v1627 = vunpack.c.l.b16 %v902
        %v1628 = vunpack.c.h.b16 %v902
        %v1629 = vunpack.c.l.b16 %v903
        %v1630 = vunpack.c.h.b16 %v903
        %v1631 = vunpack.c.l.b16 %v904
        %v1632 = vunpack.c.h.b16 %v904
        %v1633 = vunpack.c.l.b16 %v905
        %v1634 = vunpack.c.h.b16 %v905
        %v1635 = vunpack.c.l.b16 %v906
        %v1636 = vunpack.c.h.b16 %v906
        %v1637 = vunpack.c.l.b16 %v907
        %v1638 = vunpack.c.h.b16 %v907
        %v1639 = vunpack.c.l.b16 %v908
        %v1640 = vunpack.c.h.b16 %v908
        %v1641 = vunpack.c.l.b16 %v909
        %v1642 = vunpack.c.h.b16 %v909
        %v1643 = vunpack.c.l.b16 %v910
        %v1644 = vunpack.c.h.b16 %v910
        %v1645 = vunpack.c.l.b16 %v911
        %v1646 = vunpack.c.h.b16 %v911
        %v1647 = vunpack.c.l.b16 %v912
        %v1648 = vunpack.c.h.b16 %v912
        %v1649 = vunpack.c.l.b16 %v913
        %v1650 = vunpack.c.h.b16 %v913
        %v1651 = vunpack.c.l.b16 %v914
        %v1652 = vunpack.c.h.b16 %v914
        %v1653 = vunpack.c.l.b16 %v915
        %v1654 = vunpack.c.h.b16 %v915
        %v1655 = vunpack.c.l.b16 %v916
        %v1656 = vunpack.c.h.b16 %v916
        %v1657 = vunpack.c.l.b16 %v917
        %v1658 = vunpack.c.h.b16 %v917
        %v1659 = vunpack.c.l.b16 %v918
        %v1660 = vunpack.c.h.b16 %v918
        %v1661 = vunpack.c.l.b16 %v919
        %v1662 = vunpack.c.h.b16 %v919
        %v1663 = vunpack.c.l.b16 %v920
        %v1664 = vunpack.c.h.b16 %v920
        %v1665 = vunpack.c.l.b16 %v921
        %v1666 = vunpack.c.h.b16 %v921
        %v1667 = vunpack.c.l.b16 %v922
        %v1668 = vunpack.c.h.b16 %v922
        %v1669 = vunpack.c.l.b16 %v923
        %v1670 = vunpack.c.h.b16 %v923
        %v1671 = vunpack.c.l.b16 %v924
        %v1672 = vunpack.c.h.b16 %v924
        %v1673 = vunpack.c.l.b16 %v925
        %v1674 = vunpack.c.h.b16 %v925
        %v1675 = vunpack.c.l.b16 %v926
        %v1676 = vunpack.c.h.b16 %v926
        %v1677 = vunpack.c.l.b16 %v927
        %v1678 = vunpack.c.h.b16 %v927
        %v1679 = vunpack.c.l.b16 %v928
        %v1680 = vunpack.c.h.b16 %v928
        %v1681 = vunpack.c.l.b16 %v929
        %v1682 = vunpack.c.h.b16 %v929
        %v1683 = vunpack.c.l.b16 %v930
        %v1684 = vunpack.c.h.b16 %v930
        %v1685 = vunpack.c.l.b16 %v931
        %v1686 = vunpack.c.h.b16 %v931
        %v1687 = vunpack.c.l.b16 %v932
        %v1688 = vunpack.c.h.b16 %v932
        %v1689 = vunpack.c.l.b16 %v933
        %v1690 = vunpack.c.h.b16 %v933
        %v1691 = vunpack.c.l.b16 %v934
        %v1692 = vunpack.c.h.b16 %v934
        %v1693 = vunpack.c.l.b16 %v935
        %v1694 = vunpack.c.h.b16 %v935
        %v1695 = vunpack.c.l.b16 %v936
        %v1696 = vunpack.c.h.b16 %v936
        %v1697 = vunpack.c.l.b16 %v937
        %v1698 = vunpack.c.h.b16 %v937
        %v1699 = vunpack.c.l.b16 %v938
        %v1700 = vunpack.c.h.b16 %v938
        %v1701 = vunpack.c.l.b16 %v939
        %v1702 = vunpack.c.h.b16 %v939
        %v1703 = vunpack.c.l.b16 %v940
        %v1704 = vunpack.c.h.b16 %v940
        %v1705 = vunpack.c.l.b16 %v941
        %v1706 = vunpack.c.h.b16 %v941
        %v1707 = vunpack.c.l.b16 %v942
        %v1708 = vunpack.c.h.b16 %v942
        %v1709 = vunpack.c.l.b16 %v943
        %v1710 = vunpack.c.h.b16 %v943
        %v1711 = vunpack.c.l.b16 %v944
        %v1712 = vunpack.c.h.b16 %v944
        %v1713 = vunpack.c.l.b16 %v945
        %v1714 = vunpack.c.h.b16 %v945
        %v1715 = vunpack.c.l.b16 %v946
        %v1716 = vunpack.c.h.b16 %v946
        %v1717 = vunpack.c.l.b16 %v947
        %v1718 = vunpack.c.h.b16 %v947
        %v1719 = vunpack.c.l.b16 %v948
        %v1720 = vunpack.c.h.b16 %v948
        %v1721 = vunpack.c.l.b16 %v949
        %v1722 = vunpack.c.h.b16 %v949
        %v1723 = vunpack.c.l.b16 %v950
        %v1724 = vunpack.c.h.b16 %v950
        %v1725 = vunpack.c.l.b16 %v951
        %v1726 = vunpack.c.h.b16 %v951
        %v1727 = vunpack.c.l.b16 %v952
        %v1728 = vunpack.c.h.b16 %v952
        %v1729 = vunpack.c.l.b16 %v953
        %v1730 = vunpack.c.h.b16 %v953
        %v1731 = vunpack.c.l.b16 %v954
        %v1732 = vunpack.c.h.b16 %v954
        %v1733 = vunpack.c.l.b16 %v955
        %v1734 = vunpack.c.h.b16 %v955
        %v1735 = vunpack.c.l.b16 %v956
        %v1736 = vunpack.c.h.b16 %v956
        %v1737 = vunpack.c.l.b16 %v957
        %v1738 = vunpack.c.h.b16 %v957
        %v1739 = vunpack.c.l.b16 %v958
        %v1740 = vunpack.c.h.b16 %v958
        %v1741 = vunpack.c.l.b16 %v959
        %v1742 = vunpack.c.h.b16 %v959
        %v1743 = vunpack.c.l.b16 %v960
        %v1744 = vunpack.c.h.b16 %v960
        %v1745 = vunpack.c.l.b16 %v961
        %v1746 = vunpack.c.h.b16 %v961
        %v1747 = vunpack.c.l.b16 %v962
        %v1748 = vunpack.c.h.b16 %v962
        %v1749 = vunpack.c.l.b16 %v963
        %v1750 = vunpack.c.h.b16 %v963
        %v1751 = vunpack.c.l.b16 %v964
        %v1752 = vunpack.c.h.b16 %v964
        %v1753 = vunpack.c.l.b16 %v965
        %v1754 = vunpack.c.h.b16 %v965
        %v1755 = vunpack.c.l.b16 %v966
        %v1756 = vunpack.c.h.b16 %v966
        %v1757 = vunpack.c.l.b16 %v967
        %v1758 = vunpack.c.h.b16 %v967
        %v1759 = vunpack.c.l.b16 %v968
        %v1760 = vunpack.c.h.b16 %v968
        %v1761 = vunpack.c.l.b16 %v969
        %v1762 = vunpack.c.h.b16 %v969
        %v1763 = vunpack.c.l.b16 %v970
        %v1764 = vunpack.c.h.b16 %v970
        %v1765 = vunpack.c.l.b16 %v971
        %v1766 = vunpack.c.h.b16 %v971
        %v1767 = vunpack.c.l.b16 %v972
        %v1768 = vunpack.c.h.b16 %v972
        %v1769 = vunpack.c.l.b16 %v973
        %v1770 = vunpack.c.h.b16 %v973
        %v1771 = vunpack.c.l.b16 %v974
        %v1772 = vunpack.c.h.b16 %v974
        %v1773 = vunpack.c.l.b16 %v975
        %v1774 = vunpack.c.h.b16 %v975
        %v1775 = vunpack.c.l.b16 %v976
        %v1776 = vunpack.c.h.b16 %v976
        %v1777 = vunpack.c.l.b16 %v977
        %v1778 = vunpack.c.h.b16 %v977
        %v1779 = vunpack.c.l.b16 %v978
        %v1780 = vunpack.c.h.b16 %v978
        %v1781 = vunpack.c.l.b16 %v979
        %v1782 = vunpack.c.h.b16 %v979
        %v1783 = vunpack.c.l.b16 %v980
        %v1784 = vunpack.c.h.b16 %v980
        %v1785 = vunpack.c.l.b16 %v981
        %v1786 = vunpack.c.h.b16 %v981
        %v1787 = vunpack.c.l.b16 %v982
        %v1788 = vunpack.c.h.b16 %v982
        %v1789 = vunpack.c.l.b16 %v983
        %v1790 = vunpack.c.h.b16 %v983
        %v1791 = vunpack.c.l.b16 %v984
        %v1792 = vunpack.c.h.b16 %v984
        %v1793 = vunpack.c.l.b16 %v985
        %v1794 = vunpack.c.h.b16 %v985
        %v1795 = vunpack.c.l.b16 %v986
        %v1796 = vunpack.c.h.b16 %v986
        %v1797 = vunpack.c.l.b16 %v987
        %v1798 = vunpack.c.h.b16 %v987
        %v1799 = vunpack.c.l.b16 %v988
        %v1800 = vunpack.c.h.b16 %v988
        %v1801 = vunpack.c.l.b16 %v989
        %v1802 = vunpack.c.h.b16 %v989
        %v1803 = vunpack.c.l.b16 %v990
        %v1804 = vunpack.c.h.b16 %v990
        %v1805 = vunpack.c.l.b16 %v991
        %v1806 = vunpack.c.h.b16 %v991
        %v1807 = vunpack.c.l.b16 %v992
        %v1808 = vunpack.c.h.b16 %v992
        %v1809 = vunpack.c.l.b16 %v993
        %v1810 = vunpack.c.h.b16 %v993
        %v1811 = vunpack.c.l.b16 %v994
        %v1812 = vunpack.c.h.b16 %v994
        %v1813 = vunpack.c.l.b16 %v995
        %v1814 = vunpack.c.h.b16 %v995
        %v1815 = vunpack.c.l.b16 %v996
        %v1816 = vunpack.c.h.b16 %v996
        %v1817 = vunpack.c.l.b16 %v997
        %v1818 = vunpack.c.h.b16 %v997
        %v1819 = vunpack.c.l.b16 %v998
        %v1820 = vunpack.c.h.b16 %v998
        %v1821 = vunpack.c.l.b16 %v999
        %v1822 = vunpack.c.h.b16 %v999
        %v1823 = vunpack.c.l.b16 %v1000
        %v1824 = vunpack.c.h.b16 %v1000
        %v1825 = vunpack.c.l.b16 %v1001
        %v1826 = vunpack.c.h.b16 %v1001
        %v1827 = vunpack.c.l.b16 %v1002
        %v1828 = vunpack.c.h.b16 %v1002
        %v1829 = vunpack.c.l.b16 %v1003
        %v1830 = vunpack.c.h.b16 %v1003
        %v1831 = vunpack.c.l.b16 %v1004
        %v1832 = vunpack.c.h.b16 %v1004
        %v1833 = vunpack.c.l.b16 %v1005
        %v1834 = vunpack.c.h.b16 %v1005
        %v1835 = vunpack.c.l.b16 %v1006
        %v1836 = vunpack.c.h.b16 %v1006
        %v1837 = vunpack.c.l.b16 %v1007
        %v1838 = vunpack.c.h.b16 %v1007
        %v1839 = vunpack.c.l.b16 %v1008
        %v1840 = vunpack.c.h.b16 %v1008
        %v1841 = vunpack.c.l.b16 %v1009
        %v1842 = vunpack.c.h.b16 %v1009
        %v1843 = vunpack.c.l.b16 %v1010
        %v1844 = vunpack.c.h.b16 %v1010
        %v1845 = vunpack.c.l.b16 %v1011
        %v1846 = vunpack.c.h.b16 %v1011
        %v1847 = vunpack.c.l.b16 %v1012
        %v1848 = vunpack.c.h.b16 %v1012
        %v1849 = vunpack.c.l.b16 %v1013
        %v1850 = vunpack.c.h.b16 %v1013
        %v1851 = vunpack.c.l.b16 %v1014
        %v1852 = vunpack.c.h.b16 %v1014
        %v1853 = vunpack.c.l.b16 %v1015
        %v1854 = vunpack.c.h.b16 %v1015
        %v1855 = vunpack.c.l.b16 %v1016
        %v1856 = vunpack.c.h.b16 %v1016
        %v1857 = vunpack.c.l.b16 %v1017
        %v1858 = vunpack.c.h.b16 %v1017
        %v1859 = vunpack.c.l.b16 %v1018
        %v1860 = vunpack.c.h.b16 %v1018
        %v1861 = vunpack.c.l.b16 %v1019
        %v1862 = vunpack.c.h.b16 %v1019
        %v1863 = vunpack.c.l.b16 %v1020
        %v1864 = vunpack.c.h.b16 %v1020
        %v1865 = vunpack.c.l.b16 %v1021
        %v1866 = vunpack.c.h.b16 %v1021
        %v1867 = vunpack.c.l.b16 %v1022
        %v1868 = vunpack.c.h.b16 %v1022
        %v1869 = vunpack.c.l.b16 %v1023
        %v1870 = vunpack.c.h.b16 %v1023
        %v1871 = vunpack.c.l.b16 %v1024
        %v1872 = vunpack.c.h.b16 %v1024
        %v1873 = vunpack.c.l.b16 %v1025
        %v1874 = vunpack.c.h.b16 %v1025
        %v1875 = vunpack.c.l.b16 %v1026
        %v1876 = vunpack.c.h.b16 %v1026
        %v1877 = vunpack.c.l.b16 %v1027
        %v1878 = vunpack.c.h.b16 %v1027
        %v1879 = vunpack.c.l.b16 %v1028
        %v1880 = vunpack.c.h.b16 %v1028
        %v1881 = vunpack.c.l.b16 %v1029
        %v1882 = vunpack.c.h.b16 %v1029
        %v1883 = vunpack.c.l.b16 %v1030
        %v1884 = vunpack.c.h.b16 %v1030
        %v1885 = vunpack.c.l.b16 %v1031
        %v1886 = vunpack.c.h.b16 %v1031
        %v1887 = vunpack.c.l.b16 %v1032
        %v1888 = vunpack.c.h.b16 %v1032
        %v1889 = vunpack.c.l.b16 %v1033
        %v1890 = vunpack.c.h.b16 %v1033
        %v1891 = vunpack.c.l.b16 %v1034
        %v1892 = vunpack.c.h.b16 %v1034
        %v1893 = vunpack.c.l.b16 %v1035
        %v1894 = vunpack.c.h.b16 %v1035
        %v1895 = vunpack.c.l.b16 %v1036
        %v1896 = vunpack.c.h.b16 %v1036
        %v1897 = vunpack.c.l.b16 %v1037
        %v1898 = vunpack.c.h.b16 %v1037
        %v1899 = vunpack.c.l.b16 %v1038
        %v1900 = vunpack.c.h.b16 %v1038
        %v1901 = vunpack.c.l.b16 %v1039
        %v1902 = vunpack.c.h.b16 %v1039
        %v1903 = vunpack.c.l.b16 %v1040
        %v1904 = vunpack.c.h.b16 %v1040
        %v1905 = vunpack.c.l.b16 %v1041
        %v1906 = vunpack.c.h.b16 %v1041
        %v1907 = vunpack.c.l.b16 %v1042
        %v1908 = vunpack.c.h.b16 %v1042
        %v1909 = vunpack.c.l.b16 %v1043
        %v1910 = vunpack.c.h.b16 %v1043
        %v1911 = vunpack.c.l.b16 %v1044
        %v1912 = vunpack.c.h.b16 %v1044
        %v1913 = vunpack.c.l.b16 %v1045
        %v1914 = vunpack.c.h.b16 %v1045
        %v1915 = vunpack.c.l.b16 %v1046
        %v1916 = vunpack.c.h.b16 %v1046
        %v1917 = vunpack.c.l.b16 %v1047
        %v1918 = vunpack.c.h.b16 %v1047
        %v1919 = vunpack.c.l.b16 %v1048
        %v1920 = vunpack.c.h.b16 %v1048
        %v1921 = vunpack.c.l.b16 %v1049
        %v1922 = vunpack.c.h.b16 %v1049
        %v1923 = vunpack.c.l.b16 %v1050
        %v1924 = vunpack.c.h.b16 %v1050
        %v1925 = vunpack.c.l.b16 %v1051
        %v1926 = vunpack.c.h.b16 %v1051
        %v1927 = vunpack.c.l.b16 %v1052
        %v1928 = vunpack.c.h.b16 %v1052
        %v1929 = vunpack.c.l.b16 %v1053
        %v1930 = vunpack.c.h.b16 %v1053
        %v1931 = vunpack.c.l.b16 %v1054
        %v1932 = vunpack.c.h.b16 %v1054
        %v1933 = vunpack.c.l.b16 %v1055
        %v1934 = vunpack.c.h.b16 %v1055
        %v1935 = vunpack.c.l.b16 %v1056
        %v1936 = vunpack.c.h.b16 %v1056
        %v1937 = vunpack.c.l.b16 %v1057
        %v1938 = vunpack.c.h.b16 %v1057
        %v1939 = vunpack.c.l.b16 %v1058
        %v1940 = vunpack.c.h.b16 %v1058
        %v1941 = vunpack.c.l.b16 %v1059
        %v1942 = vunpack.c.h.b16 %v1059
        %v1943 = vunpack.c.l.b16 %v1060
        %v1944 = vunpack.c.h.b16 %v1060
        %v1945 = vunpack.c.l.b16 %v1061
        %v1946 = vunpack.c.h.b16 %v1061
        %v1947 = vunpack.c.l.b16 %v1062
        %v1948 = vunpack.c.h.b16 %v1062
        %v1949 = vunpack.c.l.b16 %v1063
        %v1950 = vunpack.c.h.b16 %v1063
        %v1951 = vunpack.c.l.b16 %v1064
        %v1952 = vunpack.c.h.b16 %v1064
        %v1953 = vunpack.c.l.b16 %v1065
        %v1954 = vunpack.c.h.b16 %v1065
        %v1955 = vunpack.c.l.b16 %v1066
        %v1956 = vunpack.c.h.b16 %v1066
        %v1957 = vunpack.c.l.b16 %v1067
        %v1958 = vunpack.c.h.b16 %v1067
        %v1959 = vunpack.c.l.b16 %v1068
        %v1960 = vunpack.c.h.b16 %v1068
        %v1961 = vunpack.c.l.b16 %v1069
        %v1962 = vunpack.c.h.b16 %v1069
        %v1963 = vunpack.c.l.b16 %v1070
        %v1964 = vunpack.c.h.b16 %v1070
        %v1965 = vunpack.c.l.b16 %v1071
        %v1966 = vunpack.c.h.b16 %v1071
        %v1967 = vunpack.c.l.b16 %v1072
        %v1968 = vunpack.c.h.b16 %v1072
        %v1969 = vunpack.c.l.b16 %v1073
        %v1970 = vunpack.c.h.b16 %v1073
        %v1971 = vunpack.c.l.b16 %v1074
        %v1972 = vunpack.c.h.b16 %v1074
        %v1973 = vunpack.c.l.b16 %v1075
        %v1974 = vunpack.c.h.b16 %v1075
        %v1975 = vunpack.c.l.b16 %v1076
        %v1976 = vunpack.c.h.b16 %v1076
        %v1977 = vunpack.c.l.b16 %v1077
        %v1978 = vunpack.c.h.b16 %v1077
        %v1979 = vunpack.c.l.b16 %v1078
        %v1980 = vunpack.c.h.b16 %v1078
        %v1981 = vunpack.c.l.b16 %v1079
        %v1982 = vunpack.c.h.b16 %v1079
        %v1983 = vunpack.c.l.b16 %v1080
        %v1984 = vunpack.c.h.b16 %v1080
        %v1985 = vunpack.c.l.b16 %v1081
        %v1986 = vunpack.c.h.b16 %v1081
        %v1987 = vunpack.c.l.b16 %v1082
        %v1988 = vunpack.c.h.b16 %v1082
        %v1989 = vunpack.c.l.b16 %v1083
        %v1990 = vunpack.c.h.b16 %v1083
        %v1991 = vunpack.c.l.b16 %v1084
        %v1992 = vunpack.c.h.b16 %v1084
        %v1993 = vunpack.c.l.b16 %v1085
        %v1994 = vunpack.c.h.b16 %v1085
        %v1995 = vunpack.c.l.b16 %v1086
        %v1996 = vunpack.c.h.b16 %v1086
        %v1997 = vunpack.c.l.b16 %v1087
        %v1998 = vunpack.c.h.b16 %v1087
        %v1999 = vunpack.c.l.b16 %v1088
        %v2000 = vunpack.c.h.b16 %v1088
        %v2001 = vunpack.c.l.b16 %v1089
        %v2002 = vunpack.c.h.b16 %v1089
        %v2003 = vunpack.c.l.b16 %v1090
        %v2004 = vunpack.c.h.b16 %v1090
        %v2005 = vunpack.c.l.b16 %v1091
        %v2006 = vunpack.c.h.b16 %v1091
        %v2007 = vunpack.c.l.b16 %v1092
        %v2008 = vunpack.c.h.b16 %v1092
        %v2009 = vunpack.c.l.b16 %v1093
        %v2010 = vunpack.c.h.b16 %v1093
        %v2011 = vunpack.c.l.b16 %v1094
        %v2012 = vunpack.c.h.b16 %v1094
        %v2013 = vunpack.c.l.b16 %v1095
        %v2014 = vunpack.c.h.b16 %v1095
        %v2015 = vunpack.c.l.b16 %v1096
        %v2016 = vunpack.c.h.b16 %v1096
        %v2017 = vunpack.c.l.b16 %v1097
        %v2018 = vunpack.c.h.b16 %v1097
        %v2019 = vunpack.c.l.b16 %v1098
        %v2020 = vunpack.c.h.b16 %v1098
        %v2021 = vunpack.c.l.b16 %v1099
        %v2022 = vunpack.c.h.b16 %v1099
        %v2023 = vunpack.c.l.b16 %v1100
        %v2024 = vunpack.c.h.b16 %v1100
        %v2025 = vunpack.c.l.b16 %v1101
        %v2026 = vunpack.c.h.b16 %v1101
        %v2027 = vunpack.c.l.b16 %v1102
        %v2028 = vunpack.c.h.b16 %v1102
        %v2029 = vunpack.c.l.b16 %v1103
        %v2030 = vunpack.c.h.b16 %v1103
        %v2031 = vunpack.c.l.b16 %v1104
        %v2032 = vunpack.c.h.b16 %v1104
        %v2033 = vpack.c.b16 %v1457, %v1425
        %v2034 = vpack.c.b16 %v1458, %v1426
        %v2035 = vpack.c.b16 %v1459, %v1427
        %v2036 = vpack.c.b16 %v1460, %v1428
        %v2037 = vpack.c.b16 %v1461, %v1429
        %v2038 = vpack.c.b16 %v1462, %v1430
        %v2039 = vpack.c.b16 %v1463, %v1431
        %v2040 = vpack.c.b16 %v1464, %v1432
        %v2041 = vpack.c.b16 %v1465, %v1433
        %v2042 = vpack.c.b16 %v1466, %v1434
        %v2043 = vpack.c.b16 %v1467, %v1435
        %v2044 = vpack.c.b16 %v1468, %v1436
        %v2045 = vpack.c.b16 %v1469, %v1437
        %v2046 = vpack.c.b16 %v1470, %v1438
        %v2047 = vpack.c.b16 %v1471, %v1439
        %v2048 = vpack.c.b16 %v1472, %v1440
        %v2049 = vpack.c.b16 %v1473, %v1441
        %v2050 = vpack.c.b16 %v1474, %v1442
        %v2051 = vpack.c.b16 %v1475, %v1443
        %v2052 = vpack.c.b16 %v1476, %v1444
        %v2053 = vpack.c.b16 %v1477, %v1445
        %v2054 = vpack.c.b16 %v1478, %v1446
        %v2055 = vpack.c.b16 %v1479, %v1447
        %v2056 = vpack.c.b16 %v1480, %v1448
        %v2057 = vpack.c.b16 %v1481, %v1449
        %v2058 = vpack.c.b16 %v1482, %v1450
        %v2059 = vpack.c.b16 %v1483, %v1451
        %v2060 = vpack.c.b16 %v1484, %v1452
        %v2061 = vpack.c.b16 %v1485, %v1453
        %v2062 = vpack.c.b16 %v1486, %v1454
        %v2063 = vpack.c.b16 %v1487, %v1455
        %v2064 = vpack.c.b16 %v1488, %v1456
        %v2065 = vpack.c.b16 %v1521, %v1489
        %v2066 = vpack.c.b16 %v1522, %v1490
        %v2067 = vpack.c.b16 %v1523, %v1491
        %v2068 = vpack.c.b16 %v1524, %v1492
        %v2069 = vpack.c.b16 %v1525, %v1493
        %v2070 = vpack.c.b16 %v1526, %v1494
        %v2071 = vpack.c.b16 %v1527, %v1495
        %v2072 = vpack.c.b16 %v1528, %v1496
        %v2073 = vpack.c.b16 %v1529, %v1497
        %v2074 = vpack.c.b16 %v1530, %v1498
        %v2075 = vpack.c.b16 %v1531, %v1499
        %v2076 = vpack.c.b16 %v1532, %v1500
        %v2077 = vpack.c.b16 %v1533, %v1501
        %v2078 = vpack.c.b16 %v1534, %v1502
        %v2079 = vpack.c.b16 %v1535, %v1503
        %v2080 = vpack.c.b16 %v1536, %v1504
        %v2081 = vpack.c.b16 %v1537, %v1505
        %v2082 = vpack.c.b16 %v1538, %v1506
        %v2083 = vpack.c.b16 %v1539, %v1507
        %v2084 = vpack.c.b16 %v1540, %v1508
        %v2085 = vpack.c.b16 %v1541, %v1509
        %v2086 = vpack.c.b16 %v1542, %v1510
        %v2087 = vpack.c.b16 %v1543, %v1511
        %v2088 = vpack.c.b16 %v1544, %v1512
        %v2089 = vpack.c.b16 %v1545, %v1513
        %v2090 = vpack.c.b16 %v1546, %v1514
        %v2091 = vpack.c.b16 %v1547, %v1515
        %v2092 = vpack.c.b16 %v1548, %v1516
        %v2093 = vpack.c.b16 %v1549, %v1517
        %v2094 = vpack.c.b16 %v1550, %v1518
        %v2095 = vpack.c.b16 %v1551, %v1519
        %v2096 = vpack.c.b16 %v1552, %v1520
        %v2097 = vpack.c.b16 %v1585, %v1553
        %v2098 = vpack.c.b16 %v1586, %v1554
        %v2099 = vpack.c.b16 %v1587, %v1555
        %v2100 = vpack.c.b16 %v1588, %v1556
        %v2101 = vpack.c.b16 %v1589, %v1557
        %v2102 = vpack.c.b16 %v1590, %v1558
        %v2103 = vpack.c.b16 %v1591, %v1559
        %v2104 = vpack.c.b16 %v1592, %v1560
        %v2105 = vpack.c.b16 %v1593, %v1561
        %v2106 = vpack.c.b16 %v1594, %v1562
        %v2107 = vpack.c.b16 %v1595, %v1563
        %v2108 = vpack.c.b16 %v1596, %v1564
        %v2109 = vpack.c.b16 %v1597, %v1565
        %v2110 = vpack.c.b16 %v1598, %v1566
        %v2111 = vpack.c.b16 %v1599, %v1567
        %v2112 = vpack.c.b16 %v1600, %v1568
        %v2113 = vpack.c.b16 %v1601, %v1569
        %v2114 = vpack.c.b16 %v1602, %v1570
        %v2115 = vpack.c.b16 %v1603, %v1571
        %v2116 = vpack.c.b16 %v1604, %v1572
        %v2117 = vpack.c.b16 %v1605, %v1573
        %v2118 = vpack.c.b16 %v1606, %v1574
        %v2119 = vpack.c.b16 %v1607, %v1575
        %v2120 = vpack.c.b16 %v1608, %v1576
        %v2121 = vpack.c.b16 %v1609, %v1577
        %v2122 = vpack.c.b16 %v1610, %v1578
        %v2123 = vpack.c.b16 %v1611, %v1579
        %v2124 = vpack.c.b16 %v1612, %v1580
        %v2125 = vpack.c.b16 %v1613, %v1581
        %v2126 = vpack.c.b16 %v1614, %v1582
        %v2127 = vpack.c.b16 %v1615, %v1583
        %v2128 = vpack.c.b16 %v1616, %v1584
        %v2129 = vpack.c.b16 %v1649, %v1617
        %v2130 = vpack.c.b16 %v1650, %v1618
        %v2131 = vpack.c.b16 %v1651, %v1619
        %v2132 = vpack.c.b16 %v1652, %v1620
        %v2133 = vpack.c.b16 %v1653, %v1621
        %v2134 = vpack.c.b16 %v1654, %v1622
        %v2135 = vpack.c.b16 %v1655, %v1623
        %v2136 = vpack.c.b16 %v1656, %v1624
        %v2137 = vpack.c.b16 %v1657, %v1625
        %v2138 = vpack.c.b16 %v1658, %v1626
        %v2139 = vpack.c.b16 %v1659, %v1627
        %v2140 = vpack.c.b16 %v1660, %v1628
        %v2141 = vpack.c.b16 %v1661, %v1629
        %v2142 = vpack.c.b16 %v1662, %v1630
        %v2143 = vpack.c.b16 %v1663, %v1631
        %v2144 = vpack.c.b16 %v1664, %v1632
        %v2145 = vpack.c.b16 %v1665, %v1633
        %v2146 = vpack.c.b16 %v1666, %v1634
        %v2147 = vpack.c.b16 %v1667, %v1635
        %v2148 = vpack.c.b16 %v1668, %v1636
        %v2149 = vpack.c.b16 %v1669, %v1637
        %v2150 = vpack.c.b16 %v1670, %v1638
        %v2151 = vpack.c.b16 %v1671, %v1639
        %v2152 = vpack.c.b16 %v1672, %v1640
        %v2153 = vpack.c.b16 %v1673, %v1641
        %v2154 = vpack.c.b16 %v1674, %v1642
        %v2155 = vpack.c.b16 %v1675, %v1643
        %v2156 = vpack.c.b16 %v1676, %v1644
        %v2157 = vpack.c.b16 %v1677, %v1645
        %v2158 = vpack.c.b16 %v1678, %v1646
        %v2159 = vpack.c.b16 %v1679, %v1647
        %v2160 = vpack.c.b16 %v1680, %v1648
        %v2161 = vpack.c.b16 %v1713, %v1681
        %v2162 = vpack.c.b16 %v1714, %v1682
        %v2163 = vpack.c.b16 %v1715, %v1683
        %v2164 = vpack.c.b16 %v1716, %v1684
        %v2165 = vpack.c.b16 %v1717, %v1685
        %v2166 = vpack.c.b16 %v1718, %v1686
        %v2167 = vpack.c.b16 %v1719, %v1687
        %v2168 = vpack.c.b16 %v1720, %v1688
        %v2169 = vpack.c.b16 %v1721, %v1689
        %v2170 = vpack.c.b16 %v1722, %v1690
        %v2171 = vpack.c.b16 %v1723, %v1691
        %v2172 = vpack.c.b16 %v1724, %v1692
        %v2173 = vpack.c.b16 %v1725, %v1693
        %v2174 = vpack.c.b16 %v1726, %v1694
        %v2175 = vpack.c.b16 %v1727, %v1695
        %v2176 = vpack.c.b16 %v1728, %v1696
        %v2177 = vpack.c.b16 %v1729, %v1697
        %v2178 = vpack.c.b16 %v1730, %v1698
        %v2179 = vpack.c.b16 %v1731, %v1699
        %v2180 = vpack.c.b16 %v1732, %v1700
        %v2181 = vpack.c.b16 %v1733, %v1701
        %v2182 = vpack.c.b16 %v1734, %v1702
        %v2183 = vpack.c.b16 %v1735, %v1703
        %v2184 = vpack.c.b16 %v1736, %v1704
        %v2185 = vpack.c.b16 %v1737, %v1705
        %v2186 = vpack.c.b16 %v1738, %v1706
        %v2187 = vpack.c.b16 %v1739, %v1707
        %v2188 = vpack.c.b16 %v1740, %v1708
        %v2189 = vpack.c.b16 %v1741, %v1709
        %v2190 = vpack.c.b16 %v1742, %v1710
        %v2191 = vpack.c.b16 %v1743, %v1711
        %v2192 = vpack.c.b16 %v1744, %v1712
        %v2193 = vpack.c.b16 %v1777, %v1745
        %v2194 = vpack.c.b16 %v1778, %v1746
        %v2195 = vpack.c.b16 %v1779, %v1747
        %v2196 = vpack.c.b16 %v1780, %v1748
        %v2197 = vpack.c.b16 %v1781, %v1749
        %v2198 = vpack.c.b16 %v1782, %v1750
        %v2199 = vpack.c.b16 %v1783, %v1751
        %v2200 = vpack.c.b16 %v1784, %v1752
        %v2201 = vpack.c.b16 %v1785, %v1753
        %v2202 = vpack.c.b16 %v1786, %v1754
        %v2203 = vpack.c.b16 %v1787, %v1755
        %v2204 = vpack.c.b16 %v1788, %v1756
        %v2205 = vpack.c.b16 %v1789, %v1757
        %v2206 = vpack.c.b16 %v1790, %v1758
        %v2207 = vpack.c.b16 %v1791, %v1759
        %v2208 = vpack.c.b16 %v1792, %v1760
        %v2209 = vpack.c.b16 %v1793, %v1761
        %v2210 = vpack.c.b16 %v1794, %v1762
        %v2211 = vpack.c.b16 %v1795, %v1763
        %v2212 = vpack.c.b16 %v1796, %v1764
        %v2213 = vpack.c.b16 %v1797, %v1765
        %v2214 = vpack.c.b16 %v1798, %v1766
        %v2215 = vpack.c.b16 %v1799, %v1767
        %v2216 = vpack.c.b16 %v1800, %v1768
        %v2217 = vpack.c.b16 %v1801, %v1769
        %v2218 = vpack.c.b16 %v1802, %v1770
        %v2219 = vpack.c.b16 %v1803, %v1771
        %v2220 = vpack.c.b16 %v1804, %v1772
        %v2221 = vpack.c.b16 %v1805, %v1773
        %v2222 = vpack.c.b16 %v1806, %v1774
        %v2223 = vpack.c.b16 %v1807, %v1775
        %v2224 = vpack.c.b16 %v1808, %v1776
        %v2225 = vpack.c.b16 %v1841, %v1809
        %v2226 = vpack.c.b16 %v1842, %v1810
        %v2227 = vpack.c.b16 %v1843, %v1811
        %v2228 = vpack.c.b16 %v1844, %v1812
        %v2229 = vpack.c.b16 %v1845, %v1813
        %v2230 = vpack.c.b16 %v1846, %v1814
        %v2231 = vpack.c.b16 %v1847, %v1815
        %v2232 = vpack.c.b16 %v1848, %v1816
        %v2233 = vpack.c.b16 %v1849, %v1817
        %v2234 = vpack.c.b16 %v1850, %v1818
        %v2235 = vpack.c.b16 %v1851, %v1819
        %v2236 = vpack.c.b16 %v1852, %v1820
        %v2237 = vpack.c.b16 %v1853, %v1821
        %v2238 = vpack.c.b16 %v1854, %v1822
        %v2239 = vpack.c.b16 %v1855, %v1823
        %v2240 = vpack.c.b16 %v1856, %v1824
        %v2241 = vpack.c.b16 %v1857, %v1825
        %v2242 = vpack.c.b16 %v1858, %v1826
        %v2243 = vpack.c.b16 %v1859, %v1827
        %v2244 = vpack.c.b16 %v1860, %v1828
        %v2245 = vpack.c.b16 %v1861, %v1829
        %v2246 = vpack.c.b16 %v1862, %v1830
        %v2247 = vpack.c.b16 %v1863, %v1831
        %v2248 = vpack.c.b16 %v1864, %v1832
        %v2249 = vpack.c.b16 %v1865, %v1833
        %v2250 = vpack.c.b16 %v1866, %v1834
        %v2251 = vpack.c.b16 %v1867, %v1835
        %v2252 = vpack.c.b16 %v1868, %v1836
        %v2253 = vpack.c.b16 %v1869, %v1837
        %v2254 = vpack.c.b16 %v1870, %v1838
        %v2255 = vpack.c.b16 %v1871, %v1839
        %v2256 = vpack.c.b16 %v1872, %v1840
        %v2257 = vpack.c.b16 %v1905, %v1873
        %v2258 = vpack.c.b16 %v1906, %v1874
        %v2259 = vpack.c.b16 %v1907, %v1875
        %v2260 = vpack.c.b16 %v1908, %v1876
        %v2261 = vpack.c.b16 %v1909, %v1877
        %v2262 = vpack.c.b16 %v1910, %v1878
        %v2263 = vpack.c.b16 %v1911, %v1879
        %v2264 = vpack.c.b16 %v1912, %v1880
        %v2265 = vpack.c.b16 %v1913, %v1881
        %v2266 = vpack.c.b16 %v1914, %v1882
        %v2267 = vpack.c.b16 %v1915, %v1883
        %v2268 = vpack.c.b16 %v1916, %v1884
        %v2269 = vpack.c.b16 %v1917, %v1885
        %v2270 = vpack.c.b16 %v1918, %v1886
        %v2271 = vpack.c.b16 %v1919, %v1887
        %v2272 = vpack.c.b16 %v1920, %v1888
        %v2273 = vpack.c.b16 %v1921, %v1889
        %v2274 = vpack.c.b16 %v1922, %v1890
        %v2275 = vpack.c.b16 %v1923, %v1891
        %v2276 = vpack.c.b16 %v1924, %v1892
        %v2277 = vpack.c.b16 %v1925, %v1893
        %v2278 = vpack.c.b16 %v1926, %v1894
        %v2279 = vpack.c.b16 %v1927, %v1895
        %v2280 = vpack.c.b16 %v1928, %v1896
        %v2281 = vpack.c.b16 %v1929, %v1897
        %v2282 = vpack.c.b16 %v1930, %v1898
        %v2283 = vpack.c.b16 %v1931, %v1899
        %v2284 = vpack.c.b16 %v1932, %v1900
        %v2285 = vpack.c.b16 %v1933, %v1901
        %v2286 = vpack.c.b16 %v1934, %v1902
        %v2287 = vpack.c.b16 %v1935, %v1903
        %v2288 = vpack.c.b16 %v1936, %v1904
        %v2289 = vpack.c.b16 %v1969, %v1937
        %v2290 = vpack.c.b16 %v1970, %v1938
        %v2291 = vpack.c.b16 %v1971, %v1939
        %v2292 = vpack.c.b16 %v1972, %v1940
        %v2293 = vpack.c.b16 %v1973, %v1941
        %v2294 = vpack.c.b16 %v1974, %v1942
        %v2295 = vpack.c.b16 %v1975, %v1943
        %v2296 = vpack.c.b16 %v1976, %v1944
        %v2297 = vpack.c.b16 %v1977, %v1945
        %v2298 = vpack.c.b16 %v1978, %v1946
        %v2299 = vpack.c.b16 %v1979, %v1947
        %v2300 = vpack.c.b16 %v1980, %v1948
        %v2301 = vpack.c.b16 %v1981, %v1949
        %v2302 = vpack.c.b16 %v1982, %v1950
        %v2303 = vpack.c.b16 %v1983, %v1951
        %v2304 = vpack.c.b16 %v1984, %v1952
        %v2305 = vpack.c.b16 %v1985, %v1953
        %v2306 = vpack.c.b16 %v1986, %v1954
        %v2307 = vpack.c.b16 %v1987, %v1955
        %v2308 = vpack.c.b16 %v1988, %v1956
        %v2309 = vpack.c.b16 %v1989, %v1957
        %v2310 = vpack.c.b16 %v1990, %v1958
        %v2311 = vpack.c.b16 %v1991, %v1959
        %v2312 = vpack.c.b16 %v1992, %v1960
        %v2313 = vpack.c.b16 %v1993, %v1961
        %v2314 = vpack.c.b16 %v1994, %v1962
        %v2315 = vpack.c.b16 %v1995, %v1963
        %v2316 = vpack.c.b16 %v1996, %v1964
        %v2317 = vpack.c.b16 %v1997, %v1965
        %v2318 = vpack.c.b16 %v1998, %v1966
        %v2319 = vpack.c.b16 %v1999, %v1967
        %v2320 = vpack.c.b16 %v2000, %v1968
        %v2321 = vpack.c.b16 %v2001, %v2001
        %v2322 = vpack.c.b16 %v2002, %v2002
        %v2323 = vpack.c.b16 %v2003, %v2003
        %v2324 = vpack.c.b16 %v2004, %v2004
        %v2325 = vpack.c.b16 %v2005, %v2005
        %v2326 = vpack.c.b16 %v2006, %v2006
        %v2327 = vpack.c.b16 %v2007, %v2007
        %v2328 = vpack.c.b16 %v2008, %v2008
        %v2329 = vpack.c.b16 %v2009, %v2009
        %v2330 = vpack.c.b16 %v2010, %v2010
        %v2331 = vpack.c.b16 %v2011, %v2011
        %v2332 = vpack.c.b16 %v2012, %v2012
        %v2333 = vpack.c.b16 %v2013, %v2013
        %v2334 = vpack.c.b16 %v2014, %v2014
        %v2335 = vpack.c.b16 %v2015, %v2015
        %v2336 = vpack.c.b16 %v2016, %v2016
        %v2337 = vpack.c.b16 %v2017, %v2017
        %v2338 = vpack.c.b16 %v2018, %v2018
        %v2339 = vpack.c.b16 %v2019, %v2019
        %v2340 = vpack.c.b16 %v2020, %v2020
        %v2341 = vpack.c.b16 %v2021, %v2021
        %v2342 = vpack.c.b16 %v2022, %v2022
        %v2343 = vpack.c.b16 %v2023, %v2023
        %v2344 = vpack.c.b16 %v2024, %v2024
        %v2345 = vpack.c.b16 %v2025, %v2025
        %v2346 = vpack.c.b16 %v2026, %v2026
        %v2347 = vpack.c.b16 %v2027, %v2027
        %v2348 = vpack.c.b16 %v2028, %v2028
        %v2349 = vpack.c.b16 %v2029, %v2029
        %v2350 = vpack.c.b16 %v2030, %v2030
        %v2351 = vpack.c.b16 %v2031, %v2031
        %v2352 = vpack.c.b16 %v2032, %v2032
        %vm2641 = vcmask 154624
        %v2643 = vsel %vm2641, %v1119, 0
        %vm2645 = vcmask 1040384
        %vm2646 = vcmask 1041408
        %v2647 = vsel %vm2645, 4294967295, 65535
        %v2648 = vsel %vm2646, %v2647, 0
        %v2650 = vand.u32 %v2321, %v2648
        %v2653 = vand.u32 %v2322, %v2648
        %v2656 = vand.u32 %v2323, %v2648
        %v2659 = vand.u32 %v2324, %v2648
        %v2662 = vand.u32 %v2325, %v2648
        %v2665 = vand.u32 %v2326, %v2648
        %v2668 = vand.u32 %v2327, %v2648
        %v2671 = vand.u32 %v2328, %v2648
        %v2674 = vand.u32 %v2329, %v2648
        %v2677 = vand.u32 %v2330, %v2648
        %v2680 = vand.u32 %v2331, %v2648
        %v2683 = vand.u32 %v2332, %v2648
        %v2686 = vand.u32 %v2333, %v2648
        %v2689 = vand.u32 %v2334, %v2648
        %v2692 = vand.u32 %v2335, %v2648
        %v2695 = vand.u32 %v2336, %v2648
        %v2698 = vand.u32 %v2337, %v2648
        %v2701 = vand.u32 %v2338, %v2648
        %v2704 = vand.u32 %v2339, %v2648
        %v2707 = vand.u32 %v2340, %v2648
        %v2710 = vand.u32 %v2341, %v2648
        %v2713 = vand.u32 %v2342, %v2648
        %v2716 = vand.u32 %v2343, %v2648
        %v2719 = vand.u32 %v2344, %v2648
        %v2722 = vand.u32 %v2345, %v2648
        %v2725 = vand.u32 %v2346, %v2648
        %v2728 = vand.u32 %v2347, %v2648
        %v2731 = vand.u32 %v2348, %v2648
        %v2734 = vand.u32 %v2349, %v2648
        %v2737 = vand.u32 %v2350, %v2648
        %v2740 = vand.u32 %v2351, %v2648
        %v2743 = vand.u32 %v2352, %v2648
        %2745 = vmatprep.subr.bf16.mxu0 %v2034
        %2746 = vmatpush1.bf16.msra.mxu0 %v2033
        %2747 = vmatprep.subr.bf16.mxu0 %v2066
        %2748 = vmatpush1.bf16.msra.mxu0 %v2065
        %2749 = vmatprep.subr.bf16.mxu0 %v2098
        %2750 = vmatpush1.bf16.msra.mxu0 %v2097
        %2751 = vmatprep.subr.bf16.mxu0 %v2130
        %2752 = vmatpush1.bf16.msra.mxu0 %v2129
        %2753 = vmatprep.subr.bf16.mxu0 %v2162
        %2754 = vmatpush1.bf16.msra.mxu0 %v2161
        %2755 = vmatprep.subr.bf16.mxu0 %v2194
        %2756 = vmatpush1.bf16.msra.mxu0 %v2193
        %2757 = vmatprep.subr.bf16.mxu0 %v2226
        %2758 = vmatpush1.bf16.msra.mxu0 %v2225
        %2759 = vmatprep.subr.bf16.mxu0 %v2258
        %2760 = vmatpush1.bf16.msra.mxu0 %v2257
        %2761 = vmatprep.subr.bf16.mxu0 %v2290
        %2762 = vmatpush1.bf16.msra.mxu0 %v2289
        %2763 = vmatprep.subr.bf16.mxu0 %v2653
        %2764 = vmatpush1.bf16.msra.mxu0 %v2650
        %2765 = vmatprep.subr.bf16.mxu0 0
        %2766 = vmatpush1.bf16.msra.mxu0 0
        %2767 = vmatprep.subr.bf16.mxu0 0
        %2768 = vmatpush1.bf16.msra.mxu0 0
        %2769 = vmatprep.subr.bf16.mxu0 0
        %2770 = vmatpush1.bf16.msra.mxu0 0
        %2771 = vmatprep.subr.bf16.mxu0 0
        %2772 = vmatpush1.bf16.msra.mxu0 0
        %2773 = vmatprep.subr.bf16.mxu0 0
        %2774 = vmatpush1.bf16.msra.mxu0 0
        %2775 = vmatprep.subr.bf16.mxu0 0
        %2776 = vmatpush1.bf16.msra.mxu0 0
        %2777 = vmatprep.mubr.bf16.mxu0 %v2643
        %2778 = vmatmul.mubr.bf16.gmra.mrb[0].mxu0 %v1118
        %v2779 = vpop.f32.mrb[0].mxu0
        %v2780 = vadd.f32 %v1109, %v2779
        %v2781 = vpop.f32.mrb[0].mxu0
        %v2782 = vadd.f32 %v1109, %v2781
        %v2783 = vpop.f32.mrb[0].mxu0
        %v2784 = vpop.f32.mrb[0].mxu0
        %2785 = vdwg.mxu0
        %2786 = vmatprep.subr.bf16.mxu0 %v2036
        %2787 = vmatpush1.bf16.msra.mxu0 %v2035
        %2788 = vmatprep.subr.bf16.mxu0 %v2068
        %2789 = vmatpush1.bf16.msra.mxu0 %v2067
        %2790 = vmatprep.subr.bf16.mxu0 %v2100
        %2791 = vmatpush1.bf16.msra.mxu0 %v2099
        %2792 = vmatprep.subr.bf16.mxu0 %v2132
        %2793 = vmatpush1.bf16.msra.mxu0 %v2131
        %2794 = vmatprep.subr.bf16.mxu0 %v2164
        %2795 = vmatpush1.bf16.msra.mxu0 %v2163
        %2796 = vmatprep.subr.bf16.mxu0 %v2196
        %2797 = vmatpush1.bf16.msra.mxu0 %v2195
        %2798 = vmatprep.subr.bf16.mxu0 %v2228
        %2799 = vmatpush1.bf16.msra.mxu0 %v2227
        %2800 = vmatprep.subr.bf16.mxu0 %v2260
        %2801 = vmatpush1.bf16.msra.mxu0 %v2259
        %2802 = vmatprep.subr.bf16.mxu0 %v2292
        %2803 = vmatpush1.bf16.msra.mxu0 %v2291
        %2804 = vmatprep.subr.bf16.mxu0 %v2659
        %2805 = vmatpush1.bf16.msra.mxu0 %v2656
        %2806 = vmatprep.subr.bf16.mxu0 0
        %2807 = vmatpush1.bf16.msra.mxu0 0
        %2808 = vmatprep.subr.bf16.mxu0 0
        %2809 = vmatpush1.bf16.msra.mxu0 0
        %2810 = vmatprep.subr.bf16.mxu0 0
        %2811 = vmatpush1.bf16.msra.mxu0 0
        %2812 = vmatprep.subr.bf16.mxu0 0
        %2813 = vmatpush1.bf16.msra.mxu0 0
        %2814 = vmatprep.subr.bf16.mxu0 0
        %2815 = vmatpush1.bf16.msra.mxu0 0
        %2816 = vmatprep.subr.bf16.mxu0 0
        %2817 = vmatpush1.bf16.msra.mxu0 0
        %2818 = vmatprep.mubr.bf16.mxu0 %v2643
        %2819 = vmatmul.mubr.bf16.gmra.mrb[0].mxu0 %v1118
        %v2820 = vpop.f32.mrb[0].mxu0
        %v2821 = vadd.f32 %v1109, %v2820
        %v2822 = vpop.f32.mrb[0].mxu0
        %v2823 = vadd.f32 %v1109, %v2822
        %v2824 = vpop.f32.mrb[0].mxu0
        %v2825 = vpop.f32.mrb[0].mxu0
        %2826 = vdwg.mxu0
        %2827 = vmatprep.subr.bf16.mxu0 %v2038
        %2828 = vmatpush1.bf16.msra.mxu0 %v2037
        %2829 = vmatprep.subr.bf16.mxu0 %v2070
        %2830 = vmatpush1.bf16.msra.mxu0 %v2069
        %2831 = vmatprep.subr.bf16.mxu0 %v2102
        %2832 = vmatpush1.bf16.msra.mxu0 %v2101
        %2833 = vmatprep.subr.bf16.mxu0 %v2134
        %2834 = vmatpush1.bf16.msra.mxu0 %v2133
        %2835 = vmatprep.subr.bf16.mxu0 %v2166
        %2836 = vmatpush1.bf16.msra.mxu0 %v2165
        %2837 = vmatprep.subr.bf16.mxu0 %v2198
        %2838 = vmatpush1.bf16.msra.mxu0 %v2197
        %2839 = vmatprep.subr.bf16.mxu0 %v2230
        %2840 = vmatpush1.bf16.msra.mxu0 %v2229
        %2841 = vmatprep.subr.bf16.mxu0 %v2262
        %2842 = vmatpush1.bf16.msra.mxu0 %v2261
        %2843 = vmatprep.subr.bf16.mxu0 %v2294
        %2844 = vmatpush1.bf16.msra.mxu0 %v2293
        %2845 = vmatprep.subr.bf16.mxu0 %v2665
        %2846 = vmatpush1.bf16.msra.mxu0 %v2662
        %2847 = vmatprep.subr.bf16.mxu0 0
        %2848 = vmatpush1.bf16.msra.mxu0 0
        %2849 = vmatprep.subr.bf16.mxu0 0
        %2850 = vmatpush1.bf16.msra.mxu0 0
        %2851 = vmatprep.subr.bf16.mxu0 0
        %2852 = vmatpush1.bf16.msra.mxu0 0
        %2853 = vmatprep.subr.bf16.mxu0 0
        %2854 = vmatpush1.bf16.msra.mxu0 0
        %2855 = vmatprep.subr.bf16.mxu0 0
        %2856 = vmatpush1.bf16.msra.mxu0 0
        %2857 = vmatprep.subr.bf16.mxu0 0
        %2858 = vmatpush1.bf16.msra.mxu0 0
        %2859 = vmatprep.mubr.bf16.mxu0 %v2643
        %2860 = vmatmul.mubr.bf16.gmra.mrb[0].mxu0 %v1118
        %v2861 = vpop.f32.mrb[0].mxu0
        %v2862 = vadd.f32 %v1109, %v2861
        %v2863 = vpop.f32.mrb[0].mxu0
        %v2864 = vadd.f32 %v1109, %v2863
        %v2865 = vpop.f32.mrb[0].mxu0
        %v2866 = vpop.f32.mrb[0].mxu0
        %2867 = vdwg.mxu0
        %2868 = vmatprep.subr.bf16.mxu0 %v2040
        %2869 = vmatpush1.bf16.msra.mxu0 %v2039
        %2870 = vmatprep.subr.bf16.mxu0 %v2072
        %2871 = vmatpush1.bf16.msra.mxu0 %v2071
        %2872 = vmatprep.subr.bf16.mxu0 %v2104
        %2873 = vmatpush1.bf16.msra.mxu0 %v2103
        %2874 = vmatprep.subr.bf16.mxu0 %v2136
        %2875 = vmatpush1.bf16.msra.mxu0 %v2135
        %2876 = vmatprep.subr.bf16.mxu0 %v2168
        %2877 = vmatpush1.bf16.msra.mxu0 %v2167
        %2878 = vmatprep.subr.bf16.mxu0 %v2200
        %2879 = vmatpush1.bf16.msra.mxu0 %v2199
        %2880 = vmatprep.subr.bf16.mxu0 %v2232
        %2881 = vmatpush1.bf16.msra.mxu0 %v2231
        %2882 = vmatprep.subr.bf16.mxu0 %v2264
        %2883 = vmatpush1.bf16.msra.mxu0 %v2263
        %2884 = vmatprep.subr.bf16.mxu0 %v2296
        %2885 = vmatpush1.bf16.msra.mxu0 %v2295
        %2886 = vmatprep.subr.bf16.mxu0 %v2671
        %2887 = vmatpush1.bf16.msra.mxu0 %v2668
        %2888 = vmatprep.subr.bf16.mxu0 0
        %2889 = vmatpush1.bf16.msra.mxu0 0
        %2890 = vmatprep.subr.bf16.mxu0 0
        %2891 = vmatpush1.bf16.msra.mxu0 0
        %2892 = vmatprep.subr.bf16.mxu0 0
        %2893 = vmatpush1.bf16.msra.mxu0 0
        %2894 = vmatprep.subr.bf16.mxu0 0
        %2895 = vmatpush1.bf16.msra.mxu0 0
        %2896 = vmatprep.subr.bf16.mxu0 0
        %2897 = vmatpush1.bf16.msra.mxu0 0
        %2898 = vmatprep.subr.bf16.mxu0 0
        %2899 = vmatpush1.bf16.msra.mxu0 0
        %2900 = vmatprep.mubr.bf16.mxu0 %v2643
        %2901 = vmatmul.mubr.bf16.gmra.mrb[0].mxu0 %v1118
        %v2902 = vpop.f32.mrb[0].mxu0
        %v2903 = vadd.f32 %v1109, %v2902
        %v2904 = vpop.f32.mrb[0].mxu0
        %v2905 = vadd.f32 %v1109, %v2904
        %v2906 = vpop.f32.mrb[0].mxu0
        %v2907 = vpop.f32.mrb[0].mxu0
        %2908 = vdwg.mxu0
        %2909 = vmatprep.subr.bf16.mxu0 %v2042
        %2910 = vmatpush1.bf16.msra.mxu0 %v2041
        %2911 = vmatprep.subr.bf16.mxu0 %v2074
        %2912 = vmatpush1.bf16.msra.mxu0 %v2073
        %2913 = vmatprep.subr.bf16.mxu0 %v2106
        %2914 = vmatpush1.bf16.msra.mxu0 %v2105
        %2915 = vmatprep.subr.bf16.mxu0 %v2138
        %2916 = vmatpush1.bf16.msra.mxu0 %v2137
        %2917 = vmatprep.subr.bf16.mxu0 %v2170
        %2918 = vmatpush1.bf16.msra.mxu0 %v2169
        %2919 = vmatprep.subr.bf16.mxu0 %v2202
        %2920 = vmatpush1.bf16.msra.mxu0 %v2201
        %2921 = vmatprep.subr.bf16.mxu0 %v2234
        %2922 = vmatpush1.bf16.msra.mxu0 %v2233
        %2923 = vmatprep.subr.bf16.mxu0 %v2266
        %2924 = vmatpush1.bf16.msra.mxu0 %v2265
        %2925 = vmatprep.subr.bf16.mxu0 %v2298
        %2926 = vmatpush1.bf16.msra.mxu0 %v2297
        %2927 = vmatprep.subr.bf16.mxu0 %v2677
        %2928 = vmatpush1.bf16.msra.mxu0 %v2674
        %2929 = vmatprep.subr.bf16.mxu0 0
        %2930 = vmatpush1.bf16.msra.mxu0 0
        %2931 = vmatprep.subr.bf16.mxu0 0
        %2932 = vmatpush1.bf16.msra.mxu0 0
        %2933 = vmatprep.subr.bf16.mxu0 0
        %2934 = vmatpush1.bf16.msra.mxu0 0
        %2935 = vmatprep.subr.bf16.mxu0 0
        %2936 = vmatpush1.bf16.msra.mxu0 0
        %2937 = vmatprep.subr.bf16.mxu0 0
        %2938 = vmatpush1.bf16.msra.mxu0 0
        %2939 = vmatprep.subr.bf16.mxu0 0
        %2940 = vmatpush1.bf16.msra.mxu0 0
        %2941 = vmatprep.mubr.bf16.mxu0 %v2643
        %2942 = vmatmul.mubr.bf16.gmra.mrb[0].mxu0 %v1118
        %v2943 = vpop.f32.mrb[0].mxu0
        %v2944 = vadd.f32 %v1109, %v2943
        %v2945 = vpop.f32.mrb[0].mxu0
        %v2946 = vadd.f32 %v1109, %v2945
        %v2947 = vpop.f32.mrb[0].mxu0
        %v2948 = vpop.f32.mrb[0].mxu0
        %2949 = vdwg.mxu0
        %2950 = vmatprep.subr.bf16.mxu0 %v2044
        %2951 = vmatpush1.bf16.msra.mxu0 %v2043
        %2952 = vmatprep.subr.bf16.mxu0 %v2076
        %2953 = vmatpush1.bf16.msra.mxu0 %v2075
        %2954 = vmatprep.subr.bf16.mxu0 %v2108
        %2955 = vmatpush1.bf16.msra.mxu0 %v2107
        %2956 = vmatprep.subr.bf16.mxu0 %v2140
        %2957 = vmatpush1.bf16.msra.mxu0 %v2139
        %2958 = vmatprep.subr.bf16.mxu0 %v2172
        %2959 = vmatpush1.bf16.msra.mxu0 %v2171
        %2960 = vmatprep.subr.bf16.mxu0 %v2204
        %2961 = vmatpush1.bf16.msra.mxu0 %v2203
        %2962 = vmatprep.subr.bf16.mxu0 %v2236
        %2963 = vmatpush1.bf16.msra.mxu0 %v2235
        %2964 = vmatprep.subr.bf16.mxu0 %v2268
        %2965 = vmatpush1.bf16.msra.mxu0 %v2267
        %2966 = vmatprep.subr.bf16.mxu0 %v2300
        %2967 = vmatpush1.bf16.msra.mxu0 %v2299
        %2968 = vmatprep.subr.bf16.mxu0 %v2683
        %2969 = vmatpush1.bf16.msra.mxu0 %v2680
        %2970 = vmatprep.subr.bf16.mxu0 0
        %2971 = vmatpush1.bf16.msra.mxu0 0
        %2972 = vmatprep.subr.bf16.mxu0 0
        %2973 = vmatpush1.bf16.msra.mxu0 0
        %2974 = vmatprep.subr.bf16.mxu0 0
        %2975 = vmatpush1.bf16.msra.mxu0 0
        %2976 = vmatprep.subr.bf16.mxu0 0
        %2977 = vmatpush1.bf16.msra.mxu0 0
        %2978 = vmatprep.subr.bf16.mxu0 0
        %2979 = vmatpush1.bf16.msra.mxu0 0
        %2980 = vmatprep.subr.bf16.mxu0 0
        %2981 = vmatpush1.bf16.msra.mxu0 0
        %2982 = vmatprep.mubr.bf16.mxu0 %v2643
        %2983 = vmatmul.mubr.bf16.gmra.mrb[0].mxu0 %v1118
        %v2984 = vpop.f32.mrb[0].mxu0
        %v2985 = vadd.f32 %v1109, %v2984
        %v2986 = vpop.f32.mrb[0].mxu0
        %v2987 = vadd.f32 %v1109, %v2986
        %v2988 = vpop.f32.mrb[0].mxu0
        %v2989 = vpop.f32.mrb[0].mxu0
        %2990 = vdwg.mxu0
        %2991 = vmatprep.subr.bf16.mxu0 %v2046
        %2992 = vmatpush1.bf16.msra.mxu0 %v2045
        %2993 = vmatprep.subr.bf16.mxu0 %v2078
        %2994 = vmatpush1.bf16.msra.mxu0 %v2077
        %2995 = vmatprep.subr.bf16.mxu0 %v2110
        %2996 = vmatpush1.bf16.msra.mxu0 %v2109
        %2997 = vmatprep.subr.bf16.mxu0 %v2142
        %2998 = vmatpush1.bf16.msra.mxu0 %v2141
        %2999 = vmatprep.subr.bf16.mxu0 %v2174
        %3000 = vmatpush1.bf16.msra.mxu0 %v2173
        %3001 = vmatprep.subr.bf16.mxu0 %v2206
        %3002 = vmatpush1.bf16.msra.mxu0 %v2205
        %3003 = vmatprep.subr.bf16.mxu0 %v2238
        %3004 = vmatpush1.bf16.msra.mxu0 %v2237
        %3005 = vmatprep.subr.bf16.mxu0 %v2270
        %3006 = vmatpush1.bf16.msra.mxu0 %v2269
        %3007 = vmatprep.subr.bf16.mxu0 %v2302
        %3008 = vmatpush1.bf16.msra.mxu0 %v2301
        %3009 = vmatprep.subr.bf16.mxu0 %v2689
        %3010 = vmatpush1.bf16.msra.mxu0 %v2686
        %3011 = vmatprep.subr.bf16.mxu0 0
        %3012 = vmatpush1.bf16.msra.mxu0 0
        %3013 = vmatprep.subr.bf16.mxu0 0
        %3014 = vmatpush1.bf16.msra.mxu0 0
        %3015 = vmatprep.subr.bf16.mxu0 0
        %3016 = vmatpush1.bf16.msra.mxu0 0
        %3017 = vmatprep.subr.bf16.mxu0 0
        %3018 = vmatpush1.bf16.msra.mxu0 0
        %3019 = vmatprep.subr.bf16.mxu0 0
        %3020 = vmatpush1.bf16.msra.mxu0 0
        %3021 = vmatprep.subr.bf16.mxu0 0
        %3022 = vmatpush1.bf16.msra.mxu0 0
        %3023 = vmatprep.mubr.bf16.mxu0 %v2643
        %3024 = vmatmul.mubr.bf16.gmra.mrb[0].mxu0 %v1118
        %v3025 = vpop.f32.mrb[0].mxu0
        %v3026 = vadd.f32 %v1109, %v3025
        %v3027 = vpop.f32.mrb[0].mxu0
        %v3028 = vadd.f32 %v1109, %v3027
        %v3029 = vpop.f32.mrb[0].mxu0
        %v3030 = vpop.f32.mrb[0].mxu0
        %3031 = vdwg.mxu0
        %3032 = vmatprep.subr.bf16.mxu0 %v2048
        %3033 = vmatpush1.bf16.msra.mxu0 %v2047
        %3034 = vmatprep.subr.bf16.mxu0 %v2080
        %3035 = vmatpush1.bf16.msra.mxu0 %v2079
        %3036 = vmatprep.subr.bf16.mxu0 %v2112
        %3037 = vmatpush1.bf16.msra.mxu0 %v2111
        %3038 = vmatprep.subr.bf16.mxu0 %v2144
        %3039 = vmatpush1.bf16.msra.mxu0 %v2143
        %3040 = vmatprep.subr.bf16.mxu0 %v2176
        %3041 = vmatpush1.bf16.msra.mxu0 %v2175
        %3042 = vmatprep.subr.bf16.mxu0 %v2208
        %3043 = vmatpush1.bf16.msra.mxu0 %v2207
        %3044 = vmatprep.subr.bf16.mxu0 %v2240
        %3045 = vmatpush1.bf16.msra.mxu0 %v2239
        %3046 = vmatprep.subr.bf16.mxu0 %v2272
        %3047 = vmatpush1.bf16.msra.mxu0 %v2271
        %3048 = vmatprep.subr.bf16.mxu0 %v2304
        %3049 = vmatpush1.bf16.msra.mxu0 %v2303
        %3050 = vmatprep.subr.bf16.mxu0 %v2695
        %3051 = vmatpush1.bf16.msra.mxu0 %v2692
        %3052 = vmatprep.subr.bf16.mxu0 0
        %3053 = vmatpush1.bf16.msra.mxu0 0
        %3054 = vmatprep.subr.bf16.mxu0 0
        %3055 = vmatpush1.bf16.msra.mxu0 0
        %3056 = vmatprep.subr.bf16.mxu0 0
        %3057 = vmatpush1.bf16.msra.mxu0 0
        %3058 = vmatprep.subr.bf16.mxu0 0
        %3059 = vmatpush1.bf16.msra.mxu0 0
        %3060 = vmatprep.subr.bf16.mxu0 0
        %3061 = vmatpush1.bf16.msra.mxu0 0
        %3062 = vmatprep.subr.bf16.mxu0 0
        %3063 = vmatpush1.bf16.msra.mxu0 0
        %3064 = vmatprep.mubr.bf16.mxu0 %v2643
        %3065 = vmatmul.mubr.bf16.gmra.mrb[0].mxu0 %v1118
        %v3066 = vpop.f32.mrb[0].mxu0
        %v3067 = vadd.f32 %v1109, %v3066
        %v3068 = vpop.f32.mrb[0].mxu0
        %v3069 = vadd.f32 %v1109, %v3068
        %v3070 = vpop.f32.mrb[0].mxu0
        %v3071 = vpop.f32.mrb[0].mxu0
        %3072 = vdwg.mxu0
        %3073 = vmatprep.subr.bf16.mxu0 %v2050
        %3074 = vmatpush1.bf16.msra.mxu0 %v2049
        %3075 = vmatprep.subr.bf16.mxu0 %v2082
        %3076 = vmatpush1.bf16.msra.mxu0 %v2081
        %3077 = vmatprep.subr.bf16.mxu0 %v2114
        %3078 = vmatpush1.bf16.msra.mxu0 %v2113
        %3079 = vmatprep.subr.bf16.mxu0 %v2146
        %3080 = vmatpush1.bf16.msra.mxu0 %v2145
        %3081 = vmatprep.subr.bf16.mxu0 %v2178
        %3082 = vmatpush1.bf16.msra.mxu0 %v2177
        %3083 = vmatprep.subr.bf16.mxu0 %v2210
        %3084 = vmatpush1.bf16.msra.mxu0 %v2209
        %3085 = vmatprep.subr.bf16.mxu0 %v2242
        %3086 = vmatpush1.bf16.msra.mxu0 %v2241
        %3087 = vmatprep.subr.bf16.mxu0 %v2274
        %3088 = vmatpush1.bf16.msra.mxu0 %v2273
        %3089 = vmatprep.subr.bf16.mxu0 %v2306
        %3090 = vmatpush1.bf16.msra.mxu0 %v2305
        %3091 = vmatprep.subr.bf16.mxu0 %v2701
        %3092 = vmatpush1.bf16.msra.mxu0 %v2698
        %3093 = vmatprep.subr.bf16.mxu0 0
        %3094 = vmatpush1.bf16.msra.mxu0 0
        %3095 = vmatprep.subr.bf16.mxu0 0
        %3096 = vmatpush1.bf16.msra.mxu0 0
        %3097 = vmatprep.subr.bf16.mxu0 0
        %3098 = vmatpush1.bf16.msra.mxu0 0
        %3099 = vmatprep.subr.bf16.mxu0 0
        %3100 = vmatpush1.bf16.msra.mxu0 0
        %3101 = vmatprep.subr.bf16.mxu0 0
        %3102 = vmatpush1.bf16.msra.mxu0 0
        %3103 = vmatprep.subr.bf16.mxu0 0
        %3104 = vmatpush1.bf16.msra.mxu0 0
        %3105 = vmatprep.mubr.bf16.mxu0 %v2643
        %3106 = vmatmul.mubr.bf16.gmra.mrb[0].mxu0 %v1118
        %v3107 = vpop.f32.mrb[0].mxu0
        %v3108 = vadd.f32 %v1109, %v3107
        %v3109 = vpop.f32.mrb[0].mxu0
        %v3110 = vadd.f32 %v1109, %v3109
        %v3111 = vpop.f32.mrb[0].mxu0
        %v3112 = vpop.f32.mrb[0].mxu0
        %3113 = vdwg.mxu0
        %3114 = vmatprep.subr.bf16.mxu0 %v2052
        %3115 = vmatpush1.bf16.msra.mxu0 %v2051
        %3116 = vmatprep.subr.bf16.mxu0 %v2084
        %3117 = vmatpush1.bf16.msra.mxu0 %v2083
        %3118 = vmatprep.subr.bf16.mxu0 %v2116
        %3119 = vmatpush1.bf16.msra.mxu0 %v2115
        %3120 = vmatprep.subr.bf16.mxu0 %v2148
        %3121 = vmatpush1.bf16.msra.mxu0 %v2147
        %3122 = vmatprep.subr.bf16.mxu0 %v2180
        %3123 = vmatpush1.bf16.msra.mxu0 %v2179
        %3124 = vmatprep.subr.bf16.mxu0 %v2212
        %3125 = vmatpush1.bf16.msra.mxu0 %v2211
        %3126 = vmatprep.subr.bf16.mxu0 %v2244
        %3127 = vmatpush1.bf16.msra.mxu0 %v2243
        %3128 = vmatprep.subr.bf16.mxu0 %v2276
        %3129 = vmatpush1.bf16.msra.mxu0 %v2275
        %3130 = vmatprep.subr.bf16.mxu0 %v2308
        %3131 = vmatpush1.bf16.msra.mxu0 %v2307
        %3132 = vmatprep.subr.bf16.mxu0 %v2707
        %3133 = vmatpush1.bf16.msra.mxu0 %v2704
        %3134 = vmatprep.subr.bf16.mxu0 0
        %3135 = vmatpush1.bf16.msra.mxu0 0
        %3136 = vmatprep.subr.bf16.mxu0 0
        %3137 = vmatpush1.bf16.msra.mxu0 0
        %3138 = vmatprep.subr.bf16.mxu0 0
        %3139 = vmatpush1.bf16.msra.mxu0 0
        %3140 = vmatprep.subr.bf16.mxu0 0
        %3141 = vmatpush1.bf16.msra.mxu0 0
        %3142 = vmatprep.subr.bf16.mxu0 0
        %3143 = vmatpush1.bf16.msra.mxu0 0
        %3144 = vmatprep.subr.bf16.mxu0 0
        %3145 = vmatpush1.bf16.msra.mxu0 0
        %3146 = vmatprep.mubr.bf16.mxu0 %v2643
        %3147 = vmatmul.mubr.bf16.gmra.mrb[0].mxu0 %v1118
        %v3148 = vpop.f32.mrb[0].mxu0
        %v3149 = vadd.f32 %v1109, %v3148
        %v3150 = vpop.f32.mrb[0].mxu0
        %v3151 = vadd.f32 %v1109, %v3150
        %v3152 = vpop.f32.mrb[0].mxu0
        %v3153 = vpop.f32.mrb[0].mxu0
        %3154 = vdwg.mxu0
        %3155 = vmatprep.subr.bf16.mxu0 %v2054
        %3156 = vmatpush1.bf16.msra.mxu0 %v2053
        %3157 = vmatprep.subr.bf16.mxu0 %v2086
        %3158 = vmatpush1.bf16.msra.mxu0 %v2085
        %3159 = vmatprep.subr.bf16.mxu0 %v2118
        %3160 = vmatpush1.bf16.msra.mxu0 %v2117
        %3161 = vmatprep.subr.bf16.mxu0 %v2150
        %3162 = vmatpush1.bf16.msra.mxu0 %v2149
        %3163 = vmatprep.subr.bf16.mxu0 %v2182
        %3164 = vmatpush1.bf16.msra.mxu0 %v2181
        %3165 = vmatprep.subr.bf16.mxu0 %v2214
        %3166 = vmatpush1.bf16.msra.mxu0 %v2213
        %3167 = vmatprep.subr.bf16.mxu0 %v2246
        %3168 = vmatpush1.bf16.msra.mxu0 %v2245
        %3169 = vmatprep.subr.bf16.mxu0 %v2278
        %3170 = vmatpush1.bf16.msra.mxu0 %v2277
        %3171 = vmatprep.subr.bf16.mxu0 %v2310
        %3172 = vmatpush1.bf16.msra.mxu0 %v2309
        %3173 = vmatprep.subr.bf16.mxu0 %v2713
        %3174 = vmatpush1.bf16.msra.mxu0 %v2710
        %3175 = vmatprep.subr.bf16.mxu0 0
        %3176 = vmatpush1.bf16.msra.mxu0 0
        %3177 = vmatprep.subr.bf16.mxu0 0
        %3178 = vmatpush1.bf16.msra.mxu0 0
        %3179 = vmatprep.subr.bf16.mxu0 0
        %3180 = vmatpush1.bf16.msra.mxu0 0
        %3181 = vmatprep.subr.bf16.mxu0 0
        %3182 = vmatpush1.bf16.msra.mxu0 0
        %3183 = vmatprep.subr.bf16.mxu0 0
        %3184 = vmatpush1.bf16.msra.mxu0 0
        %3185 = vmatprep.subr.bf16.mxu0 0
        %3186 = vmatpush1.bf16.msra.mxu0 0
        %3187 = vmatprep.mubr.bf16.mxu0 %v2643
        %3188 = vmatmul.mubr.bf16.gmra.mrb[0].mxu0 %v1118
        %v3189 = vpop.f32.mrb[0].mxu0
        %v3190 = vadd.f32 %v1109, %v3189
        %v3191 = vpop.f32.mrb[0].mxu0
        %v3192 = vadd.f32 %v1109, %v3191
        %v3193 = vpop.f32.mrb[0].mxu0
        %v3194 = vpop.f32.mrb[0].mxu0
        %3195 = vdwg.mxu0
        %3196 = vmatprep.subr.bf16.mxu0 %v2056
        %3197 = vmatpush1.bf16.msra.mxu0 %v2055
        %3198 = vmatprep.subr.bf16.mxu0 %v2088
        %3199 = vmatpush1.bf16.msra.mxu0 %v2087
        %3200 = vmatprep.subr.bf16.mxu0 %v2120
        %3201 = vmatpush1.bf16.msra.mxu0 %v2119
        %3202 = vmatprep.subr.bf16.mxu0 %v2152
        %3203 = vmatpush1.bf16.msra.mxu0 %v2151
        %3204 = vmatprep.subr.bf16.mxu0 %v2184
        %3205 = vmatpush1.bf16.msra.mxu0 %v2183
        %3206 = vmatprep.subr.bf16.mxu0 %v2216
        %3207 = vmatpush1.bf16.msra.mxu0 %v2215
        %3208 = vmatprep.subr.bf16.mxu0 %v2248
        %3209 = vmatpush1.bf16.msra.mxu0 %v2247
        %3210 = vmatprep.subr.bf16.mxu0 %v2280
        %3211 = vmatpush1.bf16.msra.mxu0 %v2279
        %3212 = vmatprep.subr.bf16.mxu0 %v2312
        %3213 = vmatpush1.bf16.msra.mxu0 %v2311
        %3214 = vmatprep.subr.bf16.mxu0 %v2719
        %3215 = vmatpush1.bf16.msra.mxu0 %v2716
        %3216 = vmatprep.subr.bf16.mxu0 0
        %3217 = vmatpush1.bf16.msra.mxu0 0
        %3218 = vmatprep.subr.bf16.mxu0 0
        %3219 = vmatpush1.bf16.msra.mxu0 0
        %3220 = vmatprep.subr.bf16.mxu0 0
        %3221 = vmatpush1.bf16.msra.mxu0 0
        %3222 = vmatprep.subr.bf16.mxu0 0
        %3223 = vmatpush1.bf16.msra.mxu0 0
        %3224 = vmatprep.subr.bf16.mxu0 0
        %3225 = vmatpush1.bf16.msra.mxu0 0
        %3226 = vmatprep.subr.bf16.mxu0 0
        %3227 = vmatpush1.bf16.msra.mxu0 0
        %3228 = vmatprep.mubr.bf16.mxu0 %v2643
        %3229 = vmatmul.mubr.bf16.gmra.mrb[0].mxu0 %v1118
        %v3230 = vpop.f32.mrb[0].mxu0
        %v3231 = vadd.f32 %v1109, %v3230
        %v3232 = vpop.f32.mrb[0].mxu0
        %v3233 = vadd.f32 %v1109, %v3232
        %v3234 = vpop.f32.mrb[0].mxu0
        %v3235 = vpop.f32.mrb[0].mxu0
        %3236 = vdwg.mxu0
        %3237 = vmatprep.subr.bf16.mxu0 %v2058
        %3238 = vmatpush1.bf16.msra.mxu0 %v2057
        %3239 = vmatprep.subr.bf16.mxu0 %v2090
        %3240 = vmatpush1.bf16.msra.mxu0 %v2089
        %3241 = vmatprep.subr.bf16.mxu0 %v2122
        %3242 = vmatpush1.bf16.msra.mxu0 %v2121
        %3243 = vmatprep.subr.bf16.mxu0 %v2154
        %3244 = vmatpush1.bf16.msra.mxu0 %v2153
        %3245 = vmatprep.subr.bf16.mxu0 %v2186
        %3246 = vmatpush1.bf16.msra.mxu0 %v2185
        %3247 = vmatprep.subr.bf16.mxu0 %v2218
        %3248 = vmatpush1.bf16.msra.mxu0 %v2217
        %3249 = vmatprep.subr.bf16.mxu0 %v2250
        %3250 = vmatpush1.bf16.msra.mxu0 %v2249
        %3251 = vmatprep.subr.bf16.mxu0 %v2282
        %3252 = vmatpush1.bf16.msra.mxu0 %v2281
        %3253 = vmatprep.subr.bf16.mxu0 %v2314
        %3254 = vmatpush1.bf16.msra.mxu0 %v2313
        %3255 = vmatprep.subr.bf16.mxu0 %v2725
        %3256 = vmatpush1.bf16.msra.mxu0 %v2722
        %3257 = vmatprep.subr.bf16.mxu0 0
        %3258 = vmatpush1.bf16.msra.mxu0 0
        %3259 = vmatprep.subr.bf16.mxu0 0
        %3260 = vmatpush1.bf16.msra.mxu0 0
        %3261 = vmatprep.subr.bf16.mxu0 0
        %3262 = vmatpush1.bf16.msra.mxu0 0
        %3263 = vmatprep.subr.bf16.mxu0 0
        %3264 = vmatpush1.bf16.msra.mxu0 0
        %3265 = vmatprep.subr.bf16.mxu0 0
        %3266 = vmatpush1.bf16.msra.mxu0 0
        %3267 = vmatprep.subr.bf16.mxu0 0
        %3268 = vmatpush1.bf16.msra.mxu0 0
        %3269 = vmatprep.mubr.bf16.mxu0 %v2643
        %3270 = vmatmul.mubr.bf16.gmra.mrb[0].mxu0 %v1118
        %v3271 = vpop.f32.mrb[0].mxu0
        %v3272 = vadd.f32 %v1109, %v3271
        %v3273 = vpop.f32.mrb[0].mxu0
        %v3274 = vadd.f32 %v1109, %v3273
        %v3275 = vpop.f32.mrb[0].mxu0
        %v3276 = vpop.f32.mrb[0].mxu0
        %3277 = vdwg.mxu0
        %3278 = vmatprep.subr.bf16.mxu0 %v2060
        %3279 = vmatpush1.bf16.msra.mxu0 %v2059
        %3280 = vmatprep.subr.bf16.mxu0 %v2092
        %3281 = vmatpush1.bf16.msra.mxu0 %v2091
        %3282 = vmatprep.subr.bf16.mxu0 %v2124
        %3283 = vmatpush1.bf16.msra.mxu0 %v2123
        %3284 = vmatprep.subr.bf16.mxu0 %v2156
        %3285 = vmatpush1.bf16.msra.mxu0 %v2155
        %3286 = vmatprep.subr.bf16.mxu0 %v2188
        %3287 = vmatpush1.bf16.msra.mxu0 %v2187
        %3288 = vmatprep.subr.bf16.mxu0 %v2220
        %3289 = vmatpush1.bf16.msra.mxu0 %v2219
        %3290 = vmatprep.subr.bf16.mxu0 %v2252
        %3291 = vmatpush1.bf16.msra.mxu0 %v2251
        %3292 = vmatprep.subr.bf16.mxu0 %v2284
        %3293 = vmatpush1.bf16.msra.mxu0 %v2283
        %3294 = vmatprep.subr.bf16.mxu0 %v2316
        %3295 = vmatpush1.bf16.msra.mxu0 %v2315
        %3296 = vmatprep.subr.bf16.mxu0 %v2731
        %3297 = vmatpush1.bf16.msra.mxu0 %v2728
        %3298 = vmatprep.subr.bf16.mxu0 0
        %3299 = vmatpush1.bf16.msra.mxu0 0
        %3300 = vmatprep.subr.bf16.mxu0 0
        %3301 = vmatpush1.bf16.msra.mxu0 0
        %3302 = vmatprep.subr.bf16.mxu0 0
        %3303 = vmatpush1.bf16.msra.mxu0 0
        %3304 = vmatprep.subr.bf16.mxu0 0
        %3305 = vmatpush1.bf16.msra.mxu0 0
        %3306 = vmatprep.subr.bf16.mxu0 0
        %3307 = vmatpush1.bf16.msra.mxu0 0
        %3308 = vmatprep.subr.bf16.mxu0 0
        %3309 = vmatpush1.bf16.msra.mxu0 0
        %3310 = vmatprep.mubr.bf16.mxu0 %v2643
        %3311 = vmatmul.mubr.bf16.gmra.mrb[0].mxu0 %v1118
        %v3312 = vpop.f32.mrb[0].mxu0
        %v3313 = vadd.f32 %v1109, %v3312
        %v3314 = vpop.f32.mrb[0].mxu0
        %v3315 = vadd.f32 %v1109, %v3314
        %v3316 = vpop.f32.mrb[0].mxu0
        %v3317 = vpop.f32.mrb[0].mxu0
        %3318 = vdwg.mxu0
        %3319 = vmatprep.subr.bf16.mxu0 %v2062
        %3320 = vmatpush1.bf16.msra.mxu0 %v2061
        %3321 = vmatprep.subr.bf16.mxu0 %v2094
        %3322 = vmatpush1.bf16.msra.mxu0 %v2093
        %3323 = vmatprep.subr.bf16.mxu0 %v2126
        %3324 = vmatpush1.bf16.msra.mxu0 %v2125
        %3325 = vmatprep.subr.bf16.mxu0 %v2158
        %3326 = vmatpush1.bf16.msra.mxu0 %v2157
        %3327 = vmatprep.subr.bf16.mxu0 %v2190
        %3328 = vmatpush1.bf16.msra.mxu0 %v2189
        %3329 = vmatprep.subr.bf16.mxu0 %v2222
        %3330 = vmatpush1.bf16.msra.mxu0 %v2221
        %3331 = vmatprep.subr.bf16.mxu0 %v2254
        %3332 = vmatpush1.bf16.msra.mxu0 %v2253
        %3333 = vmatprep.subr.bf16.mxu0 %v2286
        %3334 = vmatpush1.bf16.msra.mxu0 %v2285
        %3335 = vmatprep.subr.bf16.mxu0 %v2318
        %3336 = vmatpush1.bf16.msra.mxu0 %v2317
        %3337 = vmatprep.subr.bf16.mxu0 %v2737
        %3338 = vmatpush1.bf16.msra.mxu0 %v2734
        %3339 = vmatprep.subr.bf16.mxu0 0
        %3340 = vmatpush1.bf16.msra.mxu0 0
        %3341 = vmatprep.subr.bf16.mxu0 0
        %3342 = vmatpush1.bf16.msra.mxu0 0
        %3343 = vmatprep.subr.bf16.mxu0 0
        %3344 = vmatpush1.bf16.msra.mxu0 0
        %3345 = vmatprep.subr.bf16.mxu0 0
        %3346 = vmatpush1.bf16.msra.mxu0 0
        %3347 = vmatprep.subr.bf16.mxu0 0
        %3348 = vmatpush1.bf16.msra.mxu0 0
        %3349 = vmatprep.subr.bf16.mxu0 0
        %3350 = vmatpush1.bf16.msra.mxu0 0
        %3351 = vmatprep.mubr.bf16.mxu0 %v2643
        %3352 = vmatmul.mubr.bf16.gmra.mrb[0].mxu0 %v1118
        %v3353 = vpop.f32.mrb[0].mxu0
        %v3354 = vadd.f32 %v1109, %v3353
        %v3355 = vpop.f32.mrb[0].mxu0
        %v3356 = vadd.f32 %v1109, %v3355
        %v3357 = vpop.f32.mrb[0].mxu0
        %v3358 = vpop.f32.mrb[0].mxu0
        %3359 = vdwg.mxu0
        %3360 = vmatprep.subr.bf16.mxu0 %v2064
        %3361 = vmatpush1.bf16.msra.mxu0 %v2063
        %3362 = vmatprep.subr.bf16.mxu0 %v2096
        %3363 = vmatpush1.bf16.msra.mxu0 %v2095
        %3364 = vmatprep.subr.bf16.mxu0 %v2128
        %3365 = vmatpush1.bf16.msra.mxu0 %v2127
        %3366 = vmatprep.subr.bf16.mxu0 %v2160
        %3367 = vmatpush1.bf16.msra.mxu0 %v2159
        %3368 = vmatprep.subr.bf16.mxu0 %v2192
        %3369 = vmatpush1.bf16.msra.mxu0 %v2191
        %3370 = vmatprep.subr.bf16.mxu0 %v2224
        %3371 = vmatpush1.bf16.msra.mxu0 %v2223
        %3372 = vmatprep.subr.bf16.mxu0 %v2256
        %3373 = vmatpush1.bf16.msra.mxu0 %v2255
        %3374 = vmatprep.subr.bf16.mxu0 %v2288
        %3375 = vmatpush1.bf16.msra.mxu0 %v2287
        %3376 = vmatprep.subr.bf16.mxu0 %v2320
        %3377 = vmatpush1.bf16.msra.mxu0 %v2319
        %3378 = vmatprep.subr.bf16.mxu0 %v2743
        %3379 = vmatpush1.bf16.msra.mxu0 %v2740
        %3380 = vmatprep.subr.bf16.mxu0 0
        %3381 = vmatpush1.bf16.msra.mxu0 0
        %3382 = vmatprep.subr.bf16.mxu0 0
        %3383 = vmatpush1.bf16.msra.mxu0 0
        %3384 = vmatprep.subr.bf16.mxu0 0
        %3385 = vmatpush1.bf16.msra.mxu0 0
        %3386 = vmatprep.subr.bf16.mxu0 0
        %3387 = vmatpush1.bf16.msra.mxu0 0
        %3388 = vmatprep.subr.bf16.mxu0 0
        %3389 = vmatpush1.bf16.msra.mxu0 0
        %3390 = vmatprep.subr.bf16.mxu0 0
        %3391 = vmatpush1.bf16.msra.mxu0 0
        %3392 = vmatprep.mubr.bf16.mxu0 %v2643
        %3393 = vmatmul.mubr.bf16.gmra.mrb[0].mxu0 %v1118
        %v3394 = vpop.f32.mrb[0].mxu0
        %v3395 = vadd.f32 %v1109, %v3394
        %v3396 = vpop.f32.mrb[0].mxu0
        %v3397 = vadd.f32 %v1109, %v3396
        %v3398 = vpop.f32.mrb[0].mxu0
        %v3399 = vpop.f32.mrb[0].mxu0
        %3400 = vdwg.mxu0
        %vm3401 = vcmp.gt.f32.partialorder %v2780, 0.0
        %vm3402 = vcmp.gt.f32.partialorder %v2782, 0.0
        %vm3403 = vcmp.gt.f32.partialorder %v2821, 0.0
        %vm3404 = vcmp.gt.f32.partialorder %v2823, 0.0
        %vm3405 = vcmp.gt.f32.partialorder %v2862, 0.0
        %vm3406 = vcmp.gt.f32.partialorder %v2864, 0.0
        %vm3407 = vcmp.gt.f32.partialorder %v2903, 0.0
        %vm3408 = vcmp.gt.f32.partialorder %v2905, 0.0
        %vm3409 = vcmp.gt.f32.partialorder %v2944, 0.0
        %vm3410 = vcmp.gt.f32.partialorder %v2946, 0.0
        %vm3411 = vcmp.gt.f32.partialorder %v2985, 0.0
        %vm3412 = vcmp.gt.f32.partialorder %v2987, 0.0
        %vm3413 = vcmp.gt.f32.partialorder %v3026, 0.0
        %vm3414 = vcmp.gt.f32.partialorder %v3028, 0.0
        %vm3415 = vcmp.gt.f32.partialorder %v3067, 0.0
        %vm3416 = vcmp.gt.f32.partialorder %v3069, 0.0
        %vm3417 = vcmp.gt.f32.partialorder %v3108, 0.0
        %vm3418 = vcmp.gt.f32.partialorder %v3110, 0.0
        %vm3419 = vcmp.gt.f32.partialorder %v3149, 0.0
        %vm3420 = vcmp.gt.f32.partialorder %v3151, 0.0
        %vm3421 = vcmp.gt.f32.partialorder %v3190, 0.0
        %vm3422 = vcmp.gt.f32.partialorder %v3192, 0.0
        %vm3423 = vcmp.gt.f32.partialorder %v3231, 0.0
        %vm3424 = vcmp.gt.f32.partialorder %v3233, 0.0
        %vm3425 = vcmp.gt.f32.partialorder %v3272, 0.0
        %vm3426 = vcmp.gt.f32.partialorder %v3274, 0.0
        %vm3427 = vcmp.gt.f32.partialorder %v3313, 0.0
        %vm3428 = vcmp.gt.f32.partialorder %v3315, 0.0
        %vm3429 = vcmp.gt.f32.partialorder %v3354, 0.0
        %vm3430 = vcmp.gt.f32.partialorder %v3356, 0.0
        %vm3431 = vcmp.gt.f32.partialorder %v3395, 0.0
        %vm3432 = vcmp.gt.f32.partialorder %v3397, 0.0
        %v3433 = vmul.f32 %v2780, 0.2
        %v3434 = vmul.f32 %v2782, 0.2
        %v3435 = vmul.f32 %v2821, 0.2
        %v3436 = vmul.f32 %v2823, 0.2
        %v3437 = vmul.f32 %v2862, 0.2
        %v3438 = vmul.f32 %v2864, 0.2
        %v3439 = vmul.f32 %v2903, 0.2
        %v3440 = vmul.f32 %v2905, 0.2
        %v3441 = vmul.f32 %v2944, 0.2
        %v3442 = vmul.f32 %v2946, 0.2
        %v3443 = vmul.f32 %v2985, 0.2
        %v3444 = vmul.f32 %v2987, 0.2
        %v3445 = vmul.f32 %v3026, 0.2
        %v3446 = vmul.f32 %v3028, 0.2
        %v3447 = vmul.f32 %v3067, 0.2
        %v3448 = vmul.f32 %v3069, 0.2
        %v3449 = vmul.f32 %v3108, 0.2
        %v3450 = vmul.f32 %v3110, 0.2
        %v3451 = vmul.f32 %v3149, 0.2
        %v3452 = vmul.f32 %v3151, 0.2
        %v3453 = vmul.f32 %v3190, 0.2
        %v3454 = vmul.f32 %v3192, 0.2
        %v3455 = vmul.f32 %v3231, 0.2
        %v3456 = vmul.f32 %v3233, 0.2
        %v3457 = vmul.f32 %v3272, 0.2
        %v3458 = vmul.f32 %v3274, 0.2
        %v3459 = vmul.f32 %v3313, 0.2
        %v3460 = vmul.f32 %v3315, 0.2
        %v3461 = vmul.f32 %v3354, 0.2
        %v3462 = vmul.f32 %v3356, 0.2
        %v3463 = vmul.f32 %v3395, 0.2
        %v3464 = vmul.f32 %v3397, 0.2
        %v3465 = vsel %vm3401, %v2780, %v3433
        %v3466 = vsel %vm3402, %v2782, %v3434
        %v3467 = vsel %vm3403, %v2821, %v3435
        %v3468 = vsel %vm3404, %v2823, %v3436
        %v3469 = vsel %vm3405, %v2862, %v3437
        %v3470 = vsel %vm3406, %v2864, %v3438
        %v3471 = vsel %vm3407, %v2903, %v3439
        %v3472 = vsel %vm3408, %v2905, %v3440
        %v3473 = vsel %vm3409, %v2944, %v3441
        %v3474 = vsel %vm3410, %v2946, %v3442
        %v3475 = vsel %vm3411, %v2985, %v3443
        %v3476 = vsel %vm3412, %v2987, %v3444
        %v3477 = vsel %vm3413, %v3026, %v3445
        %v3478 = vsel %vm3414, %v3028, %v3446
        %v3479 = vsel %vm3415, %v3067, %v3447
        %v3480 = vsel %vm3416, %v3069, %v3448
        %v3481 = vsel %vm3417, %v3108, %v3449
        %v3482 = vsel %vm3418, %v3110, %v3450
        %v3483 = vsel %vm3419, %v3149, %v3451
        %v3484 = vsel %vm3420, %v3151, %v3452
        %v3485 = vsel %vm3421, %v3190, %v3453
        %v3486 = vsel %vm3422, %v3192, %v3454
        %v3487 = vsel %vm3423, %v3231, %v3455
        %v3488 = vsel %vm3424, %v3233, %v3456
        %v3489 = vsel %vm3425, %v3272, %v3457
        %v3490 = vsel %vm3426, %v3274, %v3458
        %v3491 = vsel %vm3427, %v3313, %v3459
        %v3492 = vsel %vm3428, %v3315, %v3460
        %v3493 = vsel %vm3429, %v3354, %v3461
        %v3494 = vsel %vm3430, %v3356, %v3462
        %v3495 = vsel %vm3431, %v3395, %v3463
        %v3496 = vsel %vm3432, %v3397, %v3464
        %v3529 = vcombine.low %v3465, %v3466
        %v3530 = vcombine.low %v3467, %v3468
        %v3531 = vcombine.low %v3469, %v3470
        %v3532 = vcombine.low %v3471, %v3472
        %v3533 = vcombine.low %v3473, %v3474
        %v3534 = vcombine.low %v3475, %v3476
        %v3535 = vcombine.low %v3477, %v3478
        %v3536 = vcombine.low %v3479, %v3480
        %v3537 = vcombine.low %v3481, %v3482
        %v3538 = vcombine.low %v3483, %v3484
        %v3539 = vcombine.low %v3485, %v3486
        %v3540 = vcombine.low %v3487, %v3488
        %v3541 = vcombine.low %v3489, %v3490
        %v3542 = vcombine.low %v3491, %v3492
        %v3543 = vcombine.low %v3493, %v3494
        %v3544 = vcombine.low %v3495, %v3496
        %3561 = vst [vmem:[%s797] sm:$0xff] %v3529
        %3562 = vst [vmem:[%s797 + $0x8] sm:$0xff] %v3530
        %3563 = vst [vmem:[%s797 + $0x10] sm:$0xff] %v3531
        %3564 = vst [vmem:[%s797 + $0x18] sm:$0xff] %v3532
        %3565 = vst [vmem:[%s797 + $0x20] sm:$0xff] %v3533
        %3566 = vst [vmem:[%s797 + $0x28] sm:$0xff] %v3534
        %3567 = vst [vmem:[%s797 + $0x30] sm:$0xff] %v3535
        %3568 = vst [vmem:[%s797 + $0x38] sm:$0xff] %v3536
        %3569 = vst [vmem:[%s797 + $0x40] sm:$0xff] %v3537
        %3570 = vst [vmem:[%s797 + $0x48] sm:$0xff] %v3538
        %3571 = vst [vmem:[%s797 + $0x50] sm:$0xff] %v3539
        %3572 = vst [vmem:[%s797 + $0x58] sm:$0xff] %v3540
        %3573 = vst [vmem:[%s797 + $0x60] sm:$0xff] %v3541
        %3574 = vst [vmem:[%s797 + $0x68] sm:$0xff] %v3542
        %3575 = vst [vmem:[%s797 + $0x70] sm:$0xff] %v3543
        %3576 = vst [vmem:[%s797 + $0x78] sm:$0xff] %v3544
        %s3577 = smul.u32 32, %s14
        %p3578 = scmp.lt.s32.totalorder %s3577, 63
        %s3579 = scalar_select %p3578, %s3577, 63
        %s3580 = smul.addr %s3579, 4
        %s3581 = scalar_lea.vmem %s3, %s3580
        // Predicated region
        $region56: #{patch_discriminate_2.6} parent=50 // pred_check
          %p3582 = pneg %p100
        $region57: #{patch_discriminate_2.6} parent=50 // pred_check_branch
          %3584 = sbr.rel (%p3582) target = $region59
        $region58: #{patch_discriminate_2.6} parent=50 // pred_region
          %s3585 = smul.u32 32, %s14
        $region59: #{patch_discriminate_2.6} parent=50 // pred_fallthru
          _
      $region51: #{patch_discriminate_2.6} parent=5 // pred_fallthru
        _
      %p3586 = scmp.le.s32.totalorder 2, %s9
      // Predicated region
      $region60: #{patch_discriminate_2.6} parent=5 // pred_check
        %p3587 = pneg %p3586
      $region61: #{patch_discriminate_2.6} parent=5 // pred_check_branch
        %3589 = sbr.rel (%p3587) target = $region63
      $region62: #{patch_discriminate_2.6} parent=5 // pred_region
        %s3590 = ssub.s32 %s9, 2
        // Predicated region
        $region64: #{patch_discriminate_2.6} parent=62 // pred_check
          %p3591 = pneg %p106
        $region65: #{patch_discriminate_2.6} parent=62 // pred_check_branch
          %3593 = sbr.rel (%p3591) target = $region67
        $region66: #{patch_discriminate_2.6} parent=62 // pred_region
          %s3594 = smul.u32 32, %s15
          %p3595 = scmp.lt.s32.totalorder %s3594, 63
          %s3596 = scalar_select %p3595, %s3594, 63
          %s3597 = smul.addr %s3596, 4
          %s3598 = scalar_lea.vmem %s3, %s3597
        $region67: #{patch_discriminate_2.6} parent=62 // pred_fallthru
          _
      $region63: #{patch_discriminate_2.6} parent=5 // pred_fallthru
        _
    $region6: #{patch_discriminate_2.6} parent=1 // loop_footer
      %s13 = sadd.s32 1, %s9
    $region7: #{patch_discriminate_2.6} parent=1 // loop_footer_branch
      %8 = sbr.rel target = $region3
    $region8: #{patch_discriminate_2.6} parent=1 // loop_exit
      _

// kernel: patch_discriminate_2.7
$region0: #{patch_discriminate_2.7}
  #allocation0 [shape = 'u32[]', space=smem, size = 0x4, offset = 0x4, fixed_abs, tag = 'smem constant byte address 0x4 - core index']
  #allocation1 [shape = 'u32[144,128]{1,0:T(1,128)}', space=vmem, size = 0x12000, scoped, tag = 'internal scratch']
  %s0 = inlined_call_operand.vmem [shape: bf16[8,64], index: 0, kind: input, shape index: {}]
  %s1 = inlined_call_operand.vmem [shape: bf16[64,2048], index: 1, kind: input, shape index: {}]
  %s2 = inlined_call_operand.vmem [shape: f32[8,1], index: 2, kind: input, shape index: {}]
  %s3 = inlined_call_operand.vmem [shape: f32[8,2048], index: 3, kind: output, shape index: {}]
  %s4 = sld [smem:[#allocation0]]
  $region22: #{patch_discriminate_2.7} parent=0
    _
  %s6 = ssub.s32 1, %s4
  %s7 = scalar_select 0, %s6, %s4
  // Predicated region
  $region2: #{patch_discriminate_2.7} parent=0 // pred_check
    _
  $region3: #{patch_discriminate_2.7} parent=0 // pred_check_branch
    %9 = sbr.rel (0) target = $region5
  $region4: #{patch_discriminate_2.7} parent=0 // pred_region
    _
  $region5: #{patch_discriminate_2.7} parent=0 // pred_fallthru
    _
  // Predicated region
  $region6: #{patch_discriminate_2.7} parent=0 // pred_check
    _
  $region7: #{patch_discriminate_2.7} parent=0 // pred_check_branch
    %11 = sbr.rel (0) target = $region9
  $region8: #{patch_discriminate_2.7} parent=0 // pred_region
    _
  $region9: #{patch_discriminate_2.7} parent=0 // pred_fallthru
    _
  // Predicated region
  $region10: #{patch_discriminate_2.7} parent=0 // pred_check
    _
  $region11: #{patch_discriminate_2.7} parent=0 // pred_check_branch
    %13 = sbr.rel (0) target = $region13
  $region12: #{patch_discriminate_2.7} parent=0 // pred_region
    _
  $region13: #{patch_discriminate_2.7} parent=0 // pred_fallthru
    _
  %v15 = vld [vmem:[%s0] sm:$0xf]
  %v16 = vld [vmem:[%s1] sm:$0xff]
  %v17 = vld [vmem:[%s1 + $0x8] sm:$0xff]
  %v18 = vld [vmem:[%s1 + $0x10] sm:$0xff]
  %v19 = vld [vmem:[%s1 + $0x18] sm:$0xff]
  %v20 = vld [vmem:[%s1 + $0x20] sm:$0xff]
  %v21 = vld [vmem:[%s1 + $0x28] sm:$0xff]
  %v22 = vld [vmem:[%s1 + $0x30] sm:$0xff]
  %v23 = vld [vmem:[%s1 + $0x38] sm:$0xff]
  %v24 = vld [vmem:[%s1 + $0x40] sm:$0xff]
  %v25 = vld [vmem:[%s1 + $0x48] sm:$0xff]
  %v26 = vld [vmem:[%s1 + $0x50] sm:$0xff]
  %v27 = vld [vmem:[%s1 + $0x58] sm:$0xff]
  %v28 = vld [vmem:[%s1 + $0x60] sm:$0xff]
  %v29 = vld [vmem:[%s1 + $0x68] sm:$0xff]
  %v30 = vld [vmem:[%s1 + $0x70] sm:$0xff]
  %v31 = vld [vmem:[%s1 + $0x78] sm:$0xff]
  %v32 = vld [vmem:[%s1 + $0x80] sm:$0xff]
  %v33 = vld [vmem:[%s1 + $0x88] sm:$0xff]
  %v34 = vld [vmem:[%s1 + $0x90] sm:$0xff]
  %v35 = vld [vmem:[%s1 + $0x98] sm:$0xff]
  %v36 = vld [vmem:[%s1 + $0xa0] sm:$0xff]
  %v37 = vld [vmem:[%s1 + $0xa8] sm:$0xff]
  %v38 = vld [vmem:[%s1 + $0xb0] sm:$0xff]
  %v39 = vld [vmem:[%s1 + $0xb8] sm:$0xff]
  %v40 = vld [vmem:[%s1 + $0xc0] sm:$0xff]
  %v41 = vld [vmem:[%s1 + $0xc8] sm:$0xff]
  %v42 = vld [vmem:[%s1 + $0xd0] sm:$0xff]
  %v43 = vld [vmem:[%s1 + $0xd8] sm:$0xff]
  %v44 = vld [vmem:[%s1 + $0xe0] sm:$0xff]
  %v45 = vld [vmem:[%s1 + $0xe8] sm:$0xff]
  %v46 = vld [vmem:[%s1 + $0xf0] sm:$0xff]
  %v47 = vld [vmem:[%s1 + $0xf8] sm:$0xff]
  %v48 = vld [vmem:[%s1 + $0x100] sm:$0xff]
  %v49 = vld [vmem:[%s1 + $0x108] sm:$0xff]
  %v50 = vld [vmem:[%s1 + $0x110] sm:$0xff]
  %v51 = vld [vmem:[%s1 + $0x118] sm:$0xff]
  %v52 = vld [vmem:[%s1 + $0x120] sm:$0xff]
  %v53 = vld [vmem:[%s1 + $0x128] sm:$0xff]
  %v54 = vld [vmem:[%s1 + $0x130] sm:$0xff]
  %v55 = vld [vmem:[%s1 + $0x138] sm:$0xff]
  %v56 = vld [vmem:[%s1 + $0x140] sm:$0xff]
  %v57 = vld [vmem:[%s1 + $0x148] sm:$0xff]
  %v58 = vld [vmem:[%s1 + $0x150] sm:$0xff]
  %v59 = vld [vmem:[%s1 + $0x158] sm:$0xff]
  %v60 = vld [vmem:[%s1 + $0x160] sm:$0xff]
  %v61 = vld [vmem:[%s1 + $0x168] sm:$0xff]
  %v62 = vld [vmem:[%s1 + $0x170] sm:$0xff]
  %v63 = vld [vmem:[%s1 + $0x178] sm:$0xff]
  %v64 = vld [vmem:[%s1 + $0x180] sm:$0xff]
  %v65 = vld [vmem:[%s1 + $0x188] sm:$0xff]
  %v66 = vld [vmem:[%s1 + $0x190] sm:$0xff]
  %v67 = vld [vmem:[%s1 + $0x198] sm:$0xff]
  %v68 = vld [vmem:[%s1 + $0x1a0] sm:$0xff]
  %v69 = vld [vmem:[%s1 + $0x1a8] sm:$0xff]
  %v70 = vld [vmem:[%s1 + $0x1b0] sm:$0xff]
  %v71 = vld [vmem:[%s1 + $0x1b8] sm:$0xff]
  %v72 = vld [vmem:[%s1 + $0x1c0] sm:$0xff]
  %v73 = vld [vmem:[%s1 + $0x1c8] sm:$0xff]
  %v74 = vld [vmem:[%s1 + $0x1d0] sm:$0xff]
  %v75 = vld [vmem:[%s1 + $0x1d8] sm:$0xff]
  %v76 = vld [vmem:[%s1 + $0x1e0] sm:$0xff]
  %v77 = vld [vmem:[%s1 + $0x1e8] sm:$0xff]
  %v78 = vld [vmem:[%s1 + $0x1f0] sm:$0xff]
  %v79 = vld [vmem:[%s1 + $0x1f8] sm:$0xff]
  %v80 = vld [vmem:[%s2] sm:$0xff]
  %82 = vset.pattern.permute.xlu0 0
  %83 = vperm.xlu0 %82, %v80
  %v84 = vpop.permute.xlu0 %83
  %v150 = vunpack.c.l.b16 %v16
  %v151 = vunpack.c.h.b16 %v16
  %v152 = vunpack.c.l.b16 %v17
  %v153 = vunpack.c.h.b16 %v17
  %v154 = vunpack.c.l.b16 %v18
  %v155 = vunpack.c.h.b16 %v18
  %v156 = vunpack.c.l.b16 %v19
  %v157 = vunpack.c.h.b16 %v19
  %v158 = vunpack.c.l.b16 %v20
  %v159 = vunpack.c.h.b16 %v20
  %v160 = vunpack.c.l.b16 %v21
  %v161 = vunpack.c.h.b16 %v21
  %v162 = vunpack.c.l.b16 %v22
  %v163 = vunpack.c.h.b16 %v22
  %v164 = vunpack.c.l.b16 %v23
  %v165 = vunpack.c.h.b16 %v23
  %v166 = vunpack.c.l.b16 %v24
  %v167 = vunpack.c.h.b16 %v24
  %v168 = vunpack.c.l.b16 %v25
  %v169 = vunpack.c.h.b16 %v25
  %v170 = vunpack.c.l.b16 %v26
  %v171 = vunpack.c.h.b16 %v26
  %v172 = vunpack.c.l.b16 %v27
  %v173 = vunpack.c.h.b16 %v27
  %v174 = vunpack.c.l.b16 %v28
  %v175 = vunpack.c.h.b16 %v28
  %v176 = vunpack.c.l.b16 %v29
  %v177 = vunpack.c.h.b16 %v29
  %v178 = vunpack.c.l.b16 %v30
  %v179 = vunpack.c.h.b16 %v30
  %v180 = vunpack.c.l.b16 %v31
  %v181 = vunpack.c.h.b16 %v31
  %v182 = vunpack.c.l.b16 %v32
  %v183 = vunpack.c.h.b16 %v32
  %v184 = vunpack.c.l.b16 %v33
  %v185 = vunpack.c.h.b16 %v33
  %v186 = vunpack.c.l.b16 %v34
  %v187 = vunpack.c.h.b16 %v34
  %v188 = vunpack.c.l.b16 %v35
  %v189 = vunpack.c.h.b16 %v35
  %v190 = vunpack.c.l.b16 %v36
  %v191 = vunpack.c.h.b16 %v36
  %v192 = vunpack.c.l.b16 %v37
  %v193 = vunpack.c.h.b16 %v37
  %v194 = vunpack.c.l.b16 %v38
  %v195 = vunpack.c.h.b16 %v38
  %v196 = vunpack.c.l.b16 %v39
  %v197 = vunpack.c.h.b16 %v39
  %v198 = vunpack.c.l.b16 %v40
  %v199 = vunpack.c.h.b16 %v40
  %v200 = vunpack.c.l.b16 %v41
  %v201 = vunpack.c.h.b16 %v41
  %v202 = vunpack.c.l.b16 %v42
  %v203 = vunpack.c.h.b16 %v42
  %v204 = vunpack.c.l.b16 %v43
  %v205 = vunpack.c.h.b16 %v43
  %v206 = vunpack.c.l.b16 %v44
  %v207 = vunpack.c.h.b16 %v44
  %v208 = vunpack.c.l.b16 %v45
  %v209 = vunpack.c.h.b16 %v45
  %v210 = vunpack.c.l.b16 %v46
  %v211 = vunpack.c.h.b16 %v46
  %v212 = vunpack.c.l.b16 %v47
  %v213 = vunpack.c.h.b16 %v47
  %v214 = vunpack.c.l.b16 %v48
  %v215 = vunpack.c.h.b16 %v48
  %v216 = vunpack.c.l.b16 %v49
  %v217 = vunpack.c.h.b16 %v49
  %v218 = vunpack.c.l.b16 %v50
  %v219 = vunpack.c.h.b16 %v50
  %v220 = vunpack.c.l.b16 %v51
  %v221 = vunpack.c.h.b16 %v51
  %v222 = vunpack.c.l.b16 %v52
  %v223 = vunpack.c.h.b16 %v52
  %v224 = vunpack.c.l.b16 %v53
  %v225 = vunpack.c.h.b16 %v53
  %v226 = vunpack.c.l.b16 %v54
  %v227 = vunpack.c.h.b16 %v54
  %v228 = vunpack.c.l.b16 %v55
  %v229 = vunpack.c.h.b16 %v55
  %v230 = vunpack.c.l.b16 %v56
  %v231 = vunpack.c.h.b16 %v56
  %v232 = vunpack.c.l.b16 %v57
  %v233 = vunpack.c.h.b16 %v57
  %v234 = vunpack.c.l.b16 %v58
  %v235 = vunpack.c.h.b16 %v58
  %v236 = vunpack.c.l.b16 %v59
  %v237 = vunpack.c.h.b16 %v59
  %v238 = vunpack.c.l.b16 %v60
  %v239 = vunpack.c.h.b16 %v60
  %v240 = vunpack.c.l.b16 %v61
  %v241 = vunpack.c.h.b16 %v61
  %v242 = vunpack.c.l.b16 %v62
  %v243 = vunpack.c.h.b16 %v62
  %v244 = vunpack.c.l.b16 %v63
  %v245 = vunpack.c.h.b16 %v63
  %v246 = vunpack.c.l.b16 %v64
  %v247 = vunpack.c.h.b16 %v64
  %v248 = vunpack.c.l.b16 %v65
  %v249 = vunpack.c.h.b16 %v65
  %v250 = vunpack.c.l.b16 %v66
  %v251 = vunpack.c.h.b16 %v66
  %v252 = vunpack.c.l.b16 %v67
  %v253 = vunpack.c.h.b16 %v67
  %v254 = vunpack.c.l.b16 %v68
  %v255 = vunpack.c.h.b16 %v68
  %v256 = vunpack.c.l.b16 %v69
  %v257 = vunpack.c.h.b16 %v69
  %v258 = vunpack.c.l.b16 %v70
  %v259 = vunpack.c.h.b16 %v70
  %v260 = vunpack.c.l.b16 %v71
  %v261 = vunpack.c.h.b16 %v71
  %v262 = vunpack.c.l.b16 %v72
  %v263 = vunpack.c.h.b16 %v72
  %v264 = vunpack.c.l.b16 %v73
  %v265 = vunpack.c.h.b16 %v73
  %v266 = vunpack.c.l.b16 %v74
  %v267 = vunpack.c.h.b16 %v74
  %v268 = vunpack.c.l.b16 %v75
  %v269 = vunpack.c.h.b16 %v75
  %v270 = vunpack.c.l.b16 %v76
  %v271 = vunpack.c.h.b16 %v76
  %v272 = vunpack.c.l.b16 %v77
  %v273 = vunpack.c.h.b16 %v77
  %v274 = vunpack.c.l.b16 %v78
  %v275 = vunpack.c.h.b16 %v78
  %v276 = vunpack.c.l.b16 %v79
  %v277 = vunpack.c.h.b16 %v79
  %v278 = vpack.c.b16 %v166, %v150
  %v279 = vpack.c.b16 %v167, %v151
  %v280 = vpack.c.b16 %v168, %v152
  %v281 = vpack.c.b16 %v169, %v153
  %v282 = vpack.c.b16 %v170, %v154
  %v283 = vpack.c.b16 %v171, %v155
  %v284 = vpack.c.b16 %v172, %v156
  %v285 = vpack.c.b16 %v173, %v157
  %v286 = vpack.c.b16 %v174, %v158
  %v287 = vpack.c.b16 %v175, %v159
  %v288 = vpack.c.b16 %v176, %v160
  %v289 = vpack.c.b16 %v177, %v161
  %v290 = vpack.c.b16 %v178, %v162
  %v291 = vpack.c.b16 %v179, %v163
  %v292 = vpack.c.b16 %v180, %v164
  %v293 = vpack.c.b16 %v181, %v165
  %v294 = vpack.c.b16 %v198, %v182
  %v295 = vpack.c.b16 %v199, %v183
  %v296 = vpack.c.b16 %v200, %v184
  %v297 = vpack.c.b16 %v201, %v185
  %v298 = vpack.c.b16 %v202, %v186
  %v299 = vpack.c.b16 %v203, %v187
  %v300 = vpack.c.b16 %v204, %v188
  %v301 = vpack.c.b16 %v205, %v189
  %v302 = vpack.c.b16 %v206, %v190
  %v303 = vpack.c.b16 %v207, %v191
  %v304 = vpack.c.b16 %v208, %v192
  %v305 = vpack.c.b16 %v209, %v193
  %v306 = vpack.c.b16 %v210, %v194
  %v307 = vpack.c.b16 %v211, %v195
  %v308 = vpack.c.b16 %v212, %v196
  %v309 = vpack.c.b16 %v213, %v197
  %v310 = vpack.c.b16 %v230, %v214
  %v311 = vpack.c.b16 %v231, %v215
  %v312 = vpack.c.b16 %v232, %v216
  %v313 = vpack.c.b16 %v233, %v217
  %v314 = vpack.c.b16 %v234, %v218
  %v315 = vpack.c.b16 %v235, %v219
  %v316 = vpack.c.b16 %v236, %v220
  %v317 = vpack.c.b16 %v237, %v221
  %v318 = vpack.c.b16 %v238, %v222
  %v319 = vpack.c.b16 %v239, %v223
  %v320 = vpack.c.b16 %v240, %v224
  %v321 = vpack.c.b16 %v241, %v225
  %v322 = vpack.c.b16 %v242, %v226
  %v323 = vpack.c.b16 %v243, %v227
  %v324 = vpack.c.b16 %v244, %v228
  %v325 = vpack.c.b16 %v245, %v229
  %v326 = vpack.c.b16 %v262, %v246
  %v327 = vpack.c.b16 %v263, %v247
  %v328 = vpack.c.b16 %v264, %v248
  %v329 = vpack.c.b16 %v265, %v249
  %v330 = vpack.c.b16 %v266, %v250
  %v331 = vpack.c.b16 %v267, %v251
  %v332 = vpack.c.b16 %v268, %v252
  %v333 = vpack.c.b16 %v269, %v253
  %v334 = vpack.c.b16 %v270, %v254
  %v335 = vpack.c.b16 %v271, %v255
  %v336 = vpack.c.b16 %v272, %v256
  %v337 = vpack.c.b16 %v273, %v257
  %v338 = vpack.c.b16 %v274, %v258
  %v339 = vpack.c.b16 %v275, %v259
  %v340 = vpack.c.b16 %v276, %v260
  %v341 = vpack.c.b16 %v277, %v261
  %vm406 = vcmask 523264
  %v408 = vsel %vm406, %v15, 0
  %410 = vmatprep.subr.bf16.mxu0 %v279
  %411 = vmatpush1.bf16.msra.mxu0 %v278
  %412 = vmatprep.subr.bf16.mxu0 %v295
  %413 = vmatpush1.bf16.msra.mxu0 %v294
  %414 = vmatprep.subr.bf16.mxu0 %v311
  %415 = vmatpush1.bf16.msra.mxu0 %v310
  %416 = vmatprep.subr.bf16.mxu0 %v327
  %417 = vmatpush1.bf16.msra.mxu0 %v326
  %418 = vmatprep.subr.bf16.mxu0 0
  %419 = vmatpush1.bf16.msra.mxu0 0
  %420 = vmatprep.subr.bf16.mxu0 0
  %421 = vmatpush1.bf16.msra.mxu0 0
  %422 = vmatprep.subr.bf16.mxu0 0
  %423 = vmatpush1.bf16.msra.mxu0 0
  %424 = vmatprep.subr.bf16.mxu0 0
  %425 = vmatpush1.bf16.msra.mxu0 0
  %426 = vmatprep.subr.bf16.mxu0 0
  %427 = vmatpush1.bf16.msra.mxu0 0
  %428 = vmatprep.subr.bf16.mxu0 0
  %429 = vmatpush1.bf16.msra.mxu0 0
  %430 = vmatprep.subr.bf16.mxu0 0
  %431 = vmatpush1.bf16.msra.mxu0 0
  %432 = vmatprep.subr.bf16.mxu0 0
  %433 = vmatpush1.bf16.msra.mxu0 0
  %434 = vmatprep.subr.bf16.mxu0 0
  %435 = vmatpush1.bf16.msra.mxu0 0
  %436 = vmatprep.subr.bf16.mxu0 0
  %437 = vmatpush1.bf16.msra.mxu0 0
  %438 = vmatprep.subr.bf16.mxu0 0
  %439 = vmatpush1.bf16.msra.mxu0 0
  %440 = vmatprep.subr.bf16.mxu0 0
  %441 = vmatpush1.bf16.msra.mxu0 0
  %442 = vmatprep.mubr.bf16.mxu0 0
  %443 = vmatmul.mubr.bf16.gmra.mrb[0].mxu0 %v408
  %v444 = vpop.f32.mrb[0].mxu0
  %v445 = vadd.f32 %v84, %v444
  %v446 = vpop.f32.mrb[0].mxu0
  %v447 = vadd.f32 %v84, %v446
  %v448 = vpop.f32.mrb[0].mxu0
  %v449 = vpop.f32.mrb[0].mxu0
  %450 = vdwg.mxu0
  %451 = vmatprep.subr.bf16.mxu0 %v281
  %452 = vmatpush1.bf16.msra.mxu0 %v280
  %453 = vmatprep.subr.bf16.mxu0 %v297
  %454 = vmatpush1.bf16.msra.mxu0 %v296
  %455 = vmatprep.subr.bf16.mxu0 %v313
  %456 = vmatpush1.bf16.msra.mxu0 %v312
  %457 = vmatprep.subr.bf16.mxu0 %v329
  %458 = vmatpush1.bf16.msra.mxu0 %v328
  %459 = vmatprep.subr.bf16.mxu0 0
  %460 = vmatpush1.bf16.msra.mxu0 0
  %461 = vmatprep.subr.bf16.mxu0 0
  %462 = vmatpush1.bf16.msra.mxu0 0
  %463 = vmatprep.subr.bf16.mxu0 0
  %464 = vmatpush1.bf16.msra.mxu0 0
  %465 = vmatprep.subr.bf16.mxu0 0
  %466 = vmatpush1.bf16.msra.mxu0 0
  %467 = vmatprep.subr.bf16.mxu0 0
  %468 = vmatpush1.bf16.msra.mxu0 0
  %469 = vmatprep.subr.bf16.mxu0 0
  %470 = vmatpush1.bf16.msra.mxu0 0
  %471 = vmatprep.subr.bf16.mxu0 0
  %472 = vmatpush1.bf16.msra.mxu0 0
  %473 = vmatprep.subr.bf16.mxu0 0
  %474 = vmatpush1.bf16.msra.mxu0 0
  %475 = vmatprep.subr.bf16.mxu0 0
  %476 = vmatpush1.bf16.msra.mxu0 0
  %477 = vmatprep.subr.bf16.mxu0 0
  %478 = vmatpush1.bf16.msra.mxu0 0
  %479 = vmatprep.subr.bf16.mxu0 0
  %480 = vmatpush1.bf16.msra.mxu0 0
  %481 = vmatprep.subr.bf16.mxu0 0
  %482 = vmatpush1.bf16.msra.mxu0 0
  %483 = vmatprep.mubr.bf16.mxu0 0
  %484 = vmatmul.mubr.bf16.gmra.mrb[0].mxu0 %v408
  %v485 = vpop.f32.mrb[0].mxu0
  %v486 = vadd.f32 %v84, %v485
  %v487 = vpop.f32.mrb[0].mxu0
  %v488 = vadd.f32 %v84, %v487
  %v489 = vpop.f32.mrb[0].mxu0
  %v490 = vpop.f32.mrb[0].mxu0
  %491 = vdwg.mxu0
  %492 = vmatprep.subr.bf16.mxu0 %v283
  %493 = vmatpush1.bf16.msra.mxu0 %v282
  %494 = vmatprep.subr.bf16.mxu0 %v299
  %495 = vmatpush1.bf16.msra.mxu0 %v298
  %496 = vmatprep.subr.bf16.mxu0 %v315
  %497 = vmatpush1.bf16.msra.mxu0 %v314
  %498 = vmatprep.subr.bf16.mxu0 %v331
  %499 = vmatpush1.bf16.msra.mxu0 %v330
  %500 = vmatprep.subr.bf16.mxu0 0
  %501 = vmatpush1.bf16.msra.mxu0 0
  %502 = vmatprep.subr.bf16.mxu0 0
  %503 = vmatpush1.bf16.msra.mxu0 0
  %504 = vmatprep.subr.bf16.mxu0 0
  %505 = vmatpush1.bf16.msra.mxu0 0
  %506 = vmatprep.subr.bf16.mxu0 0
  %507 = vmatpush1.bf16.msra.mxu0 0
  %508 = vmatprep.subr.bf16.mxu0 0
  %509 = vmatpush1.bf16.msra.mxu0 0
  %510 = vmatprep.subr.bf16.mxu0 0
  %511 = vmatpush1.bf16.msra.mxu0 0
  %512 = vmatprep.subr.bf16.mxu0 0
  %513 = vmatpush1.bf16.msra.mxu0 0
  %514 = vmatprep.subr.bf16.mxu0 0
  %515 = vmatpush1.bf16.msra.mxu0 0
  %516 = vmatprep.subr.bf16.mxu0 0
  %517 = vmatpush1.bf16.msra.mxu0 0
  %518 = vmatprep.subr.bf16.mxu0 0
  %519 = vmatpush1.bf16.msra.mxu0 0
  %520 = vmatprep.subr.bf16.mxu0 0
  %521 = vmatpush1.bf16.msra.mxu0 0
  %522 = vmatprep.subr.bf16.mxu0 0
  %523 = vmatpush1.bf16.msra.mxu0 0
  %524 = vmatprep.mubr.bf16.mxu0 0
  %525 = vmatmul.mubr.bf16.gmra.mrb[0].mxu0 %v408
  %v526 = vpop.f32.mrb[0].mxu0
  %v527 = vadd.f32 %v84, %v526
  %v528 = vpop.f32.mrb[0].mxu0
  %v529 = vadd.f32 %v84, %v528
  %v530 = vpop.f32.mrb[0].mxu0
  %v531 = vpop.f32.mrb[0].mxu0
  %532 = vdwg.mxu0
  %533 = vmatprep.subr.bf16.mxu0 %v285
  %534 = vmatpush1.bf16.msra.mxu0 %v284
  %535 = vmatprep.subr.bf16.mxu0 %v301
  %536 = vmatpush1.bf16.msra.mxu0 %v300
  %537 = vmatprep.subr.bf16.mxu0 %v317
  %538 = vmatpush1.bf16.msra.mxu0 %v316
  %539 = vmatprep.subr.bf16.mxu0 %v333
  %540 = vmatpush1.bf16.msra.mxu0 %v332
  %541 = vmatprep.subr.bf16.mxu0 0
  %542 = vmatpush1.bf16.msra.mxu0 0
  %543 = vmatprep.subr.bf16.mxu0 0
  %544 = vmatpush1.bf16.msra.mxu0 0
  %545 = vmatprep.subr.bf16.mxu0 0
  %546 = vmatpush1.bf16.msra.mxu0 0
  %547 = vmatprep.subr.bf16.mxu0 0
  %548 = vmatpush1.bf16.msra.mxu0 0
  %549 = vmatprep.subr.bf16.mxu0 0
  %550 = vmatpush1.bf16.msra.mxu0 0
  %551 = vmatprep.subr.bf16.mxu0 0
  %552 = vmatpush1.bf16.msra.mxu0 0
  %553 = vmatprep.subr.bf16.mxu0 0
  %554 = vmatpush1.bf16.msra.mxu0 0
  %555 = vmatprep.subr.bf16.mxu0 0
  %556 = vmatpush1.bf16.msra.mxu0 0
  %557 = vmatprep.subr.bf16.mxu0 0
  %558 = vmatpush1.bf16.msra.mxu0 0
  %559 = vmatprep.subr.bf16.mxu0 0
  %560 = vmatpush1.bf16.msra.mxu0 0
  %561 = vmatprep.subr.bf16.mxu0 0
  %562 = vmatpush1.bf16.msra.mxu0 0
  %563 = vmatprep.subr.bf16.mxu0 0
  %564 = vmatpush1.bf16.msra.mxu0 0
  %565 = vmatprep.mubr.bf16.mxu0 0
  %566 = vmatmul.mubr.bf16.gmra.mrb[0].mxu0 %v408
  %v567 = vpop.f32.mrb[0].mxu0
  %v568 = vadd.f32 %v84, %v567
  %v569 = vpop.f32.mrb[0].mxu0
  %v570 = vadd.f32 %v84, %v569
  %v571 = vpop.f32.mrb[0].mxu0
  %v572 = vpop.f32.mrb[0].mxu0
  %573 = vdwg.mxu0
  %574 = vmatprep.subr.bf16.mxu0 %v287
  %575 = vmatpush1.bf16.msra.mxu0 %v286
  %576 = vmatprep.subr.bf16.mxu0 %v303
  %577 = vmatpush1.bf16.msra.mxu0 %v302
  %578 = vmatprep.subr.bf16.mxu0 %v319
  %579 = vmatpush1.bf16.msra.mxu0 %v318
  %580 = vmatprep.subr.bf16.mxu0 %v335
  %581 = vmatpush1.bf16.msra.mxu0 %v334
  %582 = vmatprep.subr.bf16.mxu0 0
  %583 = vmatpush1.bf16.msra.mxu0 0
  %584 = vmatprep.subr.bf16.mxu0 0
  %585 = vmatpush1.bf16.msra.mxu0 0
  %586 = vmatprep.subr.bf16.mxu0 0
  %587 = vmatpush1.bf16.msra.mxu0 0
  %588 = vmatprep.subr.bf16.mxu0 0
  %589 = vmatpush1.bf16.msra.mxu0 0
  %590 = vmatprep.subr.bf16.mxu0 0
  %591 = vmatpush1.bf16.msra.mxu0 0
  %592 = vmatprep.subr.bf16.mxu0 0
  %593 = vmatpush1.bf16.msra.mxu0 0
  %594 = vmatprep.subr.bf16.mxu0 0
  %595 = vmatpush1.bf16.msra.mxu0 0
  %596 = vmatprep.subr.bf16.mxu0 0
  %597 = vmatpush1.bf16.msra.mxu0 0
  %598 = vmatprep.subr.bf16.mxu0 0
  %599 = vmatpush1.bf16.msra.mxu0 0
  %600 = vmatprep.subr.bf16.mxu0 0
  %601 = vmatpush1.bf16.msra.mxu0 0
  %602 = vmatprep.subr.bf16.mxu0 0
  %603 = vmatpush1.bf16.msra.mxu0 0
  %604 = vmatprep.subr.bf16.mxu0 0
  %605 = vmatpush1.bf16.msra.mxu0 0
  %606 = vmatprep.mubr.bf16.mxu0 0
  %607 = vmatmul.mubr.bf16.gmra.mrb[0].mxu0 %v408
  %v608 = vpop.f32.mrb[0].mxu0
  %v609 = vadd.f32 %v84, %v608
  %v610 = vpop.f32.mrb[0].mxu0
  %v611 = vadd.f32 %v84, %v610
  %v612 = vpop.f32.mrb[0].mxu0
  %v613 = vpop.f32.mrb[0].mxu0
  %614 = vdwg.mxu0
  %615 = vmatprep.subr.bf16.mxu0 %v289
  %616 = vmatpush1.bf16.msra.mxu0 %v288
  %617 = vmatprep.subr.bf16.mxu0 %v305
  %618 = vmatpush1.bf16.msra.mxu0 %v304
  %619 = vmatprep.subr.bf16.mxu0 %v321
  %620 = vmatpush1.bf16.msra.mxu0 %v320
  %621 = vmatprep.subr.bf16.mxu0 %v337
  %622 = vmatpush1.bf16.msra.mxu0 %v336
  %623 = vmatprep.subr.bf16.mxu0 0
  %624 = vmatpush1.bf16.msra.mxu0 0
  %625 = vmatprep.subr.bf16.mxu0 0
  %626 = vmatpush1.bf16.msra.mxu0 0
  %627 = vmatprep.subr.bf16.mxu0 0
  %628 = vmatpush1.bf16.msra.mxu0 0
  %629 = vmatprep.subr.bf16.mxu0 0
  %630 = vmatpush1.bf16.msra.mxu0 0
  %631 = vmatprep.subr.bf16.mxu0 0
  %632 = vmatpush1.bf16.msra.mxu0 0
  %633 = vmatprep.subr.bf16.mxu0 0
  %634 = vmatpush1.bf16.msra.mxu0 0
  %635 = vmatprep.subr.bf16.mxu0 0
  %636 = vmatpush1.bf16.msra.mxu0 0
  %637 = vmatprep.subr.bf16.mxu0 0
  %638 = vmatpush1.bf16.msra.mxu0 0
  %639 = vmatprep.subr.bf16.mxu0 0
  %640 = vmatpush1.bf16.msra.mxu0 0
  %641 = vmatprep.subr.bf16.mxu0 0
  %642 = vmatpush1.bf16.msra.mxu0 0
  %643 = vmatprep.subr.bf16.mxu0 0
  %644 = vmatpush1.bf16.msra.mxu0 0
  %645 = vmatprep.subr.bf16.mxu0 0
  %646 = vmatpush1.bf16.msra.mxu0 0
  %647 = vmatprep.mubr.bf16.mxu0 0
  %648 = vmatmul.mubr.bf16.gmra.mrb[0].mxu0 %v408
  %v649 = vpop.f32.mrb[0].mxu0
  %v650 = vadd.f32 %v84, %v649
  %v651 = vpop.f32.mrb[0].mxu0
  %v652 = vadd.f32 %v84, %v651
  %v653 = vpop.f32.mrb[0].mxu0
  %v654 = vpop.f32.mrb[0].mxu0
  %655 = vdwg.mxu0
  %656 = vmatprep.subr.bf16.mxu0 %v291
  %657 = vmatpush1.bf16.msra.mxu0 %v290
  %658 = vmatprep.subr.bf16.mxu0 %v307
  %659 = vmatpush1.bf16.msra.mxu0 %v306
  %660 = vmatprep.subr.bf16.mxu0 %v323
  %661 = vmatpush1.bf16.msra.mxu0 %v322
  %662 = vmatprep.subr.bf16.mxu0 %v339
  %663 = vmatpush1.bf16.msra.mxu0 %v338
  %664 = vmatprep.subr.bf16.mxu0 0
  %665 = vmatpush1.bf16.msra.mxu0 0
  %666 = vmatprep.subr.bf16.mxu0 0
  %667 = vmatpush1.bf16.msra.mxu0 0
  %668 = vmatprep.subr.bf16.mxu0 0
  %669 = vmatpush1.bf16.msra.mxu0 0
  %670 = vmatprep.subr.bf16.mxu0 0
  %671 = vmatpush1.bf16.msra.mxu0 0
  %672 = vmatprep.subr.bf16.mxu0 0
  %673 = vmatpush1.bf16.msra.mxu0 0
  %674 = vmatprep.subr.bf16.mxu0 0
  %675 = vmatpush1.bf16.msra.mxu0 0
  %676 = vmatprep.subr.bf16.mxu0 0
  %677 = vmatpush1.bf16.msra.mxu0 0
  %678 = vmatprep.subr.bf16.mxu0 0
  %679 = vmatpush1.bf16.msra.mxu0 0
  %680 = vmatprep.subr.bf16.mxu0 0
  %681 = vmatpush1.bf16.msra.mxu0 0
  %682 = vmatprep.subr.bf16.mxu0 0
  %683 = vmatpush1.bf16.msra.mxu0 0
  %684 = vmatprep.subr.bf16.mxu0 0
  %685 = vmatpush1.bf16.msra.mxu0 0
  %686 = vmatprep.subr.bf16.mxu0 0
  %687 = vmatpush1.bf16.msra.mxu0 0
  %688 = vmatprep.mubr.bf16.mxu0 0
  %689 = vmatmul.mubr.bf16.gmra.mrb[0].mxu0 %v408
  %v690 = vpop.f32.mrb[0].mxu0
  %v691 = vadd.f32 %v84, %v690
  %v692 = vpop.f32.mrb[0].mxu0
  %v693 = vadd.f32 %v84, %v692
  %v694 = vpop.f32.mrb[0].mxu0
  %v695 = vpop.f32.mrb[0].mxu0
  %696 = vdwg.mxu0
  %697 = vmatprep.subr.bf16.mxu0 %v293
  %698 = vmatpush1.bf16.msra.mxu0 %v292
  %699 = vmatprep.subr.bf16.mxu0 %v309
  %700 = vmatpush1.bf16.msra.mxu0 %v308
  %701 = vmatprep.subr.bf16.mxu0 %v325
  %702 = vmatpush1.bf16.msra.mxu0 %v324
  %703 = vmatprep.subr.bf16.mxu0 %v341
  %704 = vmatpush1.bf16.msra.mxu0 %v340
  %705 = vmatprep.subr.bf16.mxu0 0
  %706 = vmatpush1.bf16.msra.mxu0 0
  %707 = vmatprep.subr.bf16.mxu0 0
  %708 = vmatpush1.bf16.msra.mxu0 0
  %709 = vmatprep.subr.bf16.mxu0 0
  %710 = vmatpush1.bf16.msra.mxu0 0
  %711 = vmatprep.subr.bf16.mxu0 0
  %712 = vmatpush1.bf16.msra.mxu0 0
  %713 = vmatprep.subr.bf16.mxu0 0
  %714 = vmatpush1.bf16.msra.mxu0 0
  %715 = vmatprep.subr.bf16.mxu0 0
  %716 = vmatpush1.bf16.msra.mxu0 0
  %717 = vmatprep.subr.bf16.mxu0 0
  %718 = vmatpush1.bf16.msra.mxu0 0
  %719 = vmatprep.subr.bf16.mxu0 0
  %720 = vmatpush1.bf16.msra.mxu0 0
  %721 = vmatprep.subr.bf16.mxu0 0
  %722 = vmatpush1.bf16.msra.mxu0 0
  %723 = vmatprep.subr.bf16.mxu0 0
  %724 = vmatpush1.bf16.msra.mxu0 0
  %725 = vmatprep.subr.bf16.mxu0 0
  %726 = vmatpush1.bf16.msra.mxu0 0
  %727 = vmatprep.subr.bf16.mxu0 0
  %728 = vmatpush1.bf16.msra.mxu0 0
  %729 = vmatprep.mubr.bf16.mxu0 0
  %730 = vmatmul.mubr.bf16.gmra.mrb[0].mxu0 %v408
  %v731 = vpop.f32.mrb[0].mxu0
  %v732 = vadd.f32 %v84, %v731
  %v733 = vpop.f32.mrb[0].mxu0
  %v734 = vadd.f32 %v84, %v733
  %v735 = vpop.f32.mrb[0].mxu0
  %v736 = vpop.f32.mrb[0].mxu0
  %737 = vdwg.mxu0
  %vm738 = vcmp.gt.f32.partialorder %v445, 0.0
  %vm739 = vcmp.gt.f32.partialorder %v447, 0.0
  %vm740 = vcmp.gt.f32.partialorder %v486, 0.0
  %vm741 = vcmp.gt.f32.partialorder %v488, 0.0
  %vm742 = vcmp.gt.f32.partialorder %v527, 0.0
  %vm743 = vcmp.gt.f32.partialorder %v529, 0.0
  %vm744 = vcmp.gt.f32.partialorder %v568, 0.0
  %vm745 = vcmp.gt.f32.partialorder %v570, 0.0
  %vm746 = vcmp.gt.f32.partialorder %v609, 0.0
  %vm747 = vcmp.gt.f32.partialorder %v611, 0.0
  %vm748 = vcmp.gt.f32.partialorder %v650, 0.0
  %vm749 = vcmp.gt.f32.partialorder %v652, 0.0
  %vm750 = vcmp.gt.f32.partialorder %v691, 0.0
  %vm751 = vcmp.gt.f32.partialorder %v693, 0.0
  %vm752 = vcmp.gt.f32.partialorder %v732, 0.0
  %vm753 = vcmp.gt.f32.partialorder %v734, 0.0
  %v754 = vmul.f32 %v445, 0.2
  %v755 = vmul.f32 %v447, 0.2
  %v756 = vmul.f32 %v486, 0.2
  %v757 = vmul.f32 %v488, 0.2
  %v758 = vmul.f32 %v527, 0.2
  %v759 = vmul.f32 %v529, 0.2
  %v760 = vmul.f32 %v568, 0.2
  %v761 = vmul.f32 %v570, 0.2
  %v762 = vmul.f32 %v609, 0.2
  %v763 = vmul.f32 %v611, 0.2
  %v764 = vmul.f32 %v650, 0.2
  %v765 = vmul.f32 %v652, 0.2
  %v766 = vmul.f32 %v691, 0.2
  %v767 = vmul.f32 %v693, 0.2
  %v768 = vmul.f32 %v732, 0.2
  %v769 = vmul.f32 %v734, 0.2
  %v770 = vsel %vm738, %v445, %v754
  %v771 = vsel %vm739, %v447, %v755
  %v772 = vsel %vm740, %v486, %v756
  %v773 = vsel %vm741, %v488, %v757
  %v774 = vsel %vm742, %v527, %v758
  %v775 = vsel %vm743, %v529, %v759
  %v776 = vsel %vm744, %v568, %v760
  %v777 = vsel %vm745, %v570, %v761
  %v778 = vsel %vm746, %v609, %v762
  %v779 = vsel %vm747, %v611, %v763
  %v780 = vsel %vm748, %v650, %v764
  %v781 = vsel %vm749, %v652, %v765
  %v782 = vsel %vm750, %v691, %v766
  %v783 = vsel %vm751, %v693, %v767
  %v784 = vsel %vm752, %v732, %v768
  %v785 = vsel %vm753, %v734, %v769
  %786 = vst [vmem:[%s3] sm:$0xff] %v770
  %787 = vst [vmem:[%s3 + $0x8] sm:$0xff] %v771
  %788 = vst [vmem:[%s3 + $0x10] sm:$0xff] %v772
  %789 = vst [vmem:[%s3 + $0x18] sm:$0xff] %v773
  %790 = vst [vmem:[%s3 + $0x20] sm:$0xff] %v774
  %791 = vst [vmem:[%s3 + $0x28] sm:$0xff] %v775
  %792 = vst [vmem:[%s3 + $0x30] sm:$0xff] %v776
  %793 = vst [vmem:[%s3 + $0x38] sm:$0xff] %v777
  %794 = vst [vmem:[%s3 + $0x40] sm:$0xff] %v778
  %795 = vst [vmem:[%s3 + $0x48] sm:$0xff] %v779
  %796 = vst [vmem:[%s3 + $0x50] sm:$0xff] %v780
  %797 = vst [vmem:[%s3 + $0x58] sm:$0xff] %v781
  %798 = vst [vmem:[%s3 + $0x60] sm:$0xff] %v782
  %799 = vst [vmem:[%s3 + $0x68] sm:$0xff] %v783
  %800 = vst [vmem:[%s3 + $0x70] sm:$0xff] %v784
  %801 = vst [vmem:[%s3 + $0x78] sm:$0xff] %v785
  // Predicated region
  $region14: #{patch_discriminate_2.7} parent=0 // pred_check
    _
  $region15: #{patch_discriminate_2.7} parent=0 // pred_check_branch
    %803 = sbr.rel (0) target = $region17
  $region16: #{patch_discriminate_2.7} parent=0 // pred_region
    _
  $region17: #{patch_discriminate_2.7} parent=0 // pred_fallthru
    _
  // Predicated region
  $region18: #{patch_discriminate_2.7} parent=0 // pred_check
    _
  $region19: #{patch_discriminate_2.7} parent=0 // pred_check_branch
    %805 = sbr.rel (0) target = $region21
  $region20: #{patch_discriminate_2.7} parent=0 // pred_region
    _
  $region21: #{patch_discriminate_2.7} parent=0 // pred_fallthru
    _

// kernel: patch_discriminate_2.8
$region0: #{patch_discriminate_2.8}
  #allocation0 [shape = 'u32[]', space=smem, size = 0x4, offset = 0x4, fixed_abs, tag = 'smem constant byte address 0x4 - core index']
  #allocation1 [shape = 'u32[144,128]{1,0:T(1,128)}', space=vmem, size = 0x12000, scoped, tag = 'internal scratch']
  %s0 = inlined_call_operand.vmem [shape: bf16[16,128], index: 0, kind: input, shape index: {}]
  %s1 = inlined_call_operand.vmem [shape: bf16[128,512], index: 1, kind: input, shape index: {}]
  %s2 = inlined_call_operand.vmem [shape: f32[16,1], index: 2, kind: input, shape index: {}]
  %s3 = inlined_call_operand.vmem [shape: f32[16,512], index: 3, kind: output, shape index: {}]
  %s4 = sld [smem:[#allocation0]]
  $region22: #{patch_discriminate_2.8} parent=0
    _
  %s6 = ssub.s32 1, %s4
  %s7 = scalar_select 0, %s6, %s4
  // Predicated region
  $region2: #{patch_discriminate_2.8} parent=0 // pred_check
    _
  $region3: #{patch_discriminate_2.8} parent=0 // pred_check_branch
    %9 = sbr.rel (0) target = $region5
  $region4: #{patch_discriminate_2.8} parent=0 // pred_region
    _
  $region5: #{patch_discriminate_2.8} parent=0 // pred_fallthru
    _
  // Predicated region
  $region6: #{patch_discriminate_2.8} parent=0 // pred_check
    _
  $region7: #{patch_discriminate_2.8} parent=0 // pred_check_branch
    %11 = sbr.rel (0) target = $region9
  $region8: #{patch_discriminate_2.8} parent=0 // pred_region
    _
  $region9: #{patch_discriminate_2.8} parent=0 // pred_fallthru
    _
  // Predicated region
  $region10: #{patch_discriminate_2.8} parent=0 // pred_check
    _
  $region11: #{patch_discriminate_2.8} parent=0 // pred_check_branch
    %13 = sbr.rel (0) target = $region13
  $region12: #{patch_discriminate_2.8} parent=0 // pred_region
    _
  $region13: #{patch_discriminate_2.8} parent=0 // pred_fallthru
    _
  %v15 = vld [vmem:[%s0] sm:$0xf]
  %v16 = vld [vmem:[%s0 + $0x4] sm:$0xf]
  %v17 = vld [vmem:[%s1] sm:$0xff]
  %v18 = vld [vmem:[%s1 + $0x8] sm:$0xff]
  %v19 = vld [vmem:[%s1 + $0x10] sm:$0xff]
  %v20 = vld [vmem:[%s1 + $0x18] sm:$0xff]
  %v21 = vld [vmem:[%s1 + $0x20] sm:$0xff]
  %v22 = vld [vmem:[%s1 + $0x28] sm:$0xff]
  %v23 = vld [vmem:[%s1 + $0x30] sm:$0xff]
  %v24 = vld [vmem:[%s1 + $0x38] sm:$0xff]
  %v25 = vld [vmem:[%s1 + $0x40] sm:$0xff]
  %v26 = vld [vmem:[%s1 + $0x48] sm:$0xff]
  %v27 = vld [vmem:[%s1 + $0x50] sm:$0xff]
  %v28 = vld [vmem:[%s1 + $0x58] sm:$0xff]
  %v29 = vld [vmem:[%s1 + $0x60] sm:$0xff]
  %v30 = vld [vmem:[%s1 + $0x68] sm:$0xff]
  %v31 = vld [vmem:[%s1 + $0x70] sm:$0xff]
  %v32 = vld [vmem:[%s1 + $0x78] sm:$0xff]
  %v33 = vld [vmem:[%s1 + $0x80] sm:$0xff]
  %v34 = vld [vmem:[%s1 + $0x88] sm:$0xff]
  %v35 = vld [vmem:[%s1 + $0x90] sm:$0xff]
  %v36 = vld [vmem:[%s1 + $0x98] sm:$0xff]
  %v37 = vld [vmem:[%s1 + $0xa0] sm:$0xff]
  %v38 = vld [vmem:[%s1 + $0xa8] sm:$0xff]
  %v39 = vld [vmem:[%s1 + $0xb0] sm:$0xff]
  %v40 = vld [vmem:[%s1 + $0xb8] sm:$0xff]
  %v41 = vld [vmem:[%s1 + $0xc0] sm:$0xff]
  %v42 = vld [vmem:[%s1 + $0xc8] sm:$0xff]
  %v43 = vld [vmem:[%s1 + $0xd0] sm:$0xff]
  %v44 = vld [vmem:[%s1 + $0xd8] sm:$0xff]
  %v45 = vld [vmem:[%s1 + $0xe0] sm:$0xff]
  %v46 = vld [vmem:[%s1 + $0xe8] sm:$0xff]
  %v47 = vld [vmem:[%s1 + $0xf0] sm:$0xff]
  %v48 = vld [vmem:[%s1 + $0xf8] sm:$0xff]
  %v49 = vld [vmem:[%s2] sm:$0xff]
  %v50 = vld [vmem:[%s2 + $0x8] sm:$0xff]
  %52 = vset.pattern.permute.xlu0 0
  %53 = vperm.xlu0 %52, %v49
  %v54 = vpop.permute.xlu0 %53
  %57 = vset.pattern.permute.xlu0 0
  %58 = vperm.xlu0 %57, %v50
  %v59 = vpop.permute.xlu0 %58
  %v63 = vunpack.c.l.b16 %v15
  %v64 = vunpack.c.l.b16 %v16
  %v65 = vpack.c.b16 %v64, %v63
  %v99 = vunpack.c.l.b16 %v17
  %v100 = vunpack.c.h.b16 %v17
  %v101 = vunpack.c.l.b16 %v18
  %v102 = vunpack.c.h.b16 %v18
  %v103 = vunpack.c.l.b16 %v19
  %v104 = vunpack.c.h.b16 %v19
  %v105 = vunpack.c.l.b16 %v20
  %v106 = vunpack.c.h.b16 %v20
  %v107 = vunpack.c.l.b16 %v21
  %v108 = vunpack.c.h.b16 %v21
  %v109 = vunpack.c.l.b16 %v22
  %v110 = vunpack.c.h.b16 %v22
  %v111 = vunpack.c.l.b16 %v23
  %v112 = vunpack.c.h.b16 %v23
  %v113 = vunpack.c.l.b16 %v24
  %v114 = vunpack.c.h.b16 %v24
  %v115 = vunpack.c.l.b16 %v25
  %v116 = vunpack.c.h.b16 %v25
  %v117 = vunpack.c.l.b16 %v26
  %v118 = vunpack.c.h.b16 %v26
  %v119 = vunpack.c.l.b16 %v27
  %v120 = vunpack.c.h.b16 %v27
  %v121 = vunpack.c.l.b16 %v28
  %v122 = vunpack.c.h.b16 %v28
  %v123 = vunpack.c.l.b16 %v29
  %v124 = vunpack.c.h.b16 %v29
  %v125 = vunpack.c.l.b16 %v30
  %v126 = vunpack.c.h.b16 %v30
  %v127 = vunpack.c.l.b16 %v31
  %v128 = vunpack.c.h.b16 %v31
  %v129 = vunpack.c.l.b16 %v32
  %v130 = vunpack.c.h.b16 %v32
  %v131 = vunpack.c.l.b16 %v33
  %v132 = vunpack.c.h.b16 %v33
  %v133 = vunpack.c.l.b16 %v34
  %v134 = vunpack.c.h.b16 %v34
  %v135 = vunpack.c.l.b16 %v35
  %v136 = vunpack.c.h.b16 %v35
  %v137 = vunpack.c.l.b16 %v36
  %v138 = vunpack.c.h.b16 %v36
  %v139 = vunpack.c.l.b16 %v37
  %v140 = vunpack.c.h.b16 %v37
  %v141 = vunpack.c.l.b16 %v38
  %v142 = vunpack.c.h.b16 %v38
  %v143 = vunpack.c.l.b16 %v39
  %v144 = vunpack.c.h.b16 %v39
  %v145 = vunpack.c.l.b16 %v40
  %v146 = vunpack.c.h.b16 %v40
  %v147 = vunpack.c.l.b16 %v41
  %v148 = vunpack.c.h.b16 %v41
  %v149 = vunpack.c.l.b16 %v42
  %v150 = vunpack.c.h.b16 %v42
  %v151 = vunpack.c.l.b16 %v43
  %v152 = vunpack.c.h.b16 %v43
  %v153 = vunpack.c.l.b16 %v44
  %v154 = vunpack.c.h.b16 %v44
  %v155 = vunpack.c.l.b16 %v45
  %v156 = vunpack.c.h.b16 %v45
  %v157 = vunpack.c.l.b16 %v46
  %v158 = vunpack.c.h.b16 %v46
  %v159 = vunpack.c.l.b16 %v47
  %v160 = vunpack.c.h.b16 %v47
  %v161 = vunpack.c.l.b16 %v48
  %v162 = vunpack.c.h.b16 %v48
  %v163 = vpack.c.b16 %v103, %v99
  %v164 = vpack.c.b16 %v104, %v100
  %v165 = vpack.c.b16 %v105, %v101
  %v166 = vpack.c.b16 %v106, %v102
  %v167 = vpack.c.b16 %v111, %v107
  %v168 = vpack.c.b16 %v112, %v108
  %v169 = vpack.c.b16 %v113, %v109
  %v170 = vpack.c.b16 %v114, %v110
  %v171 = vpack.c.b16 %v119, %v115
  %v172 = vpack.c.b16 %v120, %v116
  %v173 = vpack.c.b16 %v121, %v117
  %v174 = vpack.c.b16 %v122, %v118
  %v175 = vpack.c.b16 %v127, %v123
  %v176 = vpack.c.b16 %v128, %v124
  %v177 = vpack.c.b16 %v129, %v125
  %v178 = vpack.c.b16 %v130, %v126
  %v179 = vpack.c.b16 %v135, %v131
  %v180 = vpack.c.b16 %v136, %v132
  %v181 = vpack.c.b16 %v137, %v133
  %v182 = vpack.c.b16 %v138, %v134
  %v183 = vpack.c.b16 %v143, %v139
  %v184 = vpack.c.b16 %v144, %v140
  %v185 = vpack.c.b16 %v145, %v141
  %v186 = vpack.c.b16 %v146, %v142
  %v187 = vpack.c.b16 %v151, %v147
  %v188 = vpack.c.b16 %v152, %v148
  %v189 = vpack.c.b16 %v153, %v149
  %v190 = vpack.c.b16 %v154, %v150
  %v191 = vpack.c.b16 %v159, %v155
  %v192 = vpack.c.b16 %v160, %v156
  %v193 = vpack.c.b16 %v161, %v157
  %v194 = vpack.c.b16 %v162, %v158
  %227 = vmatprep.subr.bf16.mxu0 %v164
  %228 = vmatpush1.bf16.msra.mxu0 %v163
  %229 = vmatprep.subr.bf16.mxu0 %v168
  %230 = vmatpush1.bf16.msra.mxu0 %v167
  %231 = vmatprep.subr.bf16.mxu0 %v172
  %232 = vmatpush1.bf16.msra.mxu0 %v171
  %233 = vmatprep.subr.bf16.mxu0 %v176
  %234 = vmatpush1.bf16.msra.mxu0 %v175
  %235 = vmatprep.subr.bf16.mxu0 %v180
  %236 = vmatpush1.bf16.msra.mxu0 %v179
  %237 = vmatprep.subr.bf16.mxu0 %v184
  %238 = vmatpush1.bf16.msra.mxu0 %v183
  %239 = vmatprep.subr.bf16.mxu0 %v188
  %240 = vmatpush1.bf16.msra.mxu0 %v187
  %241 = vmatprep.subr.bf16.mxu0 %v192
  %242 = vmatpush1.bf16.msra.mxu0 %v191
  %243 = vmatprep.subr.bf16.mxu0 0
  %244 = vmatpush1.bf16.msra.mxu0 0
  %245 = vmatprep.subr.bf16.mxu0 0
  %246 = vmatpush1.bf16.msra.mxu0 0
  %247 = vmatprep.subr.bf16.mxu0 0
  %248 = vmatpush1.bf16.msra.mxu0 0
  %249 = vmatprep.subr.bf16.mxu0 0
  %250 = vmatpush1.bf16.msra.mxu0 0
  %251 = vmatprep.subr.bf16.mxu0 0
  %252 = vmatpush1.bf16.msra.mxu0 0
  %253 = vmatprep.subr.bf16.mxu0 0
  %254 = vmatpush1.bf16.msra.mxu0 0
  %255 = vmatprep.subr.bf16.mxu0 0
  %256 = vmatpush1.bf16.msra.mxu0 0
  %257 = vmatprep.subr.bf16.mxu0 0
  %258 = vmatpush1.bf16.msra.mxu0 0
  %259 = vmatprep.mubr.bf16.mxu0 0
  %260 = vmatmul.mubr.bf16.gmra.mrb[0].mxu0 %v65
  %v261 = vpop.f32.mrb[0].mxu0
  %v262 = vadd.f32 %v54, %v261
  %v263 = vpop.f32.mrb[0].mxu0
  %v264 = vadd.f32 %v54, %v263
  %v265 = vpop.f32.mrb[0].mxu0
  %v266 = vadd.f32 %v59, %v265
  %v267 = vpop.f32.mrb[0].mxu0
  %v268 = vadd.f32 %v59, %v267
  %269 = vdwg.mxu0
  %270 = vmatprep.subr.bf16.mxu0 %v166
  %271 = vmatpush1.bf16.msra.mxu0 %v165
  %272 = vmatprep.subr.bf16.mxu0 %v170
  %273 = vmatpush1.bf16.msra.mxu0 %v169
  %274 = vmatprep.subr.bf16.mxu0 %v174
  %275 = vmatpush1.bf16.msra.mxu0 %v173
  %276 = vmatprep.subr.bf16.mxu0 %v178
  %277 = vmatpush1.bf16.msra.mxu0 %v177
  %278 = vmatprep.subr.bf16.mxu0 %v182
  %279 = vmatpush1.bf16.msra.mxu0 %v181
  %280 = vmatprep.subr.bf16.mxu0 %v186
  %281 = vmatpush1.bf16.msra.mxu0 %v185
  %282 = vmatprep.subr.bf16.mxu0 %v190
  %283 = vmatpush1.bf16.msra.mxu0 %v189
  %284 = vmatprep.subr.bf16.mxu0 %v194
  %285 = vmatpush1.bf16.msra.mxu0 %v193
  %286 = vmatprep.subr.bf16.mxu0 0
  %287 = vmatpush1.bf16.msra.mxu0 0
  %288 = vmatprep.subr.bf16.mxu0 0
  %289 = vmatpush1.bf16.msra.mxu0 0
  %290 = vmatprep.subr.bf16.mxu0 0
  %291 = vmatpush1.bf16.msra.mxu0 0
  %292 = vmatprep.subr.bf16.mxu0 0
  %293 = vmatpush1.bf16.msra.mxu0 0
  %294 = vmatprep.subr.bf16.mxu0 0
  %295 = vmatpush1.bf16.msra.mxu0 0
  %296 = vmatprep.subr.bf16.mxu0 0
  %297 = vmatpush1.bf16.msra.mxu0 0
  %298 = vmatprep.subr.bf16.mxu0 0
  %299 = vmatpush1.bf16.msra.mxu0 0
  %300 = vmatprep.subr.bf16.mxu0 0
  %301 = vmatpush1.bf16.msra.mxu0 0
  %302 = vmatprep.mubr.bf16.mxu0 0
  %303 = vmatmul.mubr.bf16.gmra.mrb[0].mxu0 %v65
  %v304 = vpop.f32.mrb[0].mxu0
  %v305 = vadd.f32 %v54, %v304
  %v306 = vpop.f32.mrb[0].mxu0
  %v307 = vadd.f32 %v54, %v306
  %v308 = vpop.f32.mrb[0].mxu0
  %v309 = vadd.f32 %v59, %v308
  %v310 = vpop.f32.mrb[0].mxu0
  %v311 = vadd.f32 %v59, %v310
  %312 = vdwg.mxu0
  %vm313 = vcmp.gt.f32.partialorder %v262, 0.0
  %vm314 = vcmp.gt.f32.partialorder %v264, 0.0
  %vm315 = vcmp.gt.f32.partialorder %v305, 0.0
  %vm316 = vcmp.gt.f32.partialorder %v307, 0.0
  %vm317 = vcmp.gt.f32.partialorder %v266, 0.0
  %vm318 = vcmp.gt.f32.partialorder %v268, 0.0
  %vm319 = vcmp.gt.f32.partialorder %v309, 0.0
  %vm320 = vcmp.gt.f32.partialorder %v311, 0.0
  %v321 = vmul.f32 %v262, 0.2
  %v322 = vmul.f32 %v264, 0.2
  %v323 = vmul.f32 %v305, 0.2
  %v324 = vmul.f32 %v307, 0.2
  %v325 = vmul.f32 %v266, 0.2
  %v326 = vmul.f32 %v268, 0.2
  %v327 = vmul.f32 %v309, 0.2
  %v328 = vmul.f32 %v311, 0.2
  %v329 = vsel %vm313, %v262, %v321
  %v330 = vsel %vm314, %v264, %v322
  %v331 = vsel %vm315, %v305, %v323
  %v332 = vsel %vm316, %v307, %v324
  %v333 = vsel %vm317, %v266, %v325
  %v334 = vsel %vm318, %v268, %v326
  %v335 = vsel %vm319, %v309, %v327
  %v336 = vsel %vm320, %v311, %v328
  %337 = vst [vmem:[%s3] sm:$0xff] %v329
  %338 = vst [vmem:[%s3 + $0x8] sm:$0xff] %v330
  %339 = vst [vmem:[%s3 + $0x10] sm:$0xff] %v331
  %340 = vst [vmem:[%s3 + $0x18] sm:$0xff] %v332
  %341 = vst [vmem:[%s3 + $0x20] sm:$0xff] %v333
  %342 = vst [vmem:[%s3 + $0x28] sm:$0xff] %v334
  %343 = vst [vmem:[%s3 + $0x30] sm:$0xff] %v335
  %344 = vst [vmem:[%s3 + $0x38] sm:$0xff] %v336
  // Predicated region
  $region14: #{patch_discriminate_2.8} parent=0 // pred_check
    _
  $region15: #{patch_discriminate_2.8} parent=0 // pred_check_branch
    %346 = sbr.rel (0) target = $region17
  $region16: #{patch_discriminate_2.8} parent=0 // pred_region
    _
  $region17: #{patch_discriminate_2.8} parent=0 // pred_fallthru
    _
  // Predicated region
  $region18: #{patch_discriminate_2.8} parent=0 // pred_check
    _
  $region19: #{patch_discriminate_2.8} parent=0 // pred_check_branch
    %348 = sbr.rel (0) target = $region21
  $region20: #{patch_discriminate_2.8} parent=0 // pred_region
    _
  $region21: #{patch_discriminate_2.8} parent=0 // pred_fallthru
    _

// kernel: patch_discriminate_2.9
$region0: #{patch_discriminate_2.9}
  #allocation0 [shape = 'u32[]', space=smem, size = 0x4, offset = 0x4, fixed_abs, tag = 'smem constant byte address 0x4 - core index']
  #allocation1 [shape = 'u32[144,128]{1,0:T(1,128)}', space=vmem, size = 0x12000, scoped, tag = 'internal scratch']
  %s0 = inlined_call_operand.vmem [shape: bf16[16,256], index: 0, kind: input, shape index: {}]
  %s1 = inlined_call_operand.vmem [shape: bf16[256,128], index: 1, kind: input, shape index: {}]
  %s2 = inlined_call_operand.vmem [shape: f32[16,1], index: 2, kind: input, shape index: {}]
  %s3 = inlined_call_operand.vmem [shape: f32[16,128], index: 3, kind: output, shape index: {}]
  %s4 = sld [smem:[#allocation0]]
  $region22: #{patch_discriminate_2.9} parent=0
    _
  %s6 = ssub.s32 1, %s4
  %s7 = scalar_select 0, %s6, %s4
  // Predicated region
  $region2: #{patch_discriminate_2.9} parent=0 // pred_check
    _
  $region3: #{patch_discriminate_2.9} parent=0 // pred_check_branch
    %9 = sbr.rel (0) target = $region5
  $region4: #{patch_discriminate_2.9} parent=0 // pred_region
    _
  $region5: #{patch_discriminate_2.9} parent=0 // pred_fallthru
    _
  // Predicated region
  $region6: #{patch_discriminate_2.9} parent=0 // pred_check
    _
  $region7: #{patch_discriminate_2.9} parent=0 // pred_check_branch
    %11 = sbr.rel (0) target = $region9
  $region8: #{patch_discriminate_2.9} parent=0 // pred_region
    _
  $region9: #{patch_discriminate_2.9} parent=0 // pred_fallthru
    _
  // Predicated region
  $region10: #{patch_discriminate_2.9} parent=0 // pred_check
    _
  $region11: #{patch_discriminate_2.9} parent=0 // pred_check_branch
    %13 = sbr.rel (0) target = $region13
  $region12: #{patch_discriminate_2.9} parent=0 // pred_region
    _
  $region13: #{patch_discriminate_2.9} parent=0 // pred_fallthru
    _
  %v15 = vld [vmem:[%s0] sm:$0xff]
  %v16 = vld [vmem:[%s0 + $0x8] sm:$0xff]
  %v17 = vld [vmem:[%s1] sm:$0xf]
  %v18 = vld [vmem:[%s1 + $0x4] sm:$0xf]
  %v19 = vld [vmem:[%s1 + $0x8] sm:$0xf]
  %v20 = vld [vmem:[%s1 + $0xc] sm:$0xf]
  %v21 = vld [vmem:[%s1 + $0x10] sm:$0xf]
  %v22 = vld [vmem:[%s1 + $0x14] sm:$0xf]
  %v23 = vld [vmem:[%s1 + $0x18] sm:$0xf]
  %v24 = vld [vmem:[%s1 + $0x1c] sm:$0xf]
  %v25 = vld [vmem:[%s1 + $0x20] sm:$0xf]
  %v26 = vld [vmem:[%s1 + $0x24] sm:$0xf]
  %v27 = vld [vmem:[%s1 + $0x28] sm:$0xf]
  %v28 = vld [vmem:[%s1 + $0x2c] sm:$0xf]
  %v29 = vld [vmem:[%s1 + $0x30] sm:$0xf]
  %v30 = vld [vmem:[%s1 + $0x34] sm:$0xf]
  %v31 = vld [vmem:[%s1 + $0x38] sm:$0xf]
  %v32 = vld [vmem:[%s1 + $0x3c] sm:$0xf]
  %v33 = vld [vmem:[%s1 + $0x40] sm:$0xf]
  %v34 = vld [vmem:[%s1 + $0x44] sm:$0xf]
  %v35 = vld [vmem:[%s1 + $0x48] sm:$0xf]
  %v36 = vld [vmem:[%s1 + $0x4c] sm:$0xf]
  %v37 = vld [vmem:[%s1 + $0x50] sm:$0xf]
  %v38 = vld [vmem:[%s1 + $0x54] sm:$0xf]
  %v39 = vld [vmem:[%s1 + $0x58] sm:$0xf]
  %v40 = vld [vmem:[%s1 + $0x5c] sm:$0xf]
  %v41 = vld [vmem:[%s1 + $0x60] sm:$0xf]
  %v42 = vld [vmem:[%s1 + $0x64] sm:$0xf]
  %v43 = vld [vmem:[%s1 + $0x68] sm:$0xf]
  %v44 = vld [vmem:[%s1 + $0x6c] sm:$0xf]
  %v45 = vld [vmem:[%s1 + $0x70] sm:$0xf]
  %v46 = vld [vmem:[%s1 + $0x74] sm:$0xf]
  %v47 = vld [vmem:[%s1 + $0x78] sm:$0xf]
  %v48 = vld [vmem:[%s1 + $0x7c] sm:$0xf]
  %v49 = vld [vmem:[%s2] sm:$0xff]
  %v50 = vld [vmem:[%s2 + $0x8] sm:$0xff]
  %52 = vset.pattern.permute.xlu0 0
  %53 = vperm.xlu0 %52, %v49
  %v54 = vpop.permute.xlu0 %53
  %57 = vset.pattern.permute.xlu0 0
  %58 = vperm.xlu0 %57, %v50
  %v59 = vpop.permute.xlu0 %58
  %v63 = vunpack.c.l.b16 %v15
  %v64 = vunpack.c.h.b16 %v15
  %v65 = vunpack.c.l.b16 %v16
  %v66 = vunpack.c.h.b16 %v16
  %v67 = vpack.c.b16 %v65, %v63
  %v68 = vpack.c.b16 %v66, %v64
  %v103 = vunpack.c.l.b16 %v17
  %v104 = vunpack.c.l.b16 %v18
  %v105 = vunpack.c.l.b16 %v19
  %v106 = vunpack.c.l.b16 %v20
  %v107 = vunpack.c.l.b16 %v21
  %v108 = vunpack.c.l.b16 %v22
  %v109 = vunpack.c.l.b16 %v23
  %v110 = vunpack.c.l.b16 %v24
  %v111 = vunpack.c.l.b16 %v25
  %v112 = vunpack.c.l.b16 %v26
  %v113 = vunpack.c.l.b16 %v27
  %v114 = vunpack.c.l.b16 %v28
  %v115 = vunpack.c.l.b16 %v29
  %v116 = vunpack.c.l.b16 %v30
  %v117 = vunpack.c.l.b16 %v31
  %v118 = vunpack.c.l.b16 %v32
  %v119 = vunpack.c.l.b16 %v33
  %v120 = vunpack.c.l.b16 %v34
  %v121 = vunpack.c.l.b16 %v35
  %v122 = vunpack.c.l.b16 %v36
  %v123 = vunpack.c.l.b16 %v37
  %v124 = vunpack.c.l.b16 %v38
  %v125 = vunpack.c.l.b16 %v39
  %v126 = vunpack.c.l.b16 %v40
  %v127 = vunpack.c.l.b16 %v41
  %v128 = vunpack.c.l.b16 %v42
  %v129 = vunpack.c.l.b16 %v43
  %v130 = vunpack.c.l.b16 %v44
  %v131 = vunpack.c.l.b16 %v45
  %v132 = vunpack.c.l.b16 %v46
  %v133 = vunpack.c.l.b16 %v47
  %v134 = vunpack.c.l.b16 %v48
  %v135 = vpack.c.b16 %v104, %v103
  %v136 = vpack.c.b16 %v106, %v105
  %v137 = vpack.c.b16 %v108, %v107
  %v138 = vpack.c.b16 %v110, %v109
  %v139 = vpack.c.b16 %v112, %v111
  %v140 = vpack.c.b16 %v114, %v113
  %v141 = vpack.c.b16 %v116, %v115
  %v142 = vpack.c.b16 %v118, %v117
  %v143 = vpack.c.b16 %v120, %v119
  %v144 = vpack.c.b16 %v122, %v121
  %v145 = vpack.c.b16 %v124, %v123
  %v146 = vpack.c.b16 %v126, %v125
  %v147 = vpack.c.b16 %v128, %v127
  %v148 = vpack.c.b16 %v130, %v129
  %v149 = vpack.c.b16 %v132, %v131
  %v150 = vpack.c.b16 %v134, %v133
  %167 = vmatprep.subr.bf16.mxu0 0
  %168 = vmatpush1.bf16.msra.mxu0 %v135
  %169 = vmatprep.subr.bf16.mxu0 0
  %170 = vmatpush1.bf16.msra.mxu0 %v136
  %171 = vmatprep.subr.bf16.mxu0 0
  %172 = vmatpush1.bf16.msra.mxu0 %v137
  %173 = vmatprep.subr.bf16.mxu0 0
  %174 = vmatpush1.bf16.msra.mxu0 %v138
  %175 = vmatprep.subr.bf16.mxu0 0
  %176 = vmatpush1.bf16.msra.mxu0 %v139
  %177 = vmatprep.subr.bf16.mxu0 0
  %178 = vmatpush1.bf16.msra.mxu0 %v140
  %179 = vmatprep.subr.bf16.mxu0 0
  %180 = vmatpush1.bf16.msra.mxu0 %v141
  %181 = vmatprep.subr.bf16.mxu0 0
  %182 = vmatpush1.bf16.msra.mxu0 %v142
  %183 = vmatprep.subr.bf16.mxu0 0
  %184 = vmatpush1.bf16.msra.mxu0 %v143
  %185 = vmatprep.subr.bf16.mxu0 0
  %186 = vmatpush1.bf16.msra.mxu0 %v144
  %187 = vmatprep.subr.bf16.mxu0 0
  %188 = vmatpush1.bf16.msra.mxu0 %v145
  %189 = vmatprep.subr.bf16.mxu0 0
  %190 = vmatpush1.bf16.msra.mxu0 %v146
  %191 = vmatprep.subr.bf16.mxu0 0
  %192 = vmatpush1.bf16.msra.mxu0 %v147
  %193 = vmatprep.subr.bf16.mxu0 0
  %194 = vmatpush1.bf16.msra.mxu0 %v148
  %195 = vmatprep.subr.bf16.mxu0 0
  %196 = vmatpush1.bf16.msra.mxu0 %v149
  %197 = vmatprep.subr.bf16.mxu0 0
  %198 = vmatpush1.bf16.msra.mxu0 %v150
  %199 = vmatprep.mubr.bf16.mxu0 %v68
  %200 = vmatmul.mubr.bf16.gmra.mrb[0].mxu0 %v67
  %v201 = vpop.f32.mrb[0].mxu0
  %v202 = vadd.f32 %v54, %v201
  %v203 = vpop.f32.mrb[0].mxu0
  %v204 = vpop.f32.mrb[0].mxu0
  %v205 = vadd.f32 %v59, %v204
  %v206 = vpop.f32.mrb[0].mxu0
  %207 = vdwg.mxu0
  %vm208 = vcmp.gt.f32.partialorder %v202, 0.0
  %vm209 = vcmp.gt.f32.partialorder %v205, 0.0
  %v210 = vmul.f32 %v202, 0.2
  %v211 = vmul.f32 %v205, 0.2
  %v212 = vsel %vm208, %v202, %v210
  %v213 = vsel %vm209, %v205, %v211
  %214 = vst [vmem:[%s3] sm:$0xff] %v212
  %215 = vst [vmem:[%s3 + $0x8] sm:$0xff] %v213
  // Predicated region
  $region14: #{patch_discriminate_2.9} parent=0 // pred_check
    _
  $region15: #{patch_discriminate_2.9} parent=0 // pred_check_branch
    %217 = sbr.rel (0) target = $region17
  $region16: #{patch_discriminate_2.9} parent=0 // pred_region
    _
  $region17: #{patch_discriminate_2.9} parent=0 // pred_fallthru
    _
  // Predicated region
  $region18: #{patch_discriminate_2.9} parent=0 // pred_check
    _
  $region19: #{patch_discriminate_2.9} parent=0 // pred_check_branch
    %219 = sbr.rel (0) target = $region21
  $region20: #{patch_discriminate_2.9} parent=0 // pred_region
    _
  $region21: #{patch_discriminate_2.9} parent=0 // pred_fallthru
    _

// kernel: patch_discriminate_2.10
$region0: #{patch_discriminate_2.10}
  #allocation0 [shape = 'u32[]', space=smem, size = 0x4, offset = 0x4, fixed_abs, tag = 'smem constant byte address 0x4 - core index']
  #allocation1 [shape = 'u32[144,128]{1,0:T(1,128)}', space=vmem, size = 0x12000, scoped, tag = 'internal scratch']
  %s0 = inlined_call_operand.vmem [shape: bf16[16,256], index: 0, kind: input, shape index: {}]
  %s1 = inlined_call_operand.vmem [shape: bf16[256,32], index: 1, kind: input, shape index: {}]
  %s2 = inlined_call_operand.vmem [shape: f32[16,1], index: 2, kind: input, shape index: {}]
  %s3 = inlined_call_operand.vmem [shape: f32[16,32], index: 3, kind: output, shape index: {}]
  %s4 = sld [smem:[#allocation0]]
  $region22: #{patch_discriminate_2.10} parent=0
    _
  %s6 = ssub.s32 1, %s4
  %s7 = scalar_select 0, %s6, %s4
  // Predicated region
  $region2: #{patch_discriminate_2.10} parent=0 // pred_check
    _
  $region3: #{patch_discriminate_2.10} parent=0 // pred_check_branch
    %9 = sbr.rel (0) target = $region5
  $region4: #{patch_discriminate_2.10} parent=0 // pred_region
    _
  $region5: #{patch_discriminate_2.10} parent=0 // pred_fallthru
    _
  // Predicated region
  $region6: #{patch_discriminate_2.10} parent=0 // pred_check
    _
  $region7: #{patch_discriminate_2.10} parent=0 // pred_check_branch
    %11 = sbr.rel (0) target = $region9
  $region8: #{patch_discriminate_2.10} parent=0 // pred_region
    _
  $region9: #{patch_discriminate_2.10} parent=0 // pred_fallthru
    _
  // Predicated region
  $region10: #{patch_discriminate_2.10} parent=0 // pred_check
    _
  $region11: #{patch_discriminate_2.10} parent=0 // pred_check_branch
    %13 = sbr.rel (0) target = $region13
  $region12: #{patch_discriminate_2.10} parent=0 // pred_region
    _
  $region13: #{patch_discriminate_2.10} parent=0 // pred_fallthru
    _
  %v15 = vld [vmem:[%s0] sm:$0xff]
  %v16 = vld [vmem:[%s0 + $0x8] sm:$0xff]
  %v17 = vld [vmem:[%s1] sm:$0xf]
  %v18 = vld [vmem:[%s1 + $0x4] sm:$0xf]
  %v19 = vld [vmem:[%s1 + $0x8] sm:$0xf]
  %v20 = vld [vmem:[%s1 + $0xc] sm:$0xf]
  %v21 = vld [vmem:[%s1 + $0x10] sm:$0xf]
  %v22 = vld [vmem:[%s1 + $0x14] sm:$0xf]
  %v23 = vld [vmem:[%s1 + $0x18] sm:$0xf]
  %v24 = vld [vmem:[%s1 + $0x1c] sm:$0xf]
  %v25 = vld [vmem:[%s1 + $0x20] sm:$0xf]
  %v26 = vld [vmem:[%s1 + $0x24] sm:$0xf]
  %v27 = vld [vmem:[%s1 + $0x28] sm:$0xf]
  %v28 = vld [vmem:[%s1 + $0x2c] sm:$0xf]
  %v29 = vld [vmem:[%s1 + $0x30] sm:$0xf]
  %v30 = vld [vmem:[%s1 + $0x34] sm:$0xf]
  %v31 = vld [vmem:[%s1 + $0x38] sm:$0xf]
  %v32 = vld [vmem:[%s1 + $0x3c] sm:$0xf]
  %v33 = vld [vmem:[%s1 + $0x40] sm:$0xf]
  %v34 = vld [vmem:[%s1 + $0x44] sm:$0xf]
  %v35 = vld [vmem:[%s1 + $0x48] sm:$0xf]
  %v36 = vld [vmem:[%s1 + $0x4c] sm:$0xf]
  %v37 = vld [vmem:[%s1 + $0x50] sm:$0xf]
  %v38 = vld [vmem:[%s1 + $0x54] sm:$0xf]
  %v39 = vld [vmem:[%s1 + $0x58] sm:$0xf]
  %v40 = vld [vmem:[%s1 + $0x5c] sm:$0xf]
  %v41 = vld [vmem:[%s1 + $0x60] sm:$0xf]
  %v42 = vld [vmem:[%s1 + $0x64] sm:$0xf]
  %v43 = vld [vmem:[%s1 + $0x68] sm:$0xf]
  %v44 = vld [vmem:[%s1 + $0x6c] sm:$0xf]
  %v45 = vld [vmem:[%s1 + $0x70] sm:$0xf]
  %v46 = vld [vmem:[%s1 + $0x74] sm:$0xf]
  %v47 = vld [vmem:[%s1 + $0x78] sm:$0xf]
  %v48 = vld [vmem:[%s1 + $0x7c] sm:$0xf]
  %v49 = vld [vmem:[%s2] sm:$0xff]
  %v50 = vld [vmem:[%s2 + $0x8] sm:$0xff]
  %52 = vset.pattern.permute.xlu0 0
  %53 = vperm.xlu0 %52, %v49
  %v54 = vpop.permute.xlu0 %53
  %57 = vset.pattern.permute.xlu0 0
  %58 = vperm.xlu0 %57, %v50
  %v59 = vpop.permute.xlu0 %58
  %v63 = vunpack.c.l.b16 %v15
  %v64 = vunpack.c.h.b16 %v15
  %v65 = vunpack.c.l.b16 %v16
  %v66 = vunpack.c.h.b16 %v16
  %v67 = vpack.c.b16 %v65, %v63
  %v68 = vpack.c.b16 %v66, %v64
  %v103 = vunpack.c.l.b16 %v17
  %v104 = vunpack.c.l.b16 %v18
  %v105 = vunpack.c.l.b16 %v19
  %v106 = vunpack.c.l.b16 %v20
  %v107 = vunpack.c.l.b16 %v21
  %v108 = vunpack.c.l.b16 %v22
  %v109 = vunpack.c.l.b16 %v23
  %v110 = vunpack.c.l.b16 %v24
  %v111 = vunpack.c.l.b16 %v25
  %v112 = vunpack.c.l.b16 %v26
  %v113 = vunpack.c.l.b16 %v27
  %v114 = vunpack.c.l.b16 %v28
  %v115 = vunpack.c.l.b16 %v29
  %v116 = vunpack.c.l.b16 %v30
  %v117 = vunpack.c.l.b16 %v31
  %v118 = vunpack.c.l.b16 %v32
  %v119 = vunpack.c.l.b16 %v33
  %v120 = vunpack.c.l.b16 %v34
  %v121 = vunpack.c.l.b16 %v35
  %v122 = vunpack.c.l.b16 %v36
  %v123 = vunpack.c.l.b16 %v37
  %v124 = vunpack.c.l.b16 %v38
  %v125 = vunpack.c.l.b16 %v39
  %v126 = vunpack.c.l.b16 %v40
  %v127 = vunpack.c.l.b16 %v41
  %v128 = vunpack.c.l.b16 %v42
  %v129 = vunpack.c.l.b16 %v43
  %v130 = vunpack.c.l.b16 %v44
  %v131 = vunpack.c.l.b16 %v45
  %v132 = vunpack.c.l.b16 %v46
  %v133 = vunpack.c.l.b16 %v47
  %v134 = vunpack.c.l.b16 %v48
  %v135 = vpack.c.b16 %v104, %v103
  %v136 = vpack.c.b16 %v106, %v105
  %v137 = vpack.c.b16 %v108, %v107
  %v138 = vpack.c.b16 %v110, %v109
  %v139 = vpack.c.b16 %v112, %v111
  %v140 = vpack.c.b16 %v114, %v113
  %v141 = vpack.c.b16 %v116, %v115
  %v142 = vpack.c.b16 %v118, %v117
  %v143 = vpack.c.b16 %v120, %v119
  %v144 = vpack.c.b16 %v122, %v121
  %v145 = vpack.c.b16 %v124, %v123
  %v146 = vpack.c.b16 %v126, %v125
  %v147 = vpack.c.b16 %v128, %v127
  %v148 = vpack.c.b16 %v130, %v129
  %v149 = vpack.c.b16 %v132, %v131
  %v150 = vpack.c.b16 %v134, %v133
  %167 = vmatprep.subr.bf16.mxu0 0
  %168 = vmatpush1.bf16.msra.mxu0 %v135
  %169 = vmatprep.subr.bf16.mxu0 0
  %170 = vmatpush1.bf16.msra.mxu0 %v136
  %171 = vmatprep.subr.bf16.mxu0 0
  %172 = vmatpush1.bf16.msra.mxu0 %v137
  %173 = vmatprep.subr.bf16.mxu0 0
  %174 = vmatpush1.bf16.msra.mxu0 %v138
  %175 = vmatprep.subr.bf16.mxu0 0
  %176 = vmatpush1.bf16.msra.mxu0 %v139
  %177 = vmatprep.subr.bf16.mxu0 0
  %178 = vmatpush1.bf16.msra.mxu0 %v140
  %179 = vmatprep.subr.bf16.mxu0 0
  %180 = vmatpush1.bf16.msra.mxu0 %v141
  %181 = vmatprep.subr.bf16.mxu0 0
  %182 = vmatpush1.bf16.msra.mxu0 %v142
  %183 = vmatprep.subr.bf16.mxu0 0
  %184 = vmatpush1.bf16.msra.mxu0 %v143
  %185 = vmatprep.subr.bf16.mxu0 0
  %186 = vmatpush1.bf16.msra.mxu0 %v144
  %187 = vmatprep.subr.bf16.mxu0 0
  %188 = vmatpush1.bf16.msra.mxu0 %v145
  %189 = vmatprep.subr.bf16.mxu0 0
  %190 = vmatpush1.bf16.msra.mxu0 %v146
  %191 = vmatprep.subr.bf16.mxu0 0
  %192 = vmatpush1.bf16.msra.mxu0 %v147
  %193 = vmatprep.subr.bf16.mxu0 0
  %194 = vmatpush1.bf16.msra.mxu0 %v148
  %195 = vmatprep.subr.bf16.mxu0 0
  %196 = vmatpush1.bf16.msra.mxu0 %v149
  %197 = vmatprep.subr.bf16.mxu0 0
  %198 = vmatpush1.bf16.msra.mxu0 %v150
  %199 = vmatprep.mubr.bf16.mxu0 %v68
  %200 = vmatmul.mubr.bf16.gmra.mrb[0].mxu0 %v67
  %v201 = vpop.f32.mrb[0].mxu0
  %v202 = vadd.f32 %v54, %v201
  %v203 = vpop.f32.mrb[0].mxu0
  %v204 = vpop.f32.mrb[0].mxu0
  %v205 = vadd.f32 %v59, %v204
  %v206 = vpop.f32.mrb[0].mxu0
  %207 = vdwg.mxu0
  %vm208 = vcmp.gt.f32.partialorder %v202, 0.0
  %vm209 = vcmp.gt.f32.partialorder %v205, 0.0
  %v210 = vmul.f32 %v202, 0.2
  %v211 = vmul.f32 %v205, 0.2
  %v212 = vsel %vm208, %v202, %v210
  %v213 = vsel %vm209, %v205, %v211
  %vm214 = vcmask 261120
  %215 = vst.msk [vmem:[%s3] sm:$0xff] %vm214, %v212
  %216 = vst.msk [vmem:[%s3 + $0x8] sm:$0xff] %vm214, %v213
  // Predicated region
  $region14: #{patch_discriminate_2.10} parent=0 // pred_check
    _
  $region15: #{patch_discriminate_2.10} parent=0 // pred_check_branch
    %218 = sbr.rel (0) target = $region17
  $region16: #{patch_discriminate_2.10} parent=0 // pred_region
    _
  $region17: #{patch_discriminate_2.10} parent=0 // pred_fallthru
    _
  // Predicated region
  $region18: #{patch_discriminate_2.10} parent=0 // pred_check
    _
  $region19: #{patch_discriminate_2.10} parent=0 // pred_check_branch
    %220 = sbr.rel (0) target = $region21
  $region20: #{patch_discriminate_2.10} parent=0 // pred_region
    _
  $region21: #{patch_discriminate_2.10} parent=0 // pred_fallthru
    _

// kernel: patch_discriminate_2.11
$region0: #{patch_discriminate_2.11}
  #allocation0 [shape = 'u32[]', space=smem, size = 0x4, offset = 0x4, fixed_abs, tag = 'smem constant byte address 0x4 - core index']
  #allocation1 [shape = 'u32[144,128]{1,0:T(1,128)}', space=vmem, size = 0x12000, scoped, tag = 'internal scratch']
  #allocation2 [shape = 'f32[1,1]{1,0:T(1,128)S(1)}', space=vmem, size = 0x200, scoped, tag = 'scoped memory for patch_discriminate_2.11']
  %s0 = inlined_call_operand.vmem [shape: bf16[1,256], index: 0, kind: input, shape index: {}]
  %s1 = inlined_call_operand.vmem [shape: bf16[256,8], index: 1, kind: input, shape index: {}]
  %s2 = inlined_call_operand.<no memory space> [shape: f32[1,1], index: 2, kind: input, shape index: {}]
  %s3 = inlined_call_operand.vmem [shape: f32[1,8], index: 3, kind: output, shape index: {}]
  %s4 = sld [smem:[#allocation0]]
  $region22: #{patch_discriminate_2.11} parent=0
    _
  %s6 = ssub.s32 1, %s4
  %s7 = scalar_select 0, %s6, %s4
  %v8 = vstv %s2
  %9 = vst [vmem:[#allocation2] sm:$0x1] %v8
  // Predicated region
  $region2: #{patch_discriminate_2.11} parent=0 // pred_check
    _
  $region3: #{patch_discriminate_2.11} parent=0 // pred_check_branch
    %11 = sbr.rel (0) target = $region5
  $region4: #{patch_discriminate_2.11} parent=0 // pred_region
    _
  $region5: #{patch_discriminate_2.11} parent=0 // pred_fallthru
    _
  // Predicated region
  $region6: #{patch_discriminate_2.11} parent=0 // pred_check
    _
  $region7: #{patch_discriminate_2.11} parent=0 // pred_check_branch
    %13 = sbr.rel (0) target = $region9
  $region8: #{patch_discriminate_2.11} parent=0 // pred_region
    _
  $region9: #{patch_discriminate_2.11} parent=0 // pred_fallthru
    _
  // Predicated region
  $region10: #{patch_discriminate_2.11} parent=0 // pred_check
    _
  $region11: #{patch_discriminate_2.11} parent=0 // pred_check_branch
    %15 = sbr.rel (0) target = $region13
  $region12: #{patch_discriminate_2.11} parent=0 // pred_region
    _
  $region13: #{patch_discriminate_2.11} parent=0 // pred_fallthru
    _
  %v17 = vld [vmem:[%s0] sm:$0x3]
  %v18 = vld [vmem:[%s1] sm:$0xf]
  %v19 = vld [vmem:[%s1 + $0x4] sm:$0xf]
  %v20 = vld [vmem:[%s1 + $0x8] sm:$0xf]
  %v21 = vld [vmem:[%s1 + $0xc] sm:$0xf]
  %v22 = vld [vmem:[%s1 + $0x10] sm:$0xf]
  %v23 = vld [vmem:[%s1 + $0x14] sm:$0xf]
  %v24 = vld [vmem:[%s1 + $0x18] sm:$0xf]
  %v25 = vld [vmem:[%s1 + $0x1c] sm:$0xf]
  %v26 = vld [vmem:[%s1 + $0x20] sm:$0xf]
  %v27 = vld [vmem:[%s1 + $0x24] sm:$0xf]
  %v28 = vld [vmem:[%s1 + $0x28] sm:$0xf]
  %v29 = vld [vmem:[%s1 + $0x2c] sm:$0xf]
  %v30 = vld [vmem:[%s1 + $0x30] sm:$0xf]
  %v31 = vld [vmem:[%s1 + $0x34] sm:$0xf]
  %v32 = vld [vmem:[%s1 + $0x38] sm:$0xf]
  %v33 = vld [vmem:[%s1 + $0x3c] sm:$0xf]
  %v34 = vld [vmem:[%s1 + $0x40] sm:$0xf]
  %v35 = vld [vmem:[%s1 + $0x44] sm:$0xf]
  %v36 = vld [vmem:[%s1 + $0x48] sm:$0xf]
  %v37 = vld [vmem:[%s1 + $0x4c] sm:$0xf]
  %v38 = vld [vmem:[%s1 + $0x50] sm:$0xf]
  %v39 = vld [vmem:[%s1 + $0x54] sm:$0xf]
  %v40 = vld [vmem:[%s1 + $0x58] sm:$0xf]
  %v41 = vld [vmem:[%s1 + $0x5c] sm:$0xf]
  %v42 = vld [vmem:[%s1 + $0x60] sm:$0xf]
  %v43 = vld [vmem:[%s1 + $0x64] sm:$0xf]
  %v44 = vld [vmem:[%s1 + $0x68] sm:$0xf]
  %v45 = vld [vmem:[%s1 + $0x6c] sm:$0xf]
  %v46 = vld [vmem:[%s1 + $0x70] sm:$0xf]
  %v47 = vld [vmem:[%s1 + $0x74] sm:$0xf]
  %v48 = vld [vmem:[%s1 + $0x78] sm:$0xf]
  %v49 = vld [vmem:[%s1 + $0x7c] sm:$0xf]
  %v50 = vld [vmem:[#allocation2] sm:$0x1]
  %52 = vset.pattern.permute.xlu0 0
  %53 = vperm.xlu0 %52, %v50
  %v54 = vpop.permute.xlu0 %53
  %v56 = vlaneseq
  %v57 = vshrl.u32 %v56, 7
  %v58 = vsub.s32 0, %v57
  %v59 = vrot.slane %v54, %v58
  %v62 = vunpack.c.l.s4 1966171168
  %v63 = vunpack.c.0.s8 %v62
  %v64 = vlaneseq
  %v65 = vshrl.u32 %v64, 7
  %v66 = vsub.s32 %v63, %v65
  %v67 = vrot.slane %v17, %v66
  %v68 = vcombine.high %v67, %v67
  %v70 = vunpack.c.l.s4 1966171168
  %v71 = vunpack.c.0.s8 %v70
  %v72 = vlaneseq
  %v73 = vshrl.u32 %v72, 7
  %v74 = vsub.s32 %v71, %v73
  %v75 = vrot.slane %v67, %v74
  %v77 = vunpack.c.l.s4 1966171168
  %v78 = vunpack.c.0.s8 %v77
  %v79 = vlaneseq
  %v80 = vshrl.u32 %v79, 7
  %v81 = vsub.s32 %v78, %v80
  %v82 = vrot.slane %v68, %v81
  %v117 = vunpack.c.l.b16 %v18
  %v118 = vunpack.c.l.b16 %v19
  %v119 = vunpack.c.l.b16 %v20
  %v120 = vunpack.c.l.b16 %v21
  %v121 = vunpack.c.l.b16 %v22
  %v122 = vunpack.c.l.b16 %v23
  %v123 = vunpack.c.l.b16 %v24
  %v124 = vunpack.c.l.b16 %v25
  %v125 = vunpack.c.l.b16 %v26
  %v126 = vunpack.c.l.b16 %v27
  %v127 = vunpack.c.l.b16 %v28
  %v128 = vunpack.c.l.b16 %v29
  %v129 = vunpack.c.l.b16 %v30
  %v130 = vunpack.c.l.b16 %v31
  %v131 = vunpack.c.l.b16 %v32
  %v132 = vunpack.c.l.b16 %v33
  %v133 = vunpack.c.l.b16 %v34
  %v134 = vunpack.c.l.b16 %v35
  %v135 = vunpack.c.l.b16 %v36
  %v136 = vunpack.c.l.b16 %v37
  %v137 = vunpack.c.l.b16 %v38
  %v138 = vunpack.c.l.b16 %v39
  %v139 = vunpack.c.l.b16 %v40
  %v140 = vunpack.c.l.b16 %v41
  %v141 = vunpack.c.l.b16 %v42
  %v142 = vunpack.c.l.b16 %v43
  %v143 = vunpack.c.l.b16 %v44
  %v144 = vunpack.c.l.b16 %v45
  %v145 = vunpack.c.l.b16 %v46
  %v146 = vunpack.c.l.b16 %v47
  %v147 = vunpack.c.l.b16 %v48
  %v148 = vunpack.c.l.b16 %v49
  %v149 = vpack.c.b16 %v118, %v117
  %v150 = vpack.c.b16 %v120, %v119
  %v151 = vpack.c.b16 %v122, %v121
  %v152 = vpack.c.b16 %v124, %v123
  %v153 = vpack.c.b16 %v126, %v125
  %v154 = vpack.c.b16 %v128, %v127
  %v155 = vpack.c.b16 %v130, %v129
  %v156 = vpack.c.b16 %v132, %v131
  %v157 = vpack.c.b16 %v134, %v133
  %v158 = vpack.c.b16 %v136, %v135
  %v159 = vpack.c.b16 %v138, %v137
  %v160 = vpack.c.b16 %v140, %v139
  %v161 = vpack.c.b16 %v142, %v141
  %v162 = vpack.c.b16 %v144, %v143
  %v163 = vpack.c.b16 %v146, %v145
  %v164 = vpack.c.b16 %v148, %v147
  %181 = vmatprep.subr.bf16.mxu0 0
  %182 = vmatpush1.bf16.msra.mxu0 %v149
  %183 = vmatprep.subr.bf16.mxu0 0
  %184 = vmatpush1.bf16.msra.mxu0 %v150
  %185 = vmatprep.subr.bf16.mxu0 0
  %186 = vmatpush1.bf16.msra.mxu0 %v151
  %187 = vmatprep.subr.bf16.mxu0 0
  %188 = vmatpush1.bf16.msra.mxu0 %v152
  %189 = vmatprep.subr.bf16.mxu0 0
  %190 = vmatpush1.bf16.msra.mxu0 %v153
  %191 = vmatprep.subr.bf16.mxu0 0
  %192 = vmatpush1.bf16.msra.mxu0 %v154
  %193 = vmatprep.subr.bf16.mxu0 0
  %194 = vmatpush1.bf16.msra.mxu0 %v155
  %195 = vmatprep.subr.bf16.mxu0 0
  %196 = vmatpush1.bf16.msra.mxu0 %v156
  %197 = vmatprep.subr.bf16.mxu0 0
  %198 = vmatpush1.bf16.msra.mxu0 %v157
  %199 = vmatprep.subr.bf16.mxu0 0
  %200 = vmatpush1.bf16.msra.mxu0 %v158
  %201 = vmatprep.subr.bf16.mxu0 0
  %202 = vmatpush1.bf16.msra.mxu0 %v159
  %203 = vmatprep.subr.bf16.mxu0 0
  %204 = vmatpush1.bf16.msra.mxu0 %v160
  %205 = vmatprep.subr.bf16.mxu0 0
  %206 = vmatpush1.bf16.msra.mxu0 %v161
  %207 = vmatprep.subr.bf16.mxu0 0
  %208 = vmatpush1.bf16.msra.mxu0 %v162
  %209 = vmatprep.subr.bf16.mxu0 0
  %210 = vmatpush1.bf16.msra.mxu0 %v163
  %211 = vmatprep.subr.bf16.mxu0 0
  %212 = vmatpush1.bf16.msra.mxu0 %v164
  %213 = vmatprep.mubr.bf16.mxu0 %v82
  %214 = vmatmul.mubr.bf16.gmra.mrb[0].mxu0 %v75
  %v215 = vpop.f32.mrb[0].mxu0
  %v216 = vadd.f32 %v59, %v215
  %v217 = vpop.f32.mrb[0].mxu0
  %v218 = vpop.f32.mrb[0].mxu0
  %v219 = vpop.f32.mrb[0].mxu0
  %220 = vdwg.mxu0
  %vm221 = vcmp.gt.f32.partialorder %v216, 0.0
  %v222 = vmul.f32 %v216, 0.2
  %v223 = vsel %vm221, %v216, %v222
  %vm224 = vcmask 57344
  %225 = vst.msk [vmem:[%s3] sm:$0x1] %vm224, %v223
  // Predicated region
  $region14: #{patch_discriminate_2.11} parent=0 // pred_check
    _
  $region15: #{patch_discriminate_2.11} parent=0 // pred_check_branch
    %227 = sbr.rel (0) target = $region17
  $region16: #{patch_discriminate_2.11} parent=0 // pred_region
    _
  $region17: #{patch_discriminate_2.11} parent=0 // pred_fallthru
    _
  // Predicated region
  $region18: #{patch_discriminate_2.11} parent=0 // pred_check
    _
  $region19: #{patch_discriminate_2.11} parent=0 // pred_check_branch
    %229 = sbr.rel (0) target = $region21
  $region20: #{patch_discriminate_2.11} parent=0 // pred_region
    _
  $region21: #{patch_discriminate_2.11} parent=0 // pred_fallthru
    _

</llo_original>
